<compile_context>
chip_gen: v5e
topology: v5e:2x2
jax: 0.10.0
libtpu: 0.0.40
codegen_flags: <defaults>
</compile_context>

<pallas_src>
import math

import jax
import jax.numpy as jnp
from jax.experimental import pallas as pl
from jax.experimental.pallas import tpu as pltpu

# ----------------------------- model config (small ViT) -----------------------------
BATCH      = 2
C_IN       = 3
IMG        = 32          # small image (ViT-small uses 224)
PATCH      = 16          # same patch size as vit_small_patch16_224
EMBED_DIM  = 128         # ViT-small uses 384
NUM_HEADS  = 4           # ViT-small uses 6
DEPTH      = 2           # ViT-small uses 12
MLP_DIM    = 4 * EMBED_DIM
NUM_PATCH  = (IMG // PATCH) ** 2
NUM_TOKENS = NUM_PATCH + 1          # + CLS token
T_PAD      = 8                      # tokens padded to a full sublane tile (8)
HEAD_DIM   = EMBED_DIM // NUM_HEADS
PATCH_DIM  = C_IN * PATCH * PATCH
LN_EPS     = 1e-6                   # timm ViT LayerNorm eps

# images packed per grid step (M = BATCH_GROUP * T_PAD rows through the MXU).
# For B=2 a single grid step (BATCH_GROUP=2) is best on 1-TC v5e/v6e; on v7x with
# larger B, use BATCH_GROUP = B // 2 to keep both TensorCores busy.
BATCH_GROUP = 2


def _layernorm(x, g, b):
    mu = jnp.mean(x, axis=-1, keepdims=True)
    var = jnp.mean((x - mu) ** 2, axis=-1, keepdims=True)
    return (x - mu) * jax.lax.rsqrt(var + LN_EPS) * g + b


# ----------------------------- fused Pallas kernel -----------------------------------
def vit_kernel(patches_ref, base_ref, patch_w_ref,
               wqkv_ref, wproj_ref, w1_ref, w2_ref,
               slab_ref, norm_ref, o_ref):
    D, H, dh, T, BB = EMBED_DIM, NUM_HEADS, HEAD_DIM, T_PAD, BATCH_GROUP
    bf = jnp.bfloat16
    scale = 1.0 / math.sqrt(dh)

    # ---- patch embed + cls/pos.  Pad rows of `patches` are exact zeros; `base` carries
    # (cls + pos[0]) in row 0, (pos[1:] + patch_bias) in rows 1..NUM_PATCH, zeros in the
    # padded rows, tiled once per packed image.
    x = (jnp.dot(patches_ref[...], patch_w_ref[...],
                 preferred_element_type=jnp.float32)
         + base_ref[...])                                        # (BB*T, D) f32

    # key-padding mask: tokens >= NUM_TOKENS are zero padding -> excluded from softmax.
    # NOTE: correctness of the padded rows depends entirely on this mask — keep it, and
    # keep the score/softmax path in f32 (-1e30 overflows in bf16).
    col = jax.lax.broadcasted_iota(jnp.int32, (1, T), 1)
    neg_mask = jnp.where(col < NUM_TOKENS, 0.0, -1e30).astype(jnp.float32)

    for d in range(DEPTH):                                       # DEPTH tiny & static
        # packed per-layer small params: (8, MLP_DIM) slab
        slab = slab_ref[d]
        ln1_g, ln1_b = slab[0:1, :D], slab[1:2, :D]
        ln2_g, ln2_b = slab[2:3, :D], slab[3:4, :D]
        b_proj, b_fc2 = slab[4:5, :D], slab[5:6, :D]
        b_qkv, b_fc1 = slab[6:7, :3 * D], slab[7:8, :]

        # ---------------- attention (pre-norm) ----------------
        h1 = _layernorm(x, ln1_g, ln1_b)
        qkv = (jnp.dot(h1.astype(bf), wqkv_ref[d],
                       preferred_element_type=jnp.float32)
               + b_qkv)                                          # (BB*T, 3D) f32
        q = (qkv[:, 0 * D:1 * D] * scale).astype(bf)
        v = qkv[:, 2 * D:3 * D].astype(bf)
        # one full-tile transpose of k per layer (sliced per head below)
        kT = jnp.transpose(qkv[:, 1 * D:2 * D]).astype(bf)       # (D, BB*T)

        # per-(image, head) score matmuls, stacked along sublanes -> ONE softmax pass
        s_parts = []
        for b in range(BB):
            for h in range(H):
                qh = q[b * T:(b + 1) * T, h * dh:(h + 1) * dh]   # (T, dh)
                kTh = kT[h * dh:(h + 1) * dh, b * T:(b + 1) * T] # (dh, T)
                s_parts.append(jnp.dot(qh, kTh,
                                       preferred_element_type=jnp.float32))
        s = jnp.concatenate(s_parts, axis=0) + neg_mask          # (BB*H*T, T) f32
        s = s - jnp.max(s, axis=-1, keepdims=True)
        p = jnp.exp(s)
        p = (p * pl.reciprocal(jnp.sum(p, axis=-1, keepdims=True),
                               approx=True)).astype(bf)

        # p @ v per head, heads concatenated along lanes, images along sublanes,
        # then ONE (BB*T, D) @ (D, D) projection matmul.
        rows = []
        for b in range(BB):
            heads = []
            for h in range(H):
                i = b * H + h
                ph = p[i * T:(i + 1) * T, :]                     # (T, T)
                vh = v[b * T:(b + 1) * T, h * dh:(h + 1) * dh]   # (T, dh)
                heads.append(jnp.dot(ph, vh,
                                     preferred_element_type=jnp.float32))
            rows.append(jnp.concatenate(heads, axis=-1))         # (T, D)
        attn_in = jnp.concatenate(rows, axis=0).astype(bf)       # (BB*T, D)
        x = x + jnp.dot(attn_in, wproj_ref[d],
                        preferred_element_type=jnp.float32) + b_proj

        # ---------------- MLP (pre-norm) ----------------
        h2 = _layernorm(x, ln2_g, ln2_b)
        m = (jnp.dot(h2.astype(bf), w1_ref[d],
                     preferred_element_type=jnp.float32) + b_fc1)
        # TODO(synk): timm ViT uses exact (erf) GELU; tanh approximation used here.
        m = jax.nn.gelu(m, approximate=True)
        m = (jnp.dot(m.astype(bf), w2_ref[d],
                     preferred_element_type=jnp.float32) + b_fc2)
        x = x + m

    # final LayerNorm, CLS token only (== forward_features(x)[:, 0, :]) for each image
    cls = jnp.concatenate([x[b * T:b * T + 1, :] for b in range(BB)], axis=0)  # (BB, D)
    o_ref[0] = _layernorm(cls, norm_ref[0:1, :], norm_ref[1:2, :])


# ----------------------------- one-time parameter packing ----------------------------
def _stack(params, name, dtype=None):
    w = jnp.stack([blk[name] for blk in params["blocks"]], axis=0)
    return w.astype(dtype) if dtype is not None else w


def pack_params(params, bb=BATCH_GROUP):
    """Hoisted out of the per-call path: run once, reuse the packed arrays."""
    # base: (cls + pos[0]) row 0, (pos[1:] + patch_bias) rows 1..NUM_PATCH, zeros in
    # padded rows; tiled once per packed image.
    base = jnp.zeros((T_PAD, EMBED_DIM), jnp.float32)
    base = base.at[0].set(params["cls"][0, 0] + params["pos"][0, 0])
    base = base.at[1:1 + NUM_PATCH].set(params["pos"][0, 1:NUM_TOKENS]
                                        + params["patch_b"][0])
    base = jnp.tile(base, (bb, 1))                               # (bb*T_PAD, D)

    def pad_lane(v):
        v = v.reshape(1, -1).astype(jnp.float32)
        return jnp.pad(v, ((0, 0), (0, MLP_DIM - v.shape[1])))

    slabs = []
    for blk in params["blocks"]:
        slabs.append(jnp.concatenate([
            pad_lane(blk["ln1_g"]), pad_lane(blk["ln1_b"]),
            pad_lane(blk["ln2_g"]), pad_lane(blk["ln2_b"]),
            pad_lane(blk["b_proj"]), pad_lane(blk["b_fc2"]),
            pad_lane(blk["b_qkv"]), pad_lane(blk["b_fc1"]),
        ], axis=0))
    slab = jnp.stack(slabs, axis=0)                              # (DEPTH, 8, MLP_DIM)

    bf = jnp.bfloat16
    packed = dict(
        base=base,
        patch_w=params["patch_w"].astype(bf),
        w_qkv=_stack(params, "w_qkv", bf),
        w_proj=_stack(params, "w_proj", bf),
        w_fc1=_stack(params, "w_fc1", bf),
        w_fc2=_stack(params, "w_fc2", bf),
        slab=slab,
        norm=jnp.concatenate([params["norm_g"], params["norm_b"]], axis=0),  # (2, D)
    )
    return jax.tree_util.tree_map(jnp.asarray, packed)


# ----------------------------- wrapper ------------------------------------------------
@jax.jit
def vit_features(x, packed):
    """x: (B, C, H, W) NCHW float32 -> (B, EMBED_DIM) CLS features."""
    B = x.shape[0]
    assert B % BATCH_GROUP == 0, "BATCH must be divisible by BATCH_GROUP"
    G = B // BATCH_GROUP
    hp = wp = IMG // PATCH

    # patchify in (C, ph, pw) flatten order == nn.Conv2d(k=16, s=16) weight layout;
    # pad token axis to T_PAD with zero rows (row 0 = CLS slot, tail = padding).
    patches = x.reshape(B, C_IN, hp, PATCH, wp, PATCH)
    patches = patches.transpose(0, 2, 4, 1, 3, 5).reshape(B, NUM_PATCH, PATCH_DIM)
    patches_pad = jnp.zeros((B, T_PAD, PATCH_DIM), jnp.bfloat16)
    patches_pad = patches_pad.at[:, 1:1 + NUM_PATCH, :].set(patches.astype(jnp.bfloat16))
    patches_pad = patches_pad.reshape(B * T_PAD, PATCH_DIM)

    def full(shape):
        n = len(shape)
        return pl.BlockSpec(shape, lambda g, _n=n: (0,) * _n)

    in_specs = [
        pl.BlockSpec((BATCH_GROUP * T_PAD, PATCH_DIM), lambda g: (g, 0)),   # patches
        full((BATCH_GROUP * T_PAD, EMBED_DIM)),                             # base
        full((PATCH_DIM, EMBED_DIM)),                                       # patch_w
        full((DEPTH, EMBED_DIM, 3 * EMBED_DIM)),                            # w_qkv
        full((DEPTH, EMBED_DIM, EMBED_DIM)),                                # w_proj
        full((DEPTH, EMBED_DIM, MLP_DIM)),                                  # w_fc1
        full((DEPTH, MLP_DIM, EMBED_DIM)),                                  # w_fc2
        full((DEPTH, 8, MLP_DIM)),                                          # bias/gain slab
        full((2, EMBED_DIM)),                                               # final norm g,b
    ]

    out = pl.pallas_call(
        vit_kernel,
        out_shape=jax.ShapeDtypeStruct((G, BATCH_GROUP, EMBED_DIM), jnp.float32),
        grid_spec=pltpu.PrefetchScalarGridSpec(
            num_scalar_prefetch=0,
            grid=(G,),
            in_specs=in_specs,
            out_specs=pl.BlockSpec((1, BATCH_GROUP, EMBED_DIM), lambda g: (g, 0, 0)),
        ),
        compiler_params=pltpu.CompilerParams(
            dimension_semantics=("parallel",)),        # batch groups across TCs on v7x
    )(patches_pad, packed["base"], packed["patch_w"],
      packed["w_qkv"], packed["w_proj"], packed["w_fc1"], packed["w_fc2"],
      packed["slab"], packed["norm"])
    return out.reshape(B, EMBED_DIM)


# ----------------------------- deterministic param init -----------------------------
def init_params(key):
    def nrm(k, shape, std=0.02):
        return (std * jax.random.normal(k, shape)).astype(jnp.float32)

    keys = iter(jax.random.split(key, 8 + 4 * DEPTH))
    params = {
        "patch_w": nrm(next(keys), (PATCH_DIM, EMBED_DIM)),
        "patch_b": jnp.zeros((1, EMBED_DIM), jnp.float32),
        "cls":     nrm(next(keys), (1, 1, EMBED_DIM)),
        "pos":     nrm(next(keys), (1, NUM_TOKENS, EMBED_DIM)),
        "norm_g":  jnp.ones((1, EMBED_DIM), jnp.float32),
        "norm_b":  jnp.zeros((1, EMBED_DIM), jnp.float32),
        "blocks":  [],
    }
    for _ in range(DEPTH):
        params["blocks"].append(dict(
            ln1_g=jnp.ones((1, EMBED_DIM), jnp.float32),
            ln1_b=jnp.zeros((1, EMBED_DIM), jnp.float32),
            w_qkv=nrm(next(keys), (EMBED_DIM, 3 * EMBED_DIM)),
            b_qkv=jnp.zeros((1, 3 * EMBED_DIM), jnp.float32),
            w_proj=nrm(next(keys), (EMBED_DIM, EMBED_DIM)),
            b_proj=jnp.zeros((1, EMBED_DIM), jnp.float32),
            ln2_g=jnp.ones((1, EMBED_DIM), jnp.float32),
            ln2_b=jnp.zeros((1, EMBED_DIM), jnp.float32),
            w_fc1=nrm(next(keys), (EMBED_DIM, MLP_DIM)),
            b_fc1=jnp.zeros((1, MLP_DIM), jnp.float32),
            w_fc2=nrm(next(keys), (MLP_DIM, EMBED_DIM)),
            b_fc2=jnp.zeros((1, EMBED_DIM), jnp.float32),
        ))
    return params


if __name__ == "__main__":
    key = jax.random.PRNGKey(0)
    k_x, k_p = jax.random.split(key)
    x = jax.random.normal(k_x, (BATCH, C_IN, IMG, IMG), dtype=jnp.float32)
    params = init_params(k_p)
    packed = pack_params(params)          # one-time packing, outside the per-call path

    feats = vit_features(x, packed)
    feats = jax.block_until_ready(feats)
    assert feats.shape == (BATCH, EMBED_DIM), feats.shape
    assert bool(jnp.all(jnp.isfinite(feats)))
    print("KERNEL_OK")
</pallas_src>

<mosaic_0001>
module attributes {stable_mosaic.version = 11 : i64} {
  func.func @vit_kernel(%arg0: i32, %arg1: memref<16x768xbf16, #tpu.memory_space<vmem>>, %arg2: memref<16x128xf32, #tpu.memory_space<vmem>>, %arg3: memref<768x128xbf16, #tpu.memory_space<vmem>>, %arg4: memref<2x128x384xbf16, #tpu.memory_space<vmem>>, %arg5: memref<2x128x128xbf16, #tpu.memory_space<vmem>>, %arg6: memref<2x128x512xbf16, #tpu.memory_space<vmem>>, %arg7: memref<2x512x128xbf16, #tpu.memory_space<vmem>>, %arg8: memref<2x8x512xf32, #tpu.memory_space<vmem>>, %arg9: memref<2x128xf32, #tpu.memory_space<vmem>>, %arg10: memref<1x2x128xf32, #tpu.memory_space<vmem>>) attributes {dimension_semantics = [#tpu.dimension_semantics<parallel>], iteration_bounds = array<i64: 1>, scalar_prefetch = 0 : i64, scratch_operands = 0 : i64, tpu.core_type = #tpu.core_type<tc>, window_params = [{transform_indices = @transform_0, window_bounds = array<i64: 16, 768>}, {pipeline_mode = #tpu.pipeline_mode<synchronous>, transform_indices = @transform_1, window_bounds = array<i64: 16, 128>}, {pipeline_mode = #tpu.pipeline_mode<synchronous>, transform_indices = @transform_2, window_bounds = array<i64: 768, 128>}, {pipeline_mode = #tpu.pipeline_mode<synchronous>, transform_indices = @transform_3, window_bounds = array<i64: 2, 128, 384>}, {pipeline_mode = #tpu.pipeline_mode<synchronous>, transform_indices = @transform_4, window_bounds = array<i64: 2, 128, 128>}, {pipeline_mode = #tpu.pipeline_mode<synchronous>, transform_indices = @transform_5, window_bounds = array<i64: 2, 128, 512>}, {pipeline_mode = #tpu.pipeline_mode<synchronous>, transform_indices = @transform_6, window_bounds = array<i64: 2, 512, 128>}, {pipeline_mode = #tpu.pipeline_mode<synchronous>, transform_indices = @transform_7, window_bounds = array<i64: 2, 8, 512>}, {pipeline_mode = #tpu.pipeline_mode<synchronous>, transform_indices = @transform_8, window_bounds = array<i64: 2, 128>}, {transform_indices = @transform_9, window_bounds = array<i64: 1, 2, 128>}]} {
    %c0 = arith.constant 0 : index
    %c0_0 = arith.constant 0 : index
    %0 = vector.load %arg1[%c0, %c0_0] : memref<16x768xbf16, #tpu.memory_space<vmem>>, vector<16x768xbf16>
    %c0_1 = arith.constant 0 : index
    %c0_2 = arith.constant 0 : index
    %1 = vector.load %arg3[%c0_1, %c0_2] : memref<768x128xbf16, #tpu.memory_space<vmem>>, vector<768x128xbf16>
    %cst = arith.constant dense<0.000000e+00> : vector<16x128xf32>
    %2 = tpu.matmul %0, %1, %cst {dimension_numbers = #tpu.dot_dimension_numbers<[1], [0], [0], [1], [0, 0, 1, 1], [], []>} : vector<16x768xbf16>, vector<768x128xbf16>, vector<16x128xf32> -> vector<16x128xf32>
    %c0_3 = arith.constant 0 : index
    %c0_4 = arith.constant 0 : index
    %3 = vector.load %arg2[%c0_3, %c0_4] : memref<16x128xf32, #tpu.memory_space<vmem>>, vector<16x128xf32>
    %4 = arith.addf %2, %3 : vector<16x128xf32>
    %5 = tpu.iota {dimensions = array<i32: 1>} : vector<1x8xi32>
    %c5_i32 = arith.constant 5 : i32
    %6 = vector.broadcast %c5_i32 : i32 to vector<1x8xi32>
    %7 = arith.cmpi slt, %5, %6 : vector<1x8xi32>
    %cst_5 = arith.constant 0.000000e+00 : f32
    %cst_6 = arith.constant -1.000000e+30 : f32
    %8 = vector.broadcast %cst_5 : f32 to vector<1x8xf32>
    %9 = vector.broadcast %cst_6 : f32 to vector<1x8xf32>
    %10 = arith.select %7, %8, %9 : vector<1x8xi1>, vector<1x8xf32>
    %c0_7 = arith.constant 0 : index
    %c0_8 = arith.constant 0 : index
    %c0_9 = arith.constant 0 : index
    %11 = vector.load %arg8[%c0_7, %c0_8, %c0_9] : memref<2x8x512xf32, #tpu.memory_space<vmem>>, vector<1x8x512xf32>
    %12 = vector.shape_cast %11 : vector<1x8x512xf32> to vector<8x512xf32>
    %13 = vector.extract_strided_slice %12 {offsets = [0, 0], sizes = [1, 128], strides = [1, 1]} : vector<8x512xf32> to vector<1x128xf32>
    %14 = vector.extract_strided_slice %12 {offsets = [1, 0], sizes = [1, 128], strides = [1, 1]} : vector<8x512xf32> to vector<1x128xf32>
    %15 = vector.extract_strided_slice %12 {offsets = [2, 0], sizes = [1, 128], strides = [1, 1]} : vector<8x512xf32> to vector<1x128xf32>
    %16 = vector.extract_strided_slice %12 {offsets = [3, 0], sizes = [1, 128], strides = [1, 1]} : vector<8x512xf32> to vector<1x128xf32>
    %17 = vector.extract_strided_slice %12 {offsets = [4, 0], sizes = [1, 128], strides = [1, 1]} : vector<8x512xf32> to vector<1x128xf32>
    %18 = vector.extract_strided_slice %12 {offsets = [5, 0], sizes = [1, 128], strides = [1, 1]} : vector<8x512xf32> to vector<1x128xf32>
    %19 = vector.extract_strided_slice %12 {offsets = [6, 0], sizes = [1, 384], strides = [1, 1]} : vector<8x512xf32> to vector<1x384xf32>
    %20 = vector.extract_strided_slice %12 {offsets = [7, 0], sizes = [1, 512], strides = [1, 1]} : vector<8x512xf32> to vector<1x512xf32>
    %cst_10 = arith.constant dense<0.000000e+00> : vector<16xf32>
    %21 = vector.multi_reduction <add>, %4, %cst_10 [1] : vector<16x128xf32> to vector<16xf32>
    %22 = vector.shape_cast %21 : vector<16xf32> to vector<16x1xf32>
    %cst_11 = arith.constant 1.280000e+02 : f32
    %23 = vector.broadcast %cst_11 : f32 to vector<16x1xf32>
    %24 = arith.divf %22, %23 : vector<16x1xf32>
    %25 = vector.broadcast %24 : vector<16x1xf32> to vector<16x128xf32>
    %26 = arith.subf %4, %25 : vector<16x128xf32>
    %27 = arith.mulf %26, %26 : vector<16x128xf32>
    %cst_12 = arith.constant dense<0.000000e+00> : vector<16xf32>
    %28 = vector.multi_reduction <add>, %27, %cst_12 [1] : vector<16x128xf32> to vector<16xf32>
    %29 = vector.shape_cast %28 : vector<16xf32> to vector<16x1xf32>
    %cst_13 = arith.constant 1.280000e+02 : f32
    %30 = vector.broadcast %cst_13 : f32 to vector<16x1xf32>
    %31 = arith.divf %29, %30 : vector<16x1xf32>
    %32 = vector.broadcast %24 : vector<16x1xf32> to vector<16x128xf32>
    %33 = arith.subf %4, %32 : vector<16x128xf32>
    %cst_14 = arith.constant 9.99999997E-7 : f32
    %34 = vector.broadcast %cst_14 : f32 to vector<16x1xf32>
    %35 = arith.addf %31, %34 : vector<16x1xf32>
    %36 = math.rsqrt %35 : vector<16x1xf32>
    %37 = vector.broadcast %36 : vector<16x1xf32> to vector<16x128xf32>
    %38 = arith.mulf %33, %37 : vector<16x128xf32>
    %39 = vector.broadcast %13 : vector<1x128xf32> to vector<16x128xf32>
    %40 = arith.mulf %38, %39 : vector<16x128xf32>
    %41 = vector.broadcast %14 : vector<1x128xf32> to vector<16x128xf32>
    %42 = arith.addf %40, %41 : vector<16x128xf32>
    %43 = arith.truncf %42 : vector<16x128xf32> to vector<16x128xbf16>
    %c0_15 = arith.constant 0 : index
    %c0_16 = arith.constant 0 : index
    %c0_17 = arith.constant 0 : index
    %44 = vector.load %arg4[%c0_15, %c0_16, %c0_17] : memref<2x128x384xbf16, #tpu.memory_space<vmem>>, vector<1x128x384xbf16>
    %45 = vector.shape_cast %44 : vector<1x128x384xbf16> to vector<128x384xbf16>
    %cst_18 = arith.constant dense<0.000000e+00> : vector<16x384xf32>
    %46 = tpu.matmul %43, %45, %cst_18 {dimension_numbers = #tpu.dot_dimension_numbers<[1], [0], [0], [1], [0, 0, 1, 1], [], []>} : vector<16x128xbf16>, vector<128x384xbf16>, vector<16x384xf32> -> vector<16x384xf32>
    %47 = vector.broadcast %19 : vector<1x384xf32> to vector<16x384xf32>
    %48 = arith.addf %46, %47 : vector<16x384xf32>
    %49 = vector.extract_strided_slice %48 {offsets = [0, 0], sizes = [16, 128], strides = [1, 1]} : vector<16x384xf32> to vector<16x128xf32>
    %cst_19 = arith.constant 0.176776692 : f32
    %50 = vector.broadcast %cst_19 : f32 to vector<16x128xf32>
    %51 = arith.mulf %49, %50 : vector<16x128xf32>
    %52 = arith.truncf %51 : vector<16x128xf32> to vector<16x128xbf16>
    %53 = vector.extract_strided_slice %48 {offsets = [0, 256], sizes = [16, 128], strides = [1, 1]} : vector<16x384xf32> to vector<16x128xf32>
    %54 = arith.truncf %53 : vector<16x128xf32> to vector<16x128xbf16>
    %55 = vector.extract_strided_slice %48 {offsets = [0, 128], sizes = [16, 128], strides = [1, 1]} : vector<16x384xf32> to vector<16x128xf32>
    %56 = tpu.transpose %55, [1, 0] : vector<16x128xf32> -> vector<128x16xf32>
    %57 = arith.truncf %56 : vector<128x16xf32> to vector<128x16xbf16>
    %58 = vector.extract_strided_slice %52 {offsets = [0, 0], sizes = [8, 32], strides = [1, 1]} : vector<16x128xbf16> to vector<8x32xbf16>
    %59 = vector.extract_strided_slice %57 {offsets = [0, 0], sizes = [32, 8], strides = [1, 1]} : vector<128x16xbf16> to vector<32x8xbf16>
    %cst_20 = arith.constant dense<0.000000e+00> : vector<8x8xf32>
    %60 = tpu.matmul %58, %59, %cst_20 {dimension_numbers = #tpu.dot_dimension_numbers<[1], [0], [0], [1], [0, 0, 1, 1], [], []>} : vector<8x32xbf16>, vector<32x8xbf16>, vector<8x8xf32> -> vector<8x8xf32>
    %61 = vector.extract_strided_slice %52 {offsets = [0, 32], sizes = [8, 32], strides = [1, 1]} : vector<16x128xbf16> to vector<8x32xbf16>
    %62 = vector.extract_strided_slice %57 {offsets = [32, 0], sizes = [32, 8], strides = [1, 1]} : vector<128x16xbf16> to vector<32x8xbf16>
    %cst_21 = arith.constant dense<0.000000e+00> : vector<8x8xf32>
    %63 = tpu.matmul %61, %62, %cst_21 {dimension_numbers = #tpu.dot_dimension_numbers<[1], [0], [0], [1], [0, 0, 1, 1], [], []>} : vector<8x32xbf16>, vector<32x8xbf16>, vector<8x8xf32> -> vector<8x8xf32>
    %64 = vector.extract_strided_slice %52 {offsets = [0, 64], sizes = [8, 32], strides = [1, 1]} : vector<16x128xbf16> to vector<8x32xbf16>
    %65 = vector.extract_strided_slice %57 {offsets = [64, 0], sizes = [32, 8], strides = [1, 1]} : vector<128x16xbf16> to vector<32x8xbf16>
    %cst_22 = arith.constant dense<0.000000e+00> : vector<8x8xf32>
    %66 = tpu.matmul %64, %65, %cst_22 {dimension_numbers = #tpu.dot_dimension_numbers<[1], [0], [0], [1], [0, 0, 1, 1], [], []>} : vector<8x32xbf16>, vector<32x8xbf16>, vector<8x8xf32> -> vector<8x8xf32>
    %67 = vector.extract_strided_slice %52 {offsets = [0, 96], sizes = [8, 32], strides = [1, 1]} : vector<16x128xbf16> to vector<8x32xbf16>
    %68 = vector.extract_strided_slice %57 {offsets = [96, 0], sizes = [32, 8], strides = [1, 1]} : vector<128x16xbf16> to vector<32x8xbf16>
    %cst_23 = arith.constant dense<0.000000e+00> : vector<8x8xf32>
    %69 = tpu.matmul %67, %68, %cst_23 {dimension_numbers = #tpu.dot_dimension_numbers<[1], [0], [0], [1], [0, 0, 1, 1], [], []>} : vector<8x32xbf16>, vector<32x8xbf16>, vector<8x8xf32> -> vector<8x8xf32>
    %70 = vector.extract_strided_slice %52 {offsets = [8, 0], sizes = [8, 32], strides = [1, 1]} : vector<16x128xbf16> to vector<8x32xbf16>
    %71 = vector.extract_strided_slice %57 {offsets = [0, 8], sizes = [32, 8], strides = [1, 1]} : vector<128x16xbf16> to vector<32x8xbf16>
    %cst_24 = arith.constant dense<0.000000e+00> : vector<8x8xf32>
    %72 = tpu.matmul %70, %71, %cst_24 {dimension_numbers = #tpu.dot_dimension_numbers<[1], [0], [0], [1], [0, 0, 1, 1], [], []>} : vector<8x32xbf16>, vector<32x8xbf16>, vector<8x8xf32> -> vector<8x8xf32>
    %73 = vector.extract_strided_slice %52 {offsets = [8, 32], sizes = [8, 32], strides = [1, 1]} : vector<16x128xbf16> to vector<8x32xbf16>
    %74 = vector.extract_strided_slice %57 {offsets = [32, 8], sizes = [32, 8], strides = [1, 1]} : vector<128x16xbf16> to vector<32x8xbf16>
    %cst_25 = arith.constant dense<0.000000e+00> : vector<8x8xf32>
    %75 = tpu.matmul %73, %74, %cst_25 {dimension_numbers = #tpu.dot_dimension_numbers<[1], [0], [0], [1], [0, 0, 1, 1], [], []>} : vector<8x32xbf16>, vector<32x8xbf16>, vector<8x8xf32> -> vector<8x8xf32>
    %76 = vector.extract_strided_slice %52 {offsets = [8, 64], sizes = [8, 32], strides = [1, 1]} : vector<16x128xbf16> to vector<8x32xbf16>
    %77 = vector.extract_strided_slice %57 {offsets = [64, 8], sizes = [32, 8], strides = [1, 1]} : vector<128x16xbf16> to vector<32x8xbf16>
    %cst_26 = arith.constant dense<0.000000e+00> : vector<8x8xf32>
    %78 = tpu.matmul %76, %77, %cst_26 {dimension_numbers = #tpu.dot_dimension_numbers<[1], [0], [0], [1], [0, 0, 1, 1], [], []>} : vector<8x32xbf16>, vector<32x8xbf16>, vector<8x8xf32> -> vector<8x8xf32>
    %79 = vector.extract_strided_slice %52 {offsets = [8, 96], sizes = [8, 32], strides = [1, 1]} : vector<16x128xbf16> to vector<8x32xbf16>
    %80 = vector.extract_strided_slice %57 {offsets = [96, 8], sizes = [32, 8], strides = [1, 1]} : vector<128x16xbf16> to vector<32x8xbf16>
    %cst_27 = arith.constant dense<0.000000e+00> : vector<8x8xf32>
    %81 = tpu.matmul %79, %80, %cst_27 {dimension_numbers = #tpu.dot_dimension_numbers<[1], [0], [0], [1], [0, 0, 1, 1], [], []>} : vector<8x32xbf16>, vector<32x8xbf16>, vector<8x8xf32> -> vector<8x8xf32>
    %82 = tpu.concatenate %60, %63, %66, %69, %72, %75, %78, %81 in 0 : vector<8x8xf32>, vector<8x8xf32>, vector<8x8xf32>, vector<8x8xf32>, vector<8x8xf32>, vector<8x8xf32>, vector<8x8xf32>, vector<8x8xf32> -> vector<64x8xf32>
    %83 = vector.broadcast %10 : vector<1x8xf32> to vector<64x8xf32>
    %84 = arith.addf %82, %83 : vector<64x8xf32>
    %cst_28 = arith.constant dense<0xFF800000> : vector<64xf32>
    %85 = vector.multi_reduction <maximumf>, %84, %cst_28 [1] : vector<64x8xf32> to vector<64xf32>
    %86 = vector.shape_cast %85 : vector<64xf32> to vector<64x1xf32>
    %87 = vector.broadcast %86 : vector<64x1xf32> to vector<64x8xf32>
    %88 = arith.subf %84, %87 : vector<64x8xf32>
    %89 = math.exp %88 : vector<64x8xf32>
    %cst_29 = arith.constant dense<0.000000e+00> : vector<64xf32>
    %90 = vector.multi_reduction <add>, %89, %cst_29 [1] : vector<64x8xf32> to vector<64xf32>
    %91 = vector.shape_cast %90 : vector<64xf32> to vector<64x1xf32>
    %92 = tpu.reciprocal %91 {approx = true} : vector<64x1xf32> -> vector<64x1xf32>
    %93 = vector.broadcast %92 : vector<64x1xf32> to vector<64x8xf32>
    %94 = arith.mulf %89, %93 : vector<64x8xf32>
    %95 = arith.truncf %94 : vector<64x8xf32> to vector<64x8xbf16>
    %96 = vector.extract_strided_slice %95 {offsets = [0, 0], sizes = [8, 8], strides = [1, 1]} : vector<64x8xbf16> to vector<8x8xbf16>
    %97 = vector.extract_strided_slice %54 {offsets = [0, 0], sizes = [8, 32], strides = [1, 1]} : vector<16x128xbf16> to vector<8x32xbf16>
    %cst_30 = arith.constant dense<0.000000e+00> : vector<8x32xf32>
    %98 = tpu.matmul %96, %97, %cst_30 {dimension_numbers = #tpu.dot_dimension_numbers<[1], [0], [0], [1], [0, 0, 1, 1], [], []>} : vector<8x8xbf16>, vector<8x32xbf16>, vector<8x32xf32> -> vector<8x32xf32>
    %99 = vector.extract_strided_slice %95 {offsets = [8, 0], sizes = [8, 8], strides = [1, 1]} : vector<64x8xbf16> to vector<8x8xbf16>
    %100 = vector.extract_strided_slice %54 {offsets = [0, 32], sizes = [8, 32], strides = [1, 1]} : vector<16x128xbf16> to vector<8x32xbf16>
    %cst_31 = arith.constant dense<0.000000e+00> : vector<8x32xf32>
    %101 = tpu.matmul %99, %100, %cst_31 {dimension_numbers = #tpu.dot_dimension_numbers<[1], [0], [0], [1], [0, 0, 1, 1], [], []>} : vector<8x8xbf16>, vector<8x32xbf16>, vector<8x32xf32> -> vector<8x32xf32>
    %102 = vector.extract_strided_slice %95 {offsets = [16, 0], sizes = [8, 8], strides = [1, 1]} : vector<64x8xbf16> to vector<8x8xbf16>
    %103 = vector.extract_strided_slice %54 {offsets = [0, 64], sizes = [8, 32], strides = [1, 1]} : vector<16x128xbf16> to vector<8x32xbf16>
    %cst_32 = arith.constant dense<0.000000e+00> : vector<8x32xf32>
    %104 = tpu.matmul %102, %103, %cst_32 {dimension_numbers = #tpu.dot_dimension_numbers<[1], [0], [0], [1], [0, 0, 1, 1], [], []>} : vector<8x8xbf16>, vector<8x32xbf16>, vector<8x32xf32> -> vector<8x32xf32>
    %105 = vector.extract_strided_slice %95 {offsets = [24, 0], sizes = [8, 8], strides = [1, 1]} : vector<64x8xbf16> to vector<8x8xbf16>
    %106 = vector.extract_strided_slice %54 {offsets = [0, 96], sizes = [8, 32], strides = [1, 1]} : vector<16x128xbf16> to vector<8x32xbf16>
    %cst_33 = arith.constant dense<0.000000e+00> : vector<8x32xf32>
    %107 = tpu.matmul %105, %106, %cst_33 {dimension_numbers = #tpu.dot_dimension_numbers<[1], [0], [0], [1], [0, 0, 1, 1], [], []>} : vector<8x8xbf16>, vector<8x32xbf16>, vector<8x32xf32> -> vector<8x32xf32>
    %108 = tpu.concatenate %98, %101, %104, %107 in 1 : vector<8x32xf32>, vector<8x32xf32>, vector<8x32xf32>, vector<8x32xf32> -> vector<8x128xf32>
    %109 = vector.extract_strided_slice %95 {offsets = [32, 0], sizes = [8, 8], strides = [1, 1]} : vector<64x8xbf16> to vector<8x8xbf16>
    %110 = vector.extract_strided_slice %54 {offsets = [8, 0], sizes = [8, 32], strides = [1, 1]} : vector<16x128xbf16> to vector<8x32xbf16>
    %cst_34 = arith.constant dense<0.000000e+00> : vector<8x32xf32>
    %111 = tpu.matmul %109, %110, %cst_34 {dimension_numbers = #tpu.dot_dimension_numbers<[1], [0], [0], [1], [0, 0, 1, 1], [], []>} : vector<8x8xbf16>, vector<8x32xbf16>, vector<8x32xf32> -> vector<8x32xf32>
    %112 = vector.extract_strided_slice %95 {offsets = [40, 0], sizes = [8, 8], strides = [1, 1]} : vector<64x8xbf16> to vector<8x8xbf16>
    %113 = vector.extract_strided_slice %54 {offsets = [8, 32], sizes = [8, 32], strides = [1, 1]} : vector<16x128xbf16> to vector<8x32xbf16>
    %cst_35 = arith.constant dense<0.000000e+00> : vector<8x32xf32>
    %114 = tpu.matmul %112, %113, %cst_35 {dimension_numbers = #tpu.dot_dimension_numbers<[1], [0], [0], [1], [0, 0, 1, 1], [], []>} : vector<8x8xbf16>, vector<8x32xbf16>, vector<8x32xf32> -> vector<8x32xf32>
    %115 = vector.extract_strided_slice %95 {offsets = [48, 0], sizes = [8, 8], strides = [1, 1]} : vector<64x8xbf16> to vector<8x8xbf16>
    %116 = vector.extract_strided_slice %54 {offsets = [8, 64], sizes = [8, 32], strides = [1, 1]} : vector<16x128xbf16> to vector<8x32xbf16>
    %cst_36 = arith.constant dense<0.000000e+00> : vector<8x32xf32>
    %117 = tpu.matmul %115, %116, %cst_36 {dimension_numbers = #tpu.dot_dimension_numbers<[1], [0], [0], [1], [0, 0, 1, 1], [], []>} : vector<8x8xbf16>, vector<8x32xbf16>, vector<8x32xf32> -> vector<8x32xf32>
    %118 = vector.extract_strided_slice %95 {offsets = [56, 0], sizes = [8, 8], strides = [1, 1]} : vector<64x8xbf16> to vector<8x8xbf16>
    %119 = vector.extract_strided_slice %54 {offsets = [8, 96], sizes = [8, 32], strides = [1, 1]} : vector<16x128xbf16> to vector<8x32xbf16>
    %cst_37 = arith.constant dense<0.000000e+00> : vector<8x32xf32>
    %120 = tpu.matmul %118, %119, %cst_37 {dimension_numbers = #tpu.dot_dimension_numbers<[1], [0], [0], [1], [0, 0, 1, 1], [], []>} : vector<8x8xbf16>, vector<8x32xbf16>, vector<8x32xf32> -> vector<8x32xf32>
    %121 = tpu.concatenate %111, %114, %117, %120 in 1 : vector<8x32xf32>, vector<8x32xf32>, vector<8x32xf32>, vector<8x32xf32> -> vector<8x128xf32>
    %122 = tpu.concatenate %108, %121 in 0 : vector<8x128xf32>, vector<8x128xf32> -> vector<16x128xf32>
    %123 = arith.truncf %122 : vector<16x128xf32> to vector<16x128xbf16>
    %c0_38 = arith.constant 0 : index
    %c0_39 = arith.constant 0 : index
    %c0_40 = arith.constant 0 : index
    %124 = vector.load %arg5[%c0_38, %c0_39, %c0_40] : memref<2x128x128xbf16, #tpu.memory_space<vmem>>, vector<1x128x128xbf16>
    %125 = vector.shape_cast %124 : vector<1x128x128xbf16> to vector<128x128xbf16>
    %cst_41 = arith.constant dense<0.000000e+00> : vector<16x128xf32>
    %126 = tpu.matmul %123, %125, %cst_41 {dimension_numbers = #tpu.dot_dimension_numbers<[1], [0], [0], [1], [0, 0, 1, 1], [], []>} : vector<16x128xbf16>, vector<128x128xbf16>, vector<16x128xf32> -> vector<16x128xf32>
    %127 = arith.addf %4, %126 : vector<16x128xf32>
    %128 = vector.broadcast %17 : vector<1x128xf32> to vector<16x128xf32>
    %129 = arith.addf %127, %128 : vector<16x128xf32>
    %cst_42 = arith.constant dense<0.000000e+00> : vector<16xf32>
    %130 = vector.multi_reduction <add>, %129, %cst_42 [1] : vector<16x128xf32> to vector<16xf32>
    %131 = vector.shape_cast %130 : vector<16xf32> to vector<16x1xf32>
    %cst_43 = arith.constant 1.280000e+02 : f32
    %132 = vector.broadcast %cst_43 : f32 to vector<16x1xf32>
    %133 = arith.divf %131, %132 : vector<16x1xf32>
    %134 = vector.broadcast %133 : vector<16x1xf32> to vector<16x128xf32>
    %135 = arith.subf %129, %134 : vector<16x128xf32>
    %136 = arith.mulf %135, %135 : vector<16x128xf32>
    %cst_44 = arith.constant dense<0.000000e+00> : vector<16xf32>
    %137 = vector.multi_reduction <add>, %136, %cst_44 [1] : vector<16x128xf32> to vector<16xf32>
    %138 = vector.shape_cast %137 : vector<16xf32> to vector<16x1xf32>
    %cst_45 = arith.constant 1.280000e+02 : f32
    %139 = vector.broadcast %cst_45 : f32 to vector<16x1xf32>
    %140 = arith.divf %138, %139 : vector<16x1xf32>
    %141 = vector.broadcast %133 : vector<16x1xf32> to vector<16x128xf32>
    %142 = arith.subf %129, %141 : vector<16x128xf32>
    %cst_46 = arith.constant 9.99999997E-7 : f32
    %143 = vector.broadcast %cst_46 : f32 to vector<16x1xf32>
    %144 = arith.addf %140, %143 : vector<16x1xf32>
    %145 = math.rsqrt %144 : vector<16x1xf32>
    %146 = vector.broadcast %145 : vector<16x1xf32> to vector<16x128xf32>
    %147 = arith.mulf %142, %146 : vector<16x128xf32>
    %148 = vector.broadcast %15 : vector<1x128xf32> to vector<16x128xf32>
    %149 = arith.mulf %147, %148 : vector<16x128xf32>
    %150 = vector.broadcast %16 : vector<1x128xf32> to vector<16x128xf32>
    %151 = arith.addf %149, %150 : vector<16x128xf32>
    %152 = arith.truncf %151 : vector<16x128xf32> to vector<16x128xbf16>
    %c0_47 = arith.constant 0 : index
    %c0_48 = arith.constant 0 : index
    %c0_49 = arith.constant 0 : index
    %153 = vector.load %arg6[%c0_47, %c0_48, %c0_49] : memref<2x128x512xbf16, #tpu.memory_space<vmem>>, vector<1x128x512xbf16>
    %154 = vector.shape_cast %153 : vector<1x128x512xbf16> to vector<128x512xbf16>
    %cst_50 = arith.constant dense<0.000000e+00> : vector<16x512xf32>
    %155 = tpu.matmul %152, %154, %cst_50 {dimension_numbers = #tpu.dot_dimension_numbers<[1], [0], [0], [1], [0, 0, 1, 1], [], []>} : vector<16x128xbf16>, vector<128x512xbf16>, vector<16x512xf32> -> vector<16x512xf32>
    %156 = vector.broadcast %20 : vector<1x512xf32> to vector<16x512xf32>
    %157 = arith.addf %155, %156 : vector<16x512xf32>
    %158 = arith.mulf %157, %157 : vector<16x512xf32>
    %159 = arith.mulf %157, %158 : vector<16x512xf32>
    %cst_51 = arith.constant 4.471500e-02 : f32
    %160 = vector.broadcast %cst_51 : f32 to vector<16x512xf32>
    %161 = arith.mulf %160, %159 : vector<16x512xf32>
    %162 = arith.addf %157, %161 : vector<16x512xf32>
    %cst_52 = arith.constant 0.797884583 : f32
    %163 = vector.broadcast %cst_52 : f32 to vector<16x512xf32>
    %164 = arith.mulf %163, %162 : vector<16x512xf32>
    %165 = math.tanh %164 : vector<16x512xf32>
    %cst_53 = arith.constant 1.000000e+00 : f32
    %166 = vector.broadcast %cst_53 : f32 to vector<16x512xf32>
    %167 = arith.addf %166, %165 : vector<16x512xf32>
    %cst_54 = arith.constant 5.000000e-01 : f32
    %168 = vector.broadcast %cst_54 : f32 to vector<16x512xf32>
    %169 = arith.mulf %168, %167 : vector<16x512xf32>
    %170 = arith.mulf %157, %169 : vector<16x512xf32>
    %171 = arith.truncf %170 : vector<16x512xf32> to vector<16x512xbf16>
    %c0_55 = arith.constant 0 : index
    %c0_56 = arith.constant 0 : index
    %c0_57 = arith.constant 0 : index
    %172 = vector.load %arg7[%c0_55, %c0_56, %c0_57] : memref<2x512x128xbf16, #tpu.memory_space<vmem>>, vector<1x512x128xbf16>
    %173 = vector.shape_cast %172 : vector<1x512x128xbf16> to vector<512x128xbf16>
    %cst_58 = arith.constant dense<0.000000e+00> : vector<16x128xf32>
    %174 = tpu.matmul %171, %173, %cst_58 {dimension_numbers = #tpu.dot_dimension_numbers<[1], [0], [0], [1], [0, 0, 1, 1], [], []>} : vector<16x512xbf16>, vector<512x128xbf16>, vector<16x128xf32> -> vector<16x128xf32>
    %175 = vector.broadcast %18 : vector<1x128xf32> to vector<16x128xf32>
    %176 = arith.addf %174, %175 : vector<16x128xf32>
    %177 = arith.addf %129, %176 : vector<16x128xf32>
    %c1 = arith.constant 1 : index
    %c0_59 = arith.constant 0 : index
    %c0_60 = arith.constant 0 : index
    %178 = vector.load %arg8[%c1, %c0_59, %c0_60] : memref<2x8x512xf32, #tpu.memory_space<vmem>>, vector<1x8x512xf32>
    %179 = vector.shape_cast %178 : vector<1x8x512xf32> to vector<8x512xf32>
    %180 = vector.extract_strided_slice %179 {offsets = [0, 0], sizes = [1, 128], strides = [1, 1]} : vector<8x512xf32> to vector<1x128xf32>
    %181 = vector.extract_strided_slice %179 {offsets = [1, 0], sizes = [1, 128], strides = [1, 1]} : vector<8x512xf32> to vector<1x128xf32>
    %182 = vector.extract_strided_slice %179 {offsets = [2, 0], sizes = [1, 128], strides = [1, 1]} : vector<8x512xf32> to vector<1x128xf32>
    %183 = vector.extract_strided_slice %179 {offsets = [3, 0], sizes = [1, 128], strides = [1, 1]} : vector<8x512xf32> to vector<1x128xf32>
    %184 = vector.extract_strided_slice %179 {offsets = [4, 0], sizes = [1, 128], strides = [1, 1]} : vector<8x512xf32> to vector<1x128xf32>
    %185 = vector.extract_strided_slice %179 {offsets = [5, 0], sizes = [1, 128], strides = [1, 1]} : vector<8x512xf32> to vector<1x128xf32>
    %186 = vector.extract_strided_slice %179 {offsets = [6, 0], sizes = [1, 384], strides = [1, 1]} : vector<8x512xf32> to vector<1x384xf32>
    %187 = vector.extract_strided_slice %179 {offsets = [7, 0], sizes = [1, 512], strides = [1, 1]} : vector<8x512xf32> to vector<1x512xf32>
    %cst_61 = arith.constant dense<0.000000e+00> : vector<16xf32>
    %188 = vector.multi_reduction <add>, %177, %cst_61 [1] : vector<16x128xf32> to vector<16xf32>
    %189 = vector.shape_cast %188 : vector<16xf32> to vector<16x1xf32>
    %cst_62 = arith.constant 1.280000e+02 : f32
    %190 = vector.broadcast %cst_62 : f32 to vector<16x1xf32>
    %191 = arith.divf %189, %190 : vector<16x1xf32>
    %192 = vector.broadcast %191 : vector<16x1xf32> to vector<16x128xf32>
    %193 = arith.subf %177, %192 : vector<16x128xf32>
    %194 = arith.mulf %193, %193 : vector<16x128xf32>
    %cst_63 = arith.constant dense<0.000000e+00> : vector<16xf32>
    %195 = vector.multi_reduction <add>, %194, %cst_63 [1] : vector<16x128xf32> to vector<16xf32>
    %196 = vector.shape_cast %195 : vector<16xf32> to vector<16x1xf32>
    %cst_64 = arith.constant 1.280000e+02 : f32
    %197 = vector.broadcast %cst_64 : f32 to vector<16x1xf32>
    %198 = arith.divf %196, %197 : vector<16x1xf32>
    %199 = vector.broadcast %191 : vector<16x1xf32> to vector<16x128xf32>
    %200 = arith.subf %177, %199 : vector<16x128xf32>
    %cst_65 = arith.constant 9.99999997E-7 : f32
    %201 = vector.broadcast %cst_65 : f32 to vector<16x1xf32>
    %202 = arith.addf %198, %201 : vector<16x1xf32>
    %203 = math.rsqrt %202 : vector<16x1xf32>
    %204 = vector.broadcast %203 : vector<16x1xf32> to vector<16x128xf32>
    %205 = arith.mulf %200, %204 : vector<16x128xf32>
    %206 = vector.broadcast %180 : vector<1x128xf32> to vector<16x128xf32>
    %207 = arith.mulf %205, %206 : vector<16x128xf32>
    %208 = vector.broadcast %181 : vector<1x128xf32> to vector<16x128xf32>
    %209 = arith.addf %207, %208 : vector<16x128xf32>
    %210 = arith.truncf %209 : vector<16x128xf32> to vector<16x128xbf16>
    %c1_66 = arith.constant 1 : index
    %c0_67 = arith.constant 0 : index
    %c0_68 = arith.constant 0 : index
    %211 = vector.load %arg4[%c1_66, %c0_67, %c0_68] : memref<2x128x384xbf16, #tpu.memory_space<vmem>>, vector<1x128x384xbf16>
    %212 = vector.shape_cast %211 : vector<1x128x384xbf16> to vector<128x384xbf16>
    %cst_69 = arith.constant dense<0.000000e+00> : vector<16x384xf32>
    %213 = tpu.matmul %210, %212, %cst_69 {dimension_numbers = #tpu.dot_dimension_numbers<[1], [0], [0], [1], [0, 0, 1, 1], [], []>} : vector<16x128xbf16>, vector<128x384xbf16>, vector<16x384xf32> -> vector<16x384xf32>
    %214 = vector.broadcast %186 : vector<1x384xf32> to vector<16x384xf32>
    %215 = arith.addf %213, %214 : vector<16x384xf32>
    %216 = vector.extract_strided_slice %215 {offsets = [0, 0], sizes = [16, 128], strides = [1, 1]} : vector<16x384xf32> to vector<16x128xf32>
    %cst_70 = arith.constant 0.176776692 : f32
    %217 = vector.broadcast %cst_70 : f32 to vector<16x128xf32>
    %218 = arith.mulf %216, %217 : vector<16x128xf32>
    %219 = arith.truncf %218 : vector<16x128xf32> to vector<16x128xbf16>
    %220 = vector.extract_strided_slice %215 {offsets = [0, 256], sizes = [16, 128], strides = [1, 1]} : vector<16x384xf32> to vector<16x128xf32>
    %221 = arith.truncf %220 : vector<16x128xf32> to vector<16x128xbf16>
    %222 = vector.extract_strided_slice %215 {offsets = [0, 128], sizes = [16, 128], strides = [1, 1]} : vector<16x384xf32> to vector<16x128xf32>
    %223 = tpu.transpose %222, [1, 0] : vector<16x128xf32> -> vector<128x16xf32>
    %224 = arith.truncf %223 : vector<128x16xf32> to vector<128x16xbf16>
    %225 = vector.extract_strided_slice %219 {offsets = [0, 0], sizes = [8, 32], strides = [1, 1]} : vector<16x128xbf16> to vector<8x32xbf16>
    %226 = vector.extract_strided_slice %224 {offsets = [0, 0], sizes = [32, 8], strides = [1, 1]} : vector<128x16xbf16> to vector<32x8xbf16>
    %cst_71 = arith.constant dense<0.000000e+00> : vector<8x8xf32>
    %227 = tpu.matmul %225, %226, %cst_71 {dimension_numbers = #tpu.dot_dimension_numbers<[1], [0], [0], [1], [0, 0, 1, 1], [], []>} : vector<8x32xbf16>, vector<32x8xbf16>, vector<8x8xf32> -> vector<8x8xf32>
    %228 = vector.extract_strided_slice %219 {offsets = [0, 32], sizes = [8, 32], strides = [1, 1]} : vector<16x128xbf16> to vector<8x32xbf16>
    %229 = vector.extract_strided_slice %224 {offsets = [32, 0], sizes = [32, 8], strides = [1, 1]} : vector<128x16xbf16> to vector<32x8xbf16>
    %cst_72 = arith.constant dense<0.000000e+00> : vector<8x8xf32>
    %230 = tpu.matmul %228, %229, %cst_72 {dimension_numbers = #tpu.dot_dimension_numbers<[1], [0], [0], [1], [0, 0, 1, 1], [], []>} : vector<8x32xbf16>, vector<32x8xbf16>, vector<8x8xf32> -> vector<8x8xf32>
    %231 = vector.extract_strided_slice %219 {offsets = [0, 64], sizes = [8, 32], strides = [1, 1]} : vector<16x128xbf16> to vector<8x32xbf16>
    %232 = vector.extract_strided_slice %224 {offsets = [64, 0], sizes = [32, 8], strides = [1, 1]} : vector<128x16xbf16> to vector<32x8xbf16>
    %cst_73 = arith.constant dense<0.000000e+00> : vector<8x8xf32>
    %233 = tpu.matmul %231, %232, %cst_73 {dimension_numbers = #tpu.dot_dimension_numbers<[1], [0], [0], [1], [0, 0, 1, 1], [], []>} : vector<8x32xbf16>, vector<32x8xbf16>, vector<8x8xf32> -> vector<8x8xf32>
    %234 = vector.extract_strided_slice %219 {offsets = [0, 96], sizes = [8, 32], strides = [1, 1]} : vector<16x128xbf16> to vector<8x32xbf16>
    %235 = vector.extract_strided_slice %224 {offsets = [96, 0], sizes = [32, 8], strides = [1, 1]} : vector<128x16xbf16> to vector<32x8xbf16>
    %cst_74 = arith.constant dense<0.000000e+00> : vector<8x8xf32>
    %236 = tpu.matmul %234, %235, %cst_74 {dimension_numbers = #tpu.dot_dimension_numbers<[1], [0], [0], [1], [0, 0, 1, 1], [], []>} : vector<8x32xbf16>, vector<32x8xbf16>, vector<8x8xf32> -> vector<8x8xf32>
    %237 = vector.extract_strided_slice %219 {offsets = [8, 0], sizes = [8, 32], strides = [1, 1]} : vector<16x128xbf16> to vector<8x32xbf16>
    %238 = vector.extract_strided_slice %224 {offsets = [0, 8], sizes = [32, 8], strides = [1, 1]} : vector<128x16xbf16> to vector<32x8xbf16>
    %cst_75 = arith.constant dense<0.000000e+00> : vector<8x8xf32>
    %239 = tpu.matmul %237, %238, %cst_75 {dimension_numbers = #tpu.dot_dimension_numbers<[1], [0], [0], [1], [0, 0, 1, 1], [], []>} : vector<8x32xbf16>, vector<32x8xbf16>, vector<8x8xf32> -> vector<8x8xf32>
    %240 = vector.extract_strided_slice %219 {offsets = [8, 32], sizes = [8, 32], strides = [1, 1]} : vector<16x128xbf16> to vector<8x32xbf16>
    %241 = vector.extract_strided_slice %224 {offsets = [32, 8], sizes = [32, 8], strides = [1, 1]} : vector<128x16xbf16> to vector<32x8xbf16>
    %cst_76 = arith.constant dense<0.000000e+00> : vector<8x8xf32>
    %242 = tpu.matmul %240, %241, %cst_76 {dimension_numbers = #tpu.dot_dimension_numbers<[1], [0], [0], [1], [0, 0, 1, 1], [], []>} : vector<8x32xbf16>, vector<32x8xbf16>, vector<8x8xf32> -> vector<8x8xf32>
    %243 = vector.extract_strided_slice %219 {offsets = [8, 64], sizes = [8, 32], strides = [1, 1]} : vector<16x128xbf16> to vector<8x32xbf16>
    %244 = vector.extract_strided_slice %224 {offsets = [64, 8], sizes = [32, 8], strides = [1, 1]} : vector<128x16xbf16> to vector<32x8xbf16>
    %cst_77 = arith.constant dense<0.000000e+00> : vector<8x8xf32>
    %245 = tpu.matmul %243, %244, %cst_77 {dimension_numbers = #tpu.dot_dimension_numbers<[1], [0], [0], [1], [0, 0, 1, 1], [], []>} : vector<8x32xbf16>, vector<32x8xbf16>, vector<8x8xf32> -> vector<8x8xf32>
    %246 = vector.extract_strided_slice %219 {offsets = [8, 96], sizes = [8, 32], strides = [1, 1]} : vector<16x128xbf16> to vector<8x32xbf16>
    %247 = vector.extract_strided_slice %224 {offsets = [96, 8], sizes = [32, 8], strides = [1, 1]} : vector<128x16xbf16> to vector<32x8xbf16>
    %cst_78 = arith.constant dense<0.000000e+00> : vector<8x8xf32>
    %248 = tpu.matmul %246, %247, %cst_78 {dimension_numbers = #tpu.dot_dimension_numbers<[1], [0], [0], [1], [0, 0, 1, 1], [], []>} : vector<8x32xbf16>, vector<32x8xbf16>, vector<8x8xf32> -> vector<8x8xf32>
    %249 = tpu.concatenate %227, %230, %233, %236, %239, %242, %245, %248 in 0 : vector<8x8xf32>, vector<8x8xf32>, vector<8x8xf32>, vector<8x8xf32>, vector<8x8xf32>, vector<8x8xf32>, vector<8x8xf32>, vector<8x8xf32> -> vector<64x8xf32>
    %250 = vector.broadcast %10 : vector<1x8xf32> to vector<64x8xf32>
    %251 = arith.addf %249, %250 : vector<64x8xf32>
    %cst_79 = arith.constant dense<0xFF800000> : vector<64xf32>
    %252 = vector.multi_reduction <maximumf>, %251, %cst_79 [1] : vector<64x8xf32> to vector<64xf32>
    %253 = vector.shape_cast %252 : vector<64xf32> to vector<64x1xf32>
    %254 = vector.broadcast %253 : vector<64x1xf32> to vector<64x8xf32>
    %255 = arith.subf %251, %254 : vector<64x8xf32>
    %256 = math.exp %255 : vector<64x8xf32>
    %cst_80 = arith.constant dense<0.000000e+00> : vector<64xf32>
    %257 = vector.multi_reduction <add>, %256, %cst_80 [1] : vector<64x8xf32> to vector<64xf32>
    %258 = vector.shape_cast %257 : vector<64xf32> to vector<64x1xf32>
    %259 = tpu.reciprocal %258 {approx = true} : vector<64x1xf32> -> vector<64x1xf32>
    %260 = vector.broadcast %259 : vector<64x1xf32> to vector<64x8xf32>
    %261 = arith.mulf %256, %260 : vector<64x8xf32>
    %262 = arith.truncf %261 : vector<64x8xf32> to vector<64x8xbf16>
    %263 = vector.extract_strided_slice %262 {offsets = [0, 0], sizes = [8, 8], strides = [1, 1]} : vector<64x8xbf16> to vector<8x8xbf16>
    %264 = vector.extract_strided_slice %221 {offsets = [0, 0], sizes = [8, 32], strides = [1, 1]} : vector<16x128xbf16> to vector<8x32xbf16>
    %cst_81 = arith.constant dense<0.000000e+00> : vector<8x32xf32>
    %265 = tpu.matmul %263, %264, %cst_81 {dimension_numbers = #tpu.dot_dimension_numbers<[1], [0], [0], [1], [0, 0, 1, 1], [], []>} : vector<8x8xbf16>, vector<8x32xbf16>, vector<8x32xf32> -> vector<8x32xf32>
    %266 = vector.extract_strided_slice %262 {offsets = [8, 0], sizes = [8, 8], strides = [1, 1]} : vector<64x8xbf16> to vector<8x8xbf16>
    %267 = vector.extract_strided_slice %221 {offsets = [0, 32], sizes = [8, 32], strides = [1, 1]} : vector<16x128xbf16> to vector<8x32xbf16>
    %cst_82 = arith.constant dense<0.000000e+00> : vector<8x32xf32>
    %268 = tpu.matmul %266, %267, %cst_82 {dimension_numbers = #tpu.dot_dimension_numbers<[1], [0], [0], [1], [0, 0, 1, 1], [], []>} : vector<8x8xbf16>, vector<8x32xbf16>, vector<8x32xf32> -> vector<8x32xf32>
    %269 = vector.extract_strided_slice %262 {offsets = [16, 0], sizes = [8, 8], strides = [1, 1]} : vector<64x8xbf16> to vector<8x8xbf16>
    %270 = vector.extract_strided_slice %221 {offsets = [0, 64], sizes = [8, 32], strides = [1, 1]} : vector<16x128xbf16> to vector<8x32xbf16>
    %cst_83 = arith.constant dense<0.000000e+00> : vector<8x32xf32>
    %271 = tpu.matmul %269, %270, %cst_83 {dimension_numbers = #tpu.dot_dimension_numbers<[1], [0], [0], [1], [0, 0, 1, 1], [], []>} : vector<8x8xbf16>, vector<8x32xbf16>, vector<8x32xf32> -> vector<8x32xf32>
    %272 = vector.extract_strided_slice %262 {offsets = [24, 0], sizes = [8, 8], strides = [1, 1]} : vector<64x8xbf16> to vector<8x8xbf16>
    %273 = vector.extract_strided_slice %221 {offsets = [0, 96], sizes = [8, 32], strides = [1, 1]} : vector<16x128xbf16> to vector<8x32xbf16>
    %cst_84 = arith.constant dense<0.000000e+00> : vector<8x32xf32>
    %274 = tpu.matmul %272, %273, %cst_84 {dimension_numbers = #tpu.dot_dimension_numbers<[1], [0], [0], [1], [0, 0, 1, 1], [], []>} : vector<8x8xbf16>, vector<8x32xbf16>, vector<8x32xf32> -> vector<8x32xf32>
    %275 = tpu.concatenate %265, %268, %271, %274 in 1 : vector<8x32xf32>, vector<8x32xf32>, vector<8x32xf32>, vector<8x32xf32> -> vector<8x128xf32>
    %276 = vector.extract_strided_slice %262 {offsets = [32, 0], sizes = [8, 8], strides = [1, 1]} : vector<64x8xbf16> to vector<8x8xbf16>
    %277 = vector.extract_strided_slice %221 {offsets = [8, 0], sizes = [8, 32], strides = [1, 1]} : vector<16x128xbf16> to vector<8x32xbf16>
    %cst_85 = arith.constant dense<0.000000e+00> : vector<8x32xf32>
    %278 = tpu.matmul %276, %277, %cst_85 {dimension_numbers = #tpu.dot_dimension_numbers<[1], [0], [0], [1], [0, 0, 1, 1], [], []>} : vector<8x8xbf16>, vector<8x32xbf16>, vector<8x32xf32> -> vector<8x32xf32>
    %279 = vector.extract_strided_slice %262 {offsets = [40, 0], sizes = [8, 8], strides = [1, 1]} : vector<64x8xbf16> to vector<8x8xbf16>
    %280 = vector.extract_strided_slice %221 {offsets = [8, 32], sizes = [8, 32], strides = [1, 1]} : vector<16x128xbf16> to vector<8x32xbf16>
    %cst_86 = arith.constant dense<0.000000e+00> : vector<8x32xf32>
    %281 = tpu.matmul %279, %280, %cst_86 {dimension_numbers = #tpu.dot_dimension_numbers<[1], [0], [0], [1], [0, 0, 1, 1], [], []>} : vector<8x8xbf16>, vector<8x32xbf16>, vector<8x32xf32> -> vector<8x32xf32>
    %282 = vector.extract_strided_slice %262 {offsets = [48, 0], sizes = [8, 8], strides = [1, 1]} : vector<64x8xbf16> to vector<8x8xbf16>
    %283 = vector.extract_strided_slice %221 {offsets = [8, 64], sizes = [8, 32], strides = [1, 1]} : vector<16x128xbf16> to vector<8x32xbf16>
    %cst_87 = arith.constant dense<0.000000e+00> : vector<8x32xf32>
    %284 = tpu.matmul %282, %283, %cst_87 {dimension_numbers = #tpu.dot_dimension_numbers<[1], [0], [0], [1], [0, 0, 1, 1], [], []>} : vector<8x8xbf16>, vector<8x32xbf16>, vector<8x32xf32> -> vector<8x32xf32>
    %285 = vector.extract_strided_slice %262 {offsets = [56, 0], sizes = [8, 8], strides = [1, 1]} : vector<64x8xbf16> to vector<8x8xbf16>
    %286 = vector.extract_strided_slice %221 {offsets = [8, 96], sizes = [8, 32], strides = [1, 1]} : vector<16x128xbf16> to vector<8x32xbf16>
    %cst_88 = arith.constant dense<0.000000e+00> : vector<8x32xf32>
    %287 = tpu.matmul %285, %286, %cst_88 {dimension_numbers = #tpu.dot_dimension_numbers<[1], [0], [0], [1], [0, 0, 1, 1], [], []>} : vector<8x8xbf16>, vector<8x32xbf16>, vector<8x32xf32> -> vector<8x32xf32>
    %288 = tpu.concatenate %278, %281, %284, %287 in 1 : vector<8x32xf32>, vector<8x32xf32>, vector<8x32xf32>, vector<8x32xf32> -> vector<8x128xf32>
    %289 = tpu.concatenate %275, %288 in 0 : vector<8x128xf32>, vector<8x128xf32> -> vector<16x128xf32>
    %290 = arith.truncf %289 : vector<16x128xf32> to vector<16x128xbf16>
    %c1_89 = arith.constant 1 : index
    %c0_90 = arith.constant 0 : index
    %c0_91 = arith.constant 0 : index
    %291 = vector.load %arg5[%c1_89, %c0_90, %c0_91] : memref<2x128x128xbf16, #tpu.memory_space<vmem>>, vector<1x128x128xbf16>
    %292 = vector.shape_cast %291 : vector<1x128x128xbf16> to vector<128x128xbf16>
    %cst_92 = arith.constant dense<0.000000e+00> : vector<16x128xf32>
    %293 = tpu.matmul %290, %292, %cst_92 {dimension_numbers = #tpu.dot_dimension_numbers<[1], [0], [0], [1], [0, 0, 1, 1], [], []>} : vector<16x128xbf16>, vector<128x128xbf16>, vector<16x128xf32> -> vector<16x128xf32>
    %294 = arith.addf %177, %293 : vector<16x128xf32>
    %295 = vector.broadcast %184 : vector<1x128xf32> to vector<16x128xf32>
    %296 = arith.addf %294, %295 : vector<16x128xf32>
    %cst_93 = arith.constant dense<0.000000e+00> : vector<16xf32>
    %297 = vector.multi_reduction <add>, %296, %cst_93 [1] : vector<16x128xf32> to vector<16xf32>
    %298 = vector.shape_cast %297 : vector<16xf32> to vector<16x1xf32>
    %cst_94 = arith.constant 1.280000e+02 : f32
    %299 = vector.broadcast %cst_94 : f32 to vector<16x1xf32>
    %300 = arith.divf %298, %299 : vector<16x1xf32>
    %301 = vector.broadcast %300 : vector<16x1xf32> to vector<16x128xf32>
    %302 = arith.subf %296, %301 : vector<16x128xf32>
    %303 = arith.mulf %302, %302 : vector<16x128xf32>
    %cst_95 = arith.constant dense<0.000000e+00> : vector<16xf32>
    %304 = vector.multi_reduction <add>, %303, %cst_95 [1] : vector<16x128xf32> to vector<16xf32>
    %305 = vector.shape_cast %304 : vector<16xf32> to vector<16x1xf32>
    %cst_96 = arith.constant 1.280000e+02 : f32
    %306 = vector.broadcast %cst_96 : f32 to vector<16x1xf32>
    %307 = arith.divf %305, %306 : vector<16x1xf32>
    %308 = vector.broadcast %300 : vector<16x1xf32> to vector<16x128xf32>
    %309 = arith.subf %296, %308 : vector<16x128xf32>
    %cst_97 = arith.constant 9.99999997E-7 : f32
    %310 = vector.broadcast %cst_97 : f32 to vector<16x1xf32>
    %311 = arith.addf %307, %310 : vector<16x1xf32>
    %312 = math.rsqrt %311 : vector<16x1xf32>
    %313 = vector.broadcast %312 : vector<16x1xf32> to vector<16x128xf32>
    %314 = arith.mulf %309, %313 : vector<16x128xf32>
    %315 = vector.broadcast %182 : vector<1x128xf32> to vector<16x128xf32>
    %316 = arith.mulf %314, %315 : vector<16x128xf32>
    %317 = vector.broadcast %183 : vector<1x128xf32> to vector<16x128xf32>
    %318 = arith.addf %316, %317 : vector<16x128xf32>
    %319 = arith.truncf %318 : vector<16x128xf32> to vector<16x128xbf16>
    %c1_98 = arith.constant 1 : index
    %c0_99 = arith.constant 0 : index
    %c0_100 = arith.constant 0 : index
    %320 = vector.load %arg6[%c1_98, %c0_99, %c0_100] : memref<2x128x512xbf16, #tpu.memory_space<vmem>>, vector<1x128x512xbf16>
    %321 = vector.shape_cast %320 : vector<1x128x512xbf16> to vector<128x512xbf16>
    %cst_101 = arith.constant dense<0.000000e+00> : vector<16x512xf32>
    %322 = tpu.matmul %319, %321, %cst_101 {dimension_numbers = #tpu.dot_dimension_numbers<[1], [0], [0], [1], [0, 0, 1, 1], [], []>} : vector<16x128xbf16>, vector<128x512xbf16>, vector<16x512xf32> -> vector<16x512xf32>
    %323 = vector.broadcast %187 : vector<1x512xf32> to vector<16x512xf32>
    %324 = arith.addf %322, %323 : vector<16x512xf32>
    %325 = arith.mulf %324, %324 : vector<16x512xf32>
    %326 = arith.mulf %324, %325 : vector<16x512xf32>
    %cst_102 = arith.constant 4.471500e-02 : f32
    %327 = vector.broadcast %cst_102 : f32 to vector<16x512xf32>
    %328 = arith.mulf %327, %326 : vector<16x512xf32>
    %329 = arith.addf %324, %328 : vector<16x512xf32>
    %cst_103 = arith.constant 0.797884583 : f32
    %330 = vector.broadcast %cst_103 : f32 to vector<16x512xf32>
    %331 = arith.mulf %330, %329 : vector<16x512xf32>
    %332 = math.tanh %331 : vector<16x512xf32>
    %cst_104 = arith.constant 1.000000e+00 : f32
    %333 = vector.broadcast %cst_104 : f32 to vector<16x512xf32>
    %334 = arith.addf %333, %332 : vector<16x512xf32>
    %cst_105 = arith.constant 5.000000e-01 : f32
    %335 = vector.broadcast %cst_105 : f32 to vector<16x512xf32>
    %336 = arith.mulf %335, %334 : vector<16x512xf32>
    %337 = arith.mulf %324, %336 : vector<16x512xf32>
    %338 = arith.truncf %337 : vector<16x512xf32> to vector<16x512xbf16>
    %c1_106 = arith.constant 1 : index
    %c0_107 = arith.constant 0 : index
    %c0_108 = arith.constant 0 : index
    %339 = vector.load %arg7[%c1_106, %c0_107, %c0_108] : memref<2x512x128xbf16, #tpu.memory_space<vmem>>, vector<1x512x128xbf16>
    %340 = vector.shape_cast %339 : vector<1x512x128xbf16> to vector<512x128xbf16>
    %cst_109 = arith.constant dense<0.000000e+00> : vector<16x128xf32>
    %341 = tpu.matmul %338, %340, %cst_109 {dimension_numbers = #tpu.dot_dimension_numbers<[1], [0], [0], [1], [0, 0, 1, 1], [], []>} : vector<16x512xbf16>, vector<512x128xbf16>, vector<16x128xf32> -> vector<16x128xf32>
    %342 = vector.broadcast %185 : vector<1x128xf32> to vector<16x128xf32>
    %343 = arith.addf %341, %342 : vector<16x128xf32>
    %344 = arith.addf %296, %343 : vector<16x128xf32>
    %345 = vector.extract_strided_slice %344 {offsets = [0, 0], sizes = [1, 128], strides = [1, 1]} : vector<16x128xf32> to vector<1x128xf32>
    %346 = vector.extract_strided_slice %344 {offsets = [8, 0], sizes = [1, 128], strides = [1, 1]} : vector<16x128xf32> to vector<1x128xf32>
    %347 = tpu.concatenate %345, %346 in 0 : vector<1x128xf32>, vector<1x128xf32> -> vector<2x128xf32>
    %c0_110 = arith.constant 0 : index
    %c0_111 = arith.constant 0 : index
    %348 = vector.load %arg9[%c0_110, %c0_111] : memref<2x128xf32, #tpu.memory_space<vmem>>, vector<1x128xf32>
    %c1_112 = arith.constant 1 : index
    %c0_113 = arith.constant 0 : index
    %349 = vector.load %arg9[%c1_112, %c0_113] : memref<2x128xf32, #tpu.memory_space<vmem>>, vector<1x128xf32>
    %cst_114 = arith.constant dense<0.000000e+00> : vector<2xf32>
    %350 = vector.multi_reduction <add>, %347, %cst_114 [1] : vector<2x128xf32> to vector<2xf32>
    %351 = vector.shape_cast %350 : vector<2xf32> to vector<2x1xf32>
    %cst_115 = arith.constant 1.280000e+02 : f32
    %352 = vector.broadcast %cst_115 : f32 to vector<2x1xf32>
    %353 = arith.divf %351, %352 : vector<2x1xf32>
    %354 = vector.broadcast %353 : vector<2x1xf32> to vector<2x128xf32>
    %355 = arith.subf %347, %354 : vector<2x128xf32>
    %356 = arith.mulf %355, %355 : vector<2x128xf32>
    %cst_116 = arith.constant dense<0.000000e+00> : vector<2xf32>
    %357 = vector.multi_reduction <add>, %356, %cst_116 [1] : vector<2x128xf32> to vector<2xf32>
    %358 = vector.shape_cast %357 : vector<2xf32> to vector<2x1xf32>
    %cst_117 = arith.constant 1.280000e+02 : f32
    %359 = vector.broadcast %cst_117 : f32 to vector<2x1xf32>
    %360 = arith.divf %358, %359 : vector<2x1xf32>
    %361 = vector.broadcast %353 : vector<2x1xf32> to vector<2x128xf32>
    %362 = arith.subf %347, %361 : vector<2x128xf32>
    %cst_118 = arith.constant 9.99999997E-7 : f32
    %363 = vector.broadcast %cst_118 : f32 to vector<2x1xf32>
    %364 = arith.addf %360, %363 : vector<2x1xf32>
    %365 = math.rsqrt %364 : vector<2x1xf32>
    %366 = vector.broadcast %365 : vector<2x1xf32> to vector<2x128xf32>
    %367 = arith.mulf %362, %366 : vector<2x128xf32>
    %368 = vector.broadcast %348 : vector<1x128xf32> to vector<2x128xf32>
    %369 = arith.mulf %367, %368 : vector<2x128xf32>
    %370 = vector.broadcast %349 : vector<1x128xf32> to vector<2x128xf32>
    %371 = arith.addf %369, %370 : vector<2x128xf32>
    %c0_119 = arith.constant 0 : index
    %c0_120 = arith.constant 0 : index
    %c0_121 = arith.constant 0 : index
    %372 = vector.load %arg10[%c0_119, %c0_120, %c0_121] : memref<1x2x128xf32, #tpu.memory_space<vmem>>, vector<1x2x128xf32>
    %373 = vector.shape_cast %372 : vector<1x2x128xf32> to vector<2x128xf32>
    %374 = vector.shape_cast %371 : vector<2x128xf32> to vector<1x2x128xf32>
    tpu.vector_store %arg10[%c0_119, %c0_120, %c0_121], %374 {strides = array<i32>} : memref<1x2x128xf32, #tpu.memory_space<vmem>>, vector<1x2x128xf32>,
    return
  }
  func.func @transform_0(%arg0: i32) -> (i32, i32) {
    %c0_i32 = arith.constant 0 : i32
    %c0_i32_0 = arith.constant 0 : i32
    return %arg0, %c0_i32 : i32, i32
  }
  func.func @transform_1(%arg0: i32) -> (i32, i32) {
    %c0_i32 = arith.constant 0 : i32
    %c0_i32_0 = arith.constant 0 : i32
    %c0_i32_1 = arith.constant 0 : i32
    return %c0_i32, %c0_i32_0 : i32, i32
  }
  func.func @transform_2(%arg0: i32) -> (i32, i32) {
    %c0_i32 = arith.constant 0 : i32
    %c0_i32_0 = arith.constant 0 : i32
    %c0_i32_1 = arith.constant 0 : i32
    return %c0_i32, %c0_i32_0 : i32, i32
  }
  func.func @transform_3(%arg0: i32) -> (i32, i32, i32) {
    %c0_i32 = arith.constant 0 : i32
    %c0_i32_0 = arith.constant 0 : i32
    %c0_i32_1 = arith.constant 0 : i32
    %c0_i32_2 = arith.constant 0 : i32
    return %c0_i32, %c0_i32_0, %c0_i32_1 : i32, i32, i32
  }
  func.func @transform_4(%arg0: i32) -> (i32, i32, i32) {
    %c0_i32 = arith.constant 0 : i32
    %c0_i32_0 = arith.constant 0 : i32
    %c0_i32_1 = arith.constant 0 : i32
    %c0_i32_2 = arith.constant 0 : i32
    return %c0_i32, %c0_i32_0, %c0_i32_1 : i32, i32, i32
  }
  func.func @transform_5(%arg0: i32) -> (i32, i32, i32) {
    %c0_i32 = arith.constant 0 : i32
    %c0_i32_0 = arith.constant 0 : i32
    %c0_i32_1 = arith.constant 0 : i32
    %c0_i32_2 = arith.constant 0 : i32
    return %c0_i32, %c0_i32_0, %c0_i32_1 : i32, i32, i32
  }
  func.func @transform_6(%arg0: i32) -> (i32, i32, i32) {
    %c0_i32 = arith.constant 0 : i32
    %c0_i32_0 = arith.constant 0 : i32
    %c0_i32_1 = arith.constant 0 : i32
    %c0_i32_2 = arith.constant 0 : i32
    return %c0_i32, %c0_i32_0, %c0_i32_1 : i32, i32, i32
  }
  func.func @transform_7(%arg0: i32) -> (i32, i32, i32) {
    %c0_i32 = arith.constant 0 : i32
    %c0_i32_0 = arith.constant 0 : i32
    %c0_i32_1 = arith.constant 0 : i32
    %c0_i32_2 = arith.constant 0 : i32
    return %c0_i32, %c0_i32_0, %c0_i32_1 : i32, i32, i32
  }
  func.func @transform_8(%arg0: i32) -> (i32, i32) {
    %c0_i32 = arith.constant 0 : i32
    %c0_i32_0 = arith.constant 0 : i32
    %c0_i32_1 = arith.constant 0 : i32
    return %c0_i32, %c0_i32_0 : i32, i32
  }
  func.func @transform_9(%arg0: i32) -> (i32, i32, i32) {
    %c0_i32 = arith.constant 0 : i32
    %c0_i32_0 = arith.constant 0 : i32
    %c0_i32_1 = arith.constant 0 : i32
    return %arg0, %c0_i32, %c0_i32_0 : i32, i32, i32
  }
}

</mosaic_0001>

<llo_original>
// kernel: vit_features.1
$region0: #{vit_features.1}
  #allocation0 [shape = 'u32[]', space=smem, size = 0x4, offset = 0x4, fixed_abs, tag = 'smem constant byte address 0x4 - core index']
  #allocation1 [shape = 'u32[72,128]{1,0:T(1,128)}', space=vmem, size = 0x9000, scoped, tag = 'internal scratch']
  %s0 = inlined_call_operand.vmem [shape: bf16[16,768], index: 0, kind: input, shape index: {}]
  %s1 = inlined_call_operand.vmem [shape: f32[16,128], index: 1, kind: input, shape index: {}]
  %s2 = inlined_call_operand.hbm [shape: bf16[768,128], index: 2, kind: input, shape index: {}]
  %s3 = inlined_call_operand.hbm [shape: bf16[2,128,384], index: 3, kind: input, shape index: {}]
  %s4 = inlined_call_operand.vmem [shape: bf16[2,128,128], index: 4, kind: input, shape index: {}]
  %s5 = inlined_call_operand.vmem [shape: bf16[2,128,512], index: 5, kind: input, shape index: {}]
  %s6 = inlined_call_operand.vmem [shape: bf16[2,512,128], index: 6, kind: input, shape index: {}]
  %s7 = inlined_call_operand.vmem [shape: f32[2,8,512], index: 7, kind: input, shape index: {}]
  %s8 = inlined_call_operand.vmem [shape: f32[2,128], index: 8, kind: input, shape index: {}]
  %s9 = inlined_call_operand.hbm [shape: f32[1,2,128], index: 9, kind: output, shape index: {}]
  %s10 = sld [smem:[#allocation0]]
  $region54: #{vit_features.1} parent=0
    _
  %s12 = ssub.s32 1, %s10
  %s13 = scalar_select 0, %s12, %s10
  $region1: #{vit_features.1} parent=0
    #allocation2 [shape = 'u8[196608]{0}', space=vmem, size = 0x30000, scoped, tag = 'input window, operand 2, single buffered']
    #allocation3 [shape = 's32[1]{0}', space=sflag, size = 0x4, scoped, tag = 'scoped memory for vit_features.1']
    #allocation4 [shape = 's32[1]{0}', space=sflag, size = 0x4, scoped, tag = 'scoped memory for vit_features.1']
    #allocation5 [shape = 'u8[196608]{0}', space=vmem, size = 0x30000, scoped, tag = 'input window, operand 3, single buffered']
    #allocation6 [shape = 's32[1]{0}', space=sflag, size = 0x4, scoped, tag = 'scoped memory for vit_features.1']
    #allocation7 [shape = 'u8[1024]{0}', space=vmem, size = 0x400, scoped, tag = 'output window, operand 0, single buffered']
    %14 = vsyncpa [#allocation3], 0
    %15 = vsyncpa [#allocation6], 0
    %16 = vsyncpa [#allocation4], 0
    // Predicated region
    $region2: #{vit_features.1} parent=1 // pred_check
      _
    $region3: #{vit_features.1} parent=1 // pred_check_branch
      %18 = sbr.rel (0) target = $region5
    $region4: #{vit_features.1} parent=1 // pred_region
      _
    $region5: #{vit_features.1} parent=1 // pred_fallthru
      _
    // Predicated region
    $region6: #{vit_features.1} parent=1 // pred_check
      _
    $region7: #{vit_features.1} parent=1 // pred_check_branch
      %20 = sbr.rel (0) target = $region9
    $region8: #{vit_features.1} parent=1 // pred_region
      _
    $region9: #{vit_features.1} parent=1 // pred_fallthru
      _
    // Predicated region
    $region10: #{vit_features.1} parent=1 // pred_check
      _
    $region11: #{vit_features.1} parent=1 // pred_check_branch
      %22 = sbr.rel (0) target = $region13
    $region12: #{vit_features.1} parent=1 // pred_region
      %24 = vsyncadd [#allocation3], 0
      %s25 = sshll.u32 %s2, 4
      %s26 = int_to_ptr.hbm [resolvable:$true] %s25
      %s27 = sshll.u32 [#allocation2], 4
      %s28 = int_to_ptr.vmem [resolvable:$true] %s27
      %33 = dma.hbm_to_vmem [thread:$0]  %s26, 6144, %s28, [#allocation3], 64, 64, 4
    $region13: #{vit_features.1} parent=1 // pred_fallthru
      _
    // Predicated region
    $region14: #{vit_features.1} parent=1 // pred_check
      _
    $region15: #{vit_features.1} parent=1 // pred_check_branch
      %35 = sbr.rel (0) target = $region17
    $region16: #{vit_features.1} parent=1 // pred_region
      %37 = vsyncadd [#allocation6], 0
      %s38 = sshll.u32 %s3, 4
      %s39 = int_to_ptr.hbm [resolvable:$true] %s38
      %s40 = sshll.u32 [#allocation5], 4
      %s41 = int_to_ptr.vmem [resolvable:$true] %s40
      %46 = dma.hbm_to_vmem [thread:$0]  %s39, 6144, %s41, [#allocation6], 192, 192, 12
    $region17: #{vit_features.1} parent=1 // pred_fallthru
      _
    // Predicated region
    $region18: #{vit_features.1} parent=1 // pred_check
      _
    $region19: #{vit_features.1} parent=1 // pred_check_branch
      %48 = sbr.rel (0) target = $region21
    $region20: #{vit_features.1} parent=1 // pred_region
      _
    $region21: #{vit_features.1} parent=1 // pred_fallthru
      _
    // Predicated region
    $region22: #{vit_features.1} parent=1 // pred_check
      _
    $region23: #{vit_features.1} parent=1 // pred_check_branch
      %50 = sbr.rel (0) target = $region25
    $region24: #{vit_features.1} parent=1 // pred_region
      _
    $region25: #{vit_features.1} parent=1 // pred_fallthru
      _
    // Predicated region
    $region26: #{vit_features.1} parent=1 // pred_check
      _
    $region27: #{vit_features.1} parent=1 // pred_check_branch
      %52 = sbr.rel (0) target = $region29
    $region28: #{vit_features.1} parent=1 // pred_region
      _
    $region29: #{vit_features.1} parent=1 // pred_fallthru
      _
    // Predicated region
    $region30: #{vit_features.1} parent=1 // pred_check
      _
    $region31: #{vit_features.1} parent=1 // pred_check_branch
      %54 = sbr.rel (0) target = $region33
    $region32: #{vit_features.1} parent=1 // pred_region
      _
    $region33: #{vit_features.1} parent=1 // pred_fallthru
      _
    // Predicated region
    $region34: #{vit_features.1} parent=1 // pred_check
      _
    $region35: #{vit_features.1} parent=1 // pred_check_branch
      %56 = sbr.rel (0) target = $region37
    $region36: #{vit_features.1} parent=1 // pred_region
      _
    $region37: #{vit_features.1} parent=1 // pred_fallthru
      _
    // Predicated region
    $region38: #{vit_features.1} parent=1 // pred_check
      _
    $region39: #{vit_features.1} parent=1 // pred_check_branch
      %58 = sbr.rel (0) target = $region41
    $region40: #{vit_features.1} parent=1 // pred_region
      %60 = dma.done [#allocation3], 6144
    $region41: #{vit_features.1} parent=1 // pred_fallthru
      _
    // Predicated region
    $region42: #{vit_features.1} parent=1 // pred_check
      _
    $region43: #{vit_features.1} parent=1 // pred_check_branch
      %62 = sbr.rel (0) target = $region45
    $region44: #{vit_features.1} parent=1 // pred_region
      %64 = dma.done [#allocation6], 6144
    $region45: #{vit_features.1} parent=1 // pred_fallthru
      _
    %v66 = vld [vmem:[%s0] sm:$0xff]
    %v67 = vld [vmem:[%s0 + $0x8] sm:$0xff]
    %v68 = vld [vmem:[%s0 + $0x10] sm:$0xff]
    %v69 = vld [vmem:[%s0 + $0x18] sm:$0xff]
    %v70 = vld [vmem:[%s0 + $0x20] sm:$0xff]
    %v71 = vld [vmem:[%s0 + $0x28] sm:$0xff]
    %v72 = vld [vmem:[#allocation2] sm:$0xf]
    %v73 = vld [vmem:[#allocation2 + $0x4] sm:$0xf]
    %v74 = vld [vmem:[#allocation2 + $0x8] sm:$0xf]
    %v75 = vld [vmem:[#allocation2 + $0xc] sm:$0xf]
    %v76 = vld [vmem:[#allocation2 + $0x10] sm:$0xf]
    %v77 = vld [vmem:[#allocation2 + $0x14] sm:$0xf]
    %v78 = vld [vmem:[#allocation2 + $0x18] sm:$0xf]
    %v79 = vld [vmem:[#allocation2 + $0x1c] sm:$0xf]
    %v80 = vld [vmem:[#allocation2 + $0x20] sm:$0xf]
    %v81 = vld [vmem:[#allocation2 + $0x24] sm:$0xf]
    %v82 = vld [vmem:[#allocation2 + $0x28] sm:$0xf]
    %v83 = vld [vmem:[#allocation2 + $0x2c] sm:$0xf]
    %v84 = vld [vmem:[#allocation2 + $0x30] sm:$0xf]
    %v85 = vld [vmem:[#allocation2 + $0x34] sm:$0xf]
    %v86 = vld [vmem:[#allocation2 + $0x38] sm:$0xf]
    %v87 = vld [vmem:[#allocation2 + $0x3c] sm:$0xf]
    %v88 = vld [vmem:[#allocation2 + $0x40] sm:$0xf]
    %v89 = vld [vmem:[#allocation2 + $0x44] sm:$0xf]
    %v90 = vld [vmem:[#allocation2 + $0x48] sm:$0xf]
    %v91 = vld [vmem:[#allocation2 + $0x4c] sm:$0xf]
    %v92 = vld [vmem:[#allocation2 + $0x50] sm:$0xf]
    %v93 = vld [vmem:[#allocation2 + $0x54] sm:$0xf]
    %v94 = vld [vmem:[#allocation2 + $0x58] sm:$0xf]
    %v95 = vld [vmem:[#allocation2 + $0x5c] sm:$0xf]
    %v96 = vld [vmem:[#allocation2 + $0x60] sm:$0xf]
    %v97 = vld [vmem:[#allocation2 + $0x64] sm:$0xf]
    %v98 = vld [vmem:[#allocation2 + $0x68] sm:$0xf]
    %v99 = vld [vmem:[#allocation2 + $0x6c] sm:$0xf]
    %v100 = vld [vmem:[#allocation2 + $0x70] sm:$0xf]
    %v101 = vld [vmem:[#allocation2 + $0x74] sm:$0xf]
    %v102 = vld [vmem:[#allocation2 + $0x78] sm:$0xf]
    %v103 = vld [vmem:[#allocation2 + $0x7c] sm:$0xf]
    %v104 = vld [vmem:[#allocation2 + $0x80] sm:$0xf]
    %v105 = vld [vmem:[#allocation2 + $0x84] sm:$0xf]
    %v106 = vld [vmem:[#allocation2 + $0x88] sm:$0xf]
    %v107 = vld [vmem:[#allocation2 + $0x8c] sm:$0xf]
    %v108 = vld [vmem:[#allocation2 + $0x90] sm:$0xf]
    %v109 = vld [vmem:[#allocation2 + $0x94] sm:$0xf]
    %v110 = vld [vmem:[#allocation2 + $0x98] sm:$0xf]
    %v111 = vld [vmem:[#allocation2 + $0x9c] sm:$0xf]
    %v112 = vld [vmem:[#allocation2 + $0xa0] sm:$0xf]
    %v113 = vld [vmem:[#allocation2 + $0xa4] sm:$0xf]
    %v114 = vld [vmem:[#allocation2 + $0xa8] sm:$0xf]
    %v115 = vld [vmem:[#allocation2 + $0xac] sm:$0xf]
    %v116 = vld [vmem:[#allocation2 + $0xb0] sm:$0xf]
    %v117 = vld [vmem:[#allocation2 + $0xb4] sm:$0xf]
    %v118 = vld [vmem:[#allocation2 + $0xb8] sm:$0xf]
    %v119 = vld [vmem:[#allocation2 + $0xbc] sm:$0xf]
    %v120 = vld [vmem:[#allocation2 + $0xc0] sm:$0xf]
    %v121 = vld [vmem:[#allocation2 + $0xc4] sm:$0xf]
    %v122 = vld [vmem:[#allocation2 + $0xc8] sm:$0xf]
    %v123 = vld [vmem:[#allocation2 + $0xcc] sm:$0xf]
    %v124 = vld [vmem:[#allocation2 + $0xd0] sm:$0xf]
    %v125 = vld [vmem:[#allocation2 + $0xd4] sm:$0xf]
    %v126 = vld [vmem:[#allocation2 + $0xd8] sm:$0xf]
    %v127 = vld [vmem:[#allocation2 + $0xdc] sm:$0xf]
    %v128 = vld [vmem:[#allocation2 + $0xe0] sm:$0xf]
    %v129 = vld [vmem:[#allocation2 + $0xe4] sm:$0xf]
    %v130 = vld [vmem:[#allocation2 + $0xe8] sm:$0xf]
    %v131 = vld [vmem:[#allocation2 + $0xec] sm:$0xf]
    %v132 = vld [vmem:[#allocation2 + $0xf0] sm:$0xf]
    %v133 = vld [vmem:[#allocation2 + $0xf4] sm:$0xf]
    %v134 = vld [vmem:[#allocation2 + $0xf8] sm:$0xf]
    %v135 = vld [vmem:[#allocation2 + $0xfc] sm:$0xf]
    %v136 = vld [vmem:[#allocation2 + $0x100] sm:$0xf]
    %v137 = vld [vmem:[#allocation2 + $0x104] sm:$0xf]
    %v138 = vld [vmem:[#allocation2 + $0x108] sm:$0xf]
    %v139 = vld [vmem:[#allocation2 + $0x10c] sm:$0xf]
    %v140 = vld [vmem:[#allocation2 + $0x110] sm:$0xf]
    %v141 = vld [vmem:[#allocation2 + $0x114] sm:$0xf]
    %v142 = vld [vmem:[#allocation2 + $0x118] sm:$0xf]
    %v143 = vld [vmem:[#allocation2 + $0x11c] sm:$0xf]
    %v144 = vld [vmem:[#allocation2 + $0x120] sm:$0xf]
    %v145 = vld [vmem:[#allocation2 + $0x124] sm:$0xf]
    %v146 = vld [vmem:[#allocation2 + $0x128] sm:$0xf]
    %v147 = vld [vmem:[#allocation2 + $0x12c] sm:$0xf]
    %v148 = vld [vmem:[#allocation2 + $0x130] sm:$0xf]
    %v149 = vld [vmem:[#allocation2 + $0x134] sm:$0xf]
    %v150 = vld [vmem:[#allocation2 + $0x138] sm:$0xf]
    %v151 = vld [vmem:[#allocation2 + $0x13c] sm:$0xf]
    %v152 = vld [vmem:[#allocation2 + $0x140] sm:$0xf]
    %v153 = vld [vmem:[#allocation2 + $0x144] sm:$0xf]
    %v154 = vld [vmem:[#allocation2 + $0x148] sm:$0xf]
    %v155 = vld [vmem:[#allocation2 + $0x14c] sm:$0xf]
    %v156 = vld [vmem:[#allocation2 + $0x150] sm:$0xf]
    %v157 = vld [vmem:[#allocation2 + $0x154] sm:$0xf]
    %v158 = vld [vmem:[#allocation2 + $0x158] sm:$0xf]
    %v159 = vld [vmem:[#allocation2 + $0x15c] sm:$0xf]
    %v160 = vld [vmem:[#allocation2 + $0x160] sm:$0xf]
    %v161 = vld [vmem:[#allocation2 + $0x164] sm:$0xf]
    %v162 = vld [vmem:[#allocation2 + $0x168] sm:$0xf]
    %v163 = vld [vmem:[#allocation2 + $0x16c] sm:$0xf]
    %v164 = vld [vmem:[#allocation2 + $0x170] sm:$0xf]
    %v165 = vld [vmem:[#allocation2 + $0x174] sm:$0xf]
    %v166 = vld [vmem:[#allocation2 + $0x178] sm:$0xf]
    %v167 = vld [vmem:[#allocation2 + $0x17c] sm:$0xf]
    %v168 = vld [vmem:[%s1] sm:$0xff]
    %v169 = vld [vmem:[%s1 + $0x8] sm:$0xff]
    %v176 = vunpack.c.l.b16 %v66
    %v177 = vunpack.c.h.b16 %v66
    %v178 = vunpack.c.l.b16 %v67
    %v179 = vunpack.c.h.b16 %v67
    %v180 = vunpack.c.l.b16 %v68
    %v181 = vunpack.c.h.b16 %v68
    %v182 = vunpack.c.l.b16 %v69
    %v183 = vunpack.c.h.b16 %v69
    %v184 = vunpack.c.l.b16 %v70
    %v185 = vunpack.c.h.b16 %v70
    %v186 = vunpack.c.l.b16 %v71
    %v187 = vunpack.c.h.b16 %v71
    %v188 = vpack.c.b16 %v182, %v176
    %v189 = vpack.c.b16 %v183, %v177
    %v190 = vpack.c.b16 %v184, %v178
    %v191 = vpack.c.b16 %v185, %v179
    %v192 = vpack.c.b16 %v186, %v180
    %v193 = vpack.c.b16 %v187, %v181
    %v296 = vunpack.c.l.b16 %v72
    %v297 = vunpack.c.l.b16 %v73
    %v298 = vunpack.c.l.b16 %v74
    %v299 = vunpack.c.l.b16 %v75
    %v300 = vunpack.c.l.b16 %v76
    %v301 = vunpack.c.l.b16 %v77
    %v302 = vunpack.c.l.b16 %v78
    %v303 = vunpack.c.l.b16 %v79
    %v304 = vunpack.c.l.b16 %v80
    %v305 = vunpack.c.l.b16 %v81
    %v306 = vunpack.c.l.b16 %v82
    %v307 = vunpack.c.l.b16 %v83
    %v308 = vunpack.c.l.b16 %v84
    %v309 = vunpack.c.l.b16 %v85
    %v310 = vunpack.c.l.b16 %v86
    %v311 = vunpack.c.l.b16 %v87
    %v312 = vunpack.c.l.b16 %v88
    %v313 = vunpack.c.l.b16 %v89
    %v314 = vunpack.c.l.b16 %v90
    %v315 = vunpack.c.l.b16 %v91
    %v316 = vunpack.c.l.b16 %v92
    %v317 = vunpack.c.l.b16 %v93
    %v318 = vunpack.c.l.b16 %v94
    %v319 = vunpack.c.l.b16 %v95
    %v320 = vunpack.c.l.b16 %v96
    %v321 = vunpack.c.l.b16 %v97
    %v322 = vunpack.c.l.b16 %v98
    %v323 = vunpack.c.l.b16 %v99
    %v324 = vunpack.c.l.b16 %v100
    %v325 = vunpack.c.l.b16 %v101
    %v326 = vunpack.c.l.b16 %v102
    %v327 = vunpack.c.l.b16 %v103
    %v328 = vunpack.c.l.b16 %v104
    %v329 = vunpack.c.l.b16 %v105
    %v330 = vunpack.c.l.b16 %v106
    %v331 = vunpack.c.l.b16 %v107
    %v332 = vunpack.c.l.b16 %v108
    %v333 = vunpack.c.l.b16 %v109
    %v334 = vunpack.c.l.b16 %v110
    %v335 = vunpack.c.l.b16 %v111
    %v336 = vunpack.c.l.b16 %v112
    %v337 = vunpack.c.l.b16 %v113
    %v338 = vunpack.c.l.b16 %v114
    %v339 = vunpack.c.l.b16 %v115
    %v340 = vunpack.c.l.b16 %v116
    %v341 = vunpack.c.l.b16 %v117
    %v342 = vunpack.c.l.b16 %v118
    %v343 = vunpack.c.l.b16 %v119
    %v344 = vunpack.c.l.b16 %v120
    %v345 = vunpack.c.l.b16 %v121
    %v346 = vunpack.c.l.b16 %v122
    %v347 = vunpack.c.l.b16 %v123
    %v348 = vunpack.c.l.b16 %v124
    %v349 = vunpack.c.l.b16 %v125
    %v350 = vunpack.c.l.b16 %v126
    %v351 = vunpack.c.l.b16 %v127
    %v352 = vunpack.c.l.b16 %v128
    %v353 = vunpack.c.l.b16 %v129
    %v354 = vunpack.c.l.b16 %v130
    %v355 = vunpack.c.l.b16 %v131
    %v356 = vunpack.c.l.b16 %v132
    %v357 = vunpack.c.l.b16 %v133
    %v358 = vunpack.c.l.b16 %v134
    %v359 = vunpack.c.l.b16 %v135
    %v360 = vunpack.c.l.b16 %v136
    %v361 = vunpack.c.l.b16 %v137
    %v362 = vunpack.c.l.b16 %v138
    %v363 = vunpack.c.l.b16 %v139
    %v364 = vunpack.c.l.b16 %v140
    %v365 = vunpack.c.l.b16 %v141
    %v366 = vunpack.c.l.b16 %v142
    %v367 = vunpack.c.l.b16 %v143
    %v368 = vunpack.c.l.b16 %v144
    %v369 = vunpack.c.l.b16 %v145
    %v370 = vunpack.c.l.b16 %v146
    %v371 = vunpack.c.l.b16 %v147
    %v372 = vunpack.c.l.b16 %v148
    %v373 = vunpack.c.l.b16 %v149
    %v374 = vunpack.c.l.b16 %v150
    %v375 = vunpack.c.l.b16 %v151
    %v376 = vunpack.c.l.b16 %v152
    %v377 = vunpack.c.l.b16 %v153
    %v378 = vunpack.c.l.b16 %v154
    %v379 = vunpack.c.l.b16 %v155
    %v380 = vunpack.c.l.b16 %v156
    %v381 = vunpack.c.l.b16 %v157
    %v382 = vunpack.c.l.b16 %v158
    %v383 = vunpack.c.l.b16 %v159
    %v384 = vunpack.c.l.b16 %v160
    %v385 = vunpack.c.l.b16 %v161
    %v386 = vunpack.c.l.b16 %v162
    %v387 = vunpack.c.l.b16 %v163
    %v388 = vunpack.c.l.b16 %v164
    %v389 = vunpack.c.l.b16 %v165
    %v390 = vunpack.c.l.b16 %v166
    %v391 = vunpack.c.l.b16 %v167
    %v392 = vpack.c.b16 %v297, %v296
    %v393 = vpack.c.b16 %v299, %v298
    %v394 = vpack.c.b16 %v301, %v300
    %v395 = vpack.c.b16 %v303, %v302
    %v396 = vpack.c.b16 %v305, %v304
    %v397 = vpack.c.b16 %v307, %v306
    %v398 = vpack.c.b16 %v309, %v308
    %v399 = vpack.c.b16 %v311, %v310
    %v400 = vpack.c.b16 %v313, %v312
    %v401 = vpack.c.b16 %v315, %v314
    %v402 = vpack.c.b16 %v317, %v316
    %v403 = vpack.c.b16 %v319, %v318
    %v404 = vpack.c.b16 %v321, %v320
    %v405 = vpack.c.b16 %v323, %v322
    %v406 = vpack.c.b16 %v325, %v324
    %v407 = vpack.c.b16 %v327, %v326
    %v408 = vpack.c.b16 %v329, %v328
    %v409 = vpack.c.b16 %v331, %v330
    %v410 = vpack.c.b16 %v333, %v332
    %v411 = vpack.c.b16 %v335, %v334
    %v412 = vpack.c.b16 %v337, %v336
    %v413 = vpack.c.b16 %v339, %v338
    %v414 = vpack.c.b16 %v341, %v340
    %v415 = vpack.c.b16 %v343, %v342
    %v416 = vpack.c.b16 %v345, %v344
    %v417 = vpack.c.b16 %v347, %v346
    %v418 = vpack.c.b16 %v349, %v348
    %v419 = vpack.c.b16 %v351, %v350
    %v420 = vpack.c.b16 %v353, %v352
    %v421 = vpack.c.b16 %v355, %v354
    %v422 = vpack.c.b16 %v357, %v356
    %v423 = vpack.c.b16 %v359, %v358
    %v424 = vpack.c.b16 %v361, %v360
    %v425 = vpack.c.b16 %v363, %v362
    %v426 = vpack.c.b16 %v365, %v364
    %v427 = vpack.c.b16 %v367, %v366
    %v428 = vpack.c.b16 %v369, %v368
    %v429 = vpack.c.b16 %v371, %v370
    %v430 = vpack.c.b16 %v373, %v372
    %v431 = vpack.c.b16 %v375, %v374
    %v432 = vpack.c.b16 %v377, %v376
    %v433 = vpack.c.b16 %v379, %v378
    %v434 = vpack.c.b16 %v381, %v380
    %v435 = vpack.c.b16 %v383, %v382
    %v436 = vpack.c.b16 %v385, %v384
    %v437 = vpack.c.b16 %v387, %v386
    %v438 = vpack.c.b16 %v389, %v388
    %v439 = vpack.c.b16 %v391, %v390
    %488 = vmatpush.bf16.msra.mxu0 %v399
    %489 = vmatpush.bf16.msra.mxu0 %v398
    %490 = vmatpush.bf16.msra.mxu0 %v397
    %491 = vmatpush.bf16.msra.mxu0 %v396
    %492 = vmatpush.bf16.msra.mxu0 %v395
    %493 = vmatpush.bf16.msra.mxu0 %v394
    %494 = vmatpush.bf16.msra.mxu0 %v393
    %495 = vmatpush.bf16.msra.mxu0 %v392
    %496 = vmatmul.bf16.gmra.mxu0 %v188
    %v497 = vpop.f32.mrf.mxu0
    %v498 = vadd.f32 %v168, %v497
    %v499 = vpop.f32.mrf.mxu0
    %v500 = vadd.f32 %v169, %v499
    %501 = vdwg.mxu0
    %502 = vmatpush.bf16.msra.mxu0 %v407
    %503 = vmatpush.bf16.msra.mxu0 %v406
    %504 = vmatpush.bf16.msra.mxu0 %v405
    %505 = vmatpush.bf16.msra.mxu0 %v404
    %506 = vmatpush.bf16.msra.mxu0 %v403
    %507 = vmatpush.bf16.msra.mxu0 %v402
    %508 = vmatpush.bf16.msra.mxu0 %v401
    %509 = vmatpush.bf16.msra.mxu0 %v400
    %510 = vmatmul.bf16.gmra.mxu0 %v189
    %v511 = vpop.f32.mrf.mxu0
    %v512 = vadd.f32 %v498, %v511
    %v513 = vpop.f32.mrf.mxu0
    %v514 = vadd.f32 %v500, %v513
    %515 = vdwg.mxu0
    %516 = vmatpush.bf16.msra.mxu0 %v415
    %517 = vmatpush.bf16.msra.mxu0 %v414
    %518 = vmatpush.bf16.msra.mxu0 %v413
    %519 = vmatpush.bf16.msra.mxu0 %v412
    %520 = vmatpush.bf16.msra.mxu0 %v411
    %521 = vmatpush.bf16.msra.mxu0 %v410
    %522 = vmatpush.bf16.msra.mxu0 %v409
    %523 = vmatpush.bf16.msra.mxu0 %v408
    %524 = vmatmul.bf16.gmra.mxu0 %v190
    %v525 = vpop.f32.mrf.mxu0
    %v526 = vadd.f32 %v512, %v525
    %v527 = vpop.f32.mrf.mxu0
    %v528 = vadd.f32 %v514, %v527
    %529 = vdwg.mxu0
    %530 = vmatpush.bf16.msra.mxu0 %v423
    %531 = vmatpush.bf16.msra.mxu0 %v422
    %532 = vmatpush.bf16.msra.mxu0 %v421
    %533 = vmatpush.bf16.msra.mxu0 %v420
    %534 = vmatpush.bf16.msra.mxu0 %v419
    %535 = vmatpush.bf16.msra.mxu0 %v418
    %536 = vmatpush.bf16.msra.mxu0 %v417
    %537 = vmatpush.bf16.msra.mxu0 %v416
    %538 = vmatmul.bf16.gmra.mxu0 %v191
    %v539 = vpop.f32.mrf.mxu0
    %v540 = vadd.f32 %v526, %v539
    %v541 = vpop.f32.mrf.mxu0
    %v542 = vadd.f32 %v528, %v541
    %543 = vdwg.mxu0
    %544 = vmatpush.bf16.msra.mxu0 %v431
    %545 = vmatpush.bf16.msra.mxu0 %v430
    %546 = vmatpush.bf16.msra.mxu0 %v429
    %547 = vmatpush.bf16.msra.mxu0 %v428
    %548 = vmatpush.bf16.msra.mxu0 %v427
    %549 = vmatpush.bf16.msra.mxu0 %v426
    %550 = vmatpush.bf16.msra.mxu0 %v425
    %551 = vmatpush.bf16.msra.mxu0 %v424
    %552 = vmatmul.bf16.gmra.mxu0 %v192
    %v553 = vpop.f32.mrf.mxu0
    %v554 = vadd.f32 %v540, %v553
    %v555 = vpop.f32.mrf.mxu0
    %v556 = vadd.f32 %v542, %v555
    %557 = vdwg.mxu0
    %558 = vmatpush.bf16.msra.mxu0 %v439
    %559 = vmatpush.bf16.msra.mxu0 %v438
    %560 = vmatpush.bf16.msra.mxu0 %v437
    %561 = vmatpush.bf16.msra.mxu0 %v436
    %562 = vmatpush.bf16.msra.mxu0 %v435
    %563 = vmatpush.bf16.msra.mxu0 %v434
    %564 = vmatpush.bf16.msra.mxu0 %v433
    %565 = vmatpush.bf16.msra.mxu0 %v432
    %566 = vmatmul.bf16.gmra.mxu0 %v193
    %v567 = vpop.f32.mrf.mxu0
    %v568 = vadd.f32 %v554, %v567
    %v569 = vpop.f32.mrf.mxu0
    %v570 = vadd.f32 %v556, %v569
    %571 = vdwg.mxu0
    %v572 = vlaneseq
    %v573 = vand.u32 %v572, 127
    %vm574 = vcmp.lt.s32.totalorder %v573, 5
    %v575 = vsel %vm574, 0.0, -1e+30
    %v576 = vld [vmem:[%s7] sm:$0xff]
    %v577 = vld [vmem:[%s7 + $0x8] sm:$0xff]
    %v578 = vld [vmem:[%s7 + $0x10] sm:$0xff]
    %v579 = vld [vmem:[%s7 + $0x18] sm:$0xff]
    %580 = vadd.xlane.f32.xlu0 %v568
    %v581 = vpop.xlane.xlu0 %580
    %582 = vadd.xlane.f32.xlu0 %v570
    %v583 = vpop.xlane.xlu0 %582
    %v584 = vrcp.pop 128.0
    %v585 = vmul.f32 128.0, %v584
    %v586 = vsub.f32 1.0, %v585
    %v587 = vmul.f32 %v584, %v586
    %v588 = vadd.f32 %v584, %v587
    %vm589 = vweird.f32 %v584
    %v590 = vsel %vm589, %v584, %v588
    %v591 = vmul.f32 %v581, %v590
    %v592 = vmul.f32 %v583, %v590
    %v593 = vsub.f32 %v568, %v591
    %v594 = vsub.f32 %v570, %v592
    %v595 = vmul.f32 %v593, %v593
    %v596 = vmul.f32 %v594, %v594
    %597 = vadd.xlane.f32.xlu0 %v595
    %v598 = vpop.xlane.xlu0 %597
    %599 = vadd.xlane.f32.xlu0 %v596
    %v600 = vpop.xlane.xlu0 %599
    %v601 = vmul.f32 %v598, %v590
    %v602 = vmul.f32 %v600, %v590
    %v603 = vadd.f32 %v601, 1e-06
    %v604 = vadd.f32 %v602, 1e-06
    %v605 = vrsqrt.pop %v603
    %v606 = vmul.f32 %v605, %v603
    %v607 = vmul.f32 %v606, %v605
    %v608 = vmul.f32 0.5, %v607
    %v609 = vsub.f32 1.5, %v608
    %v610 = vmul.f32 %v605, %v609
    %vm611 = vweird.f32 %v603
    %vm612 = vweird.f32 %v605
    %vm613 = vmor %vm611, %vm612
    %v614 = vsel %vm613, %v605, %v610
    %v615 = vrsqrt.pop %v604
    %v616 = vmul.f32 %v615, %v604
    %v617 = vmul.f32 %v616, %v615
    %v618 = vmul.f32 0.5, %v617
    %v619 = vsub.f32 1.5, %v618
    %v620 = vmul.f32 %v615, %v619
    %vm621 = vweird.f32 %v604
    %vm622 = vweird.f32 %v615
    %vm623 = vmor %vm621, %vm622
    %v624 = vsel %vm623, %v615, %v620
    %v625 = vmul.f32 %v593, %v614
    %v626 = vmul.f32 %v594, %v624
    %v627 = vperm.slane %v576, 0
    %v628 = vmul.f32 %v625, %v627
    %v629 = vmul.f32 %v626, %v627
    %v630 = vperm.slane %v576, 1
    %v631 = vadd.f32 %v628, %v630
    %v632 = vadd.f32 %v629, %v630
    %v633 = vpack.c.bf16 %v632, %v631
    %v634 = vld [vmem:[#allocation5] sm:$0xff]
    %v635 = vld [vmem:[#allocation5 + $0x8] sm:$0xf]
    %v636 = vld [vmem:[#allocation5 + $0xc] sm:$0xff]
    %v637 = vld [vmem:[#allocation5 + $0x14] sm:$0xf]
    %v638 = vld [vmem:[#allocation5 + $0x18] sm:$0xff]
    %v639 = vld [vmem:[#allocation5 + $0x20] sm:$0xf]
    %v640 = vld [vmem:[#allocation5 + $0x24] sm:$0xff]
    %v641 = vld [vmem:[#allocation5 + $0x2c] sm:$0xf]
    %v642 = vld [vmem:[#allocation5 + $0x30] sm:$0xff]
    %v643 = vld [vmem:[#allocation5 + $0x38] sm:$0xf]
    %v644 = vld [vmem:[#allocation5 + $0x3c] sm:$0xff]
    %v645 = vld [vmem:[#allocation5 + $0x44] sm:$0xf]
    %v646 = vld [vmem:[#allocation5 + $0x48] sm:$0xff]
    %v647 = vld [vmem:[#allocation5 + $0x50] sm:$0xf]
    %v648 = vld [vmem:[#allocation5 + $0x54] sm:$0xff]
    %v649 = vld [vmem:[#allocation5 + $0x5c] sm:$0xf]
    %v650 = vld [vmem:[#allocation5 + $0x60] sm:$0xff]
    %v651 = vld [vmem:[#allocation5 + $0x68] sm:$0xf]
    %v652 = vld [vmem:[#allocation5 + $0x6c] sm:$0xff]
    %v653 = vld [vmem:[#allocation5 + $0x74] sm:$0xf]
    %v654 = vld [vmem:[#allocation5 + $0x78] sm:$0xff]
    %v655 = vld [vmem:[#allocation5 + $0x80] sm:$0xf]
    %v656 = vld [vmem:[#allocation5 + $0x84] sm:$0xff]
    %v657 = vld [vmem:[#allocation5 + $0x8c] sm:$0xf]
    %v658 = vld [vmem:[#allocation5 + $0x90] sm:$0xff]
    %v659 = vld [vmem:[#allocation5 + $0x98] sm:$0xf]
    %v660 = vld [vmem:[#allocation5 + $0x9c] sm:$0xff]
    %v661 = vld [vmem:[#allocation5 + $0xa4] sm:$0xf]
    %v662 = vld [vmem:[#allocation5 + $0xa8] sm:$0xff]
    %v663 = vld [vmem:[#allocation5 + $0xb0] sm:$0xf]
    %v664 = vld [vmem:[#allocation5 + $0xb4] sm:$0xff]
    %v665 = vld [vmem:[#allocation5 + $0xbc] sm:$0xf]
    %v666 = vperm.slane %v576, 6
    %v667 = vperm.slane %v577, 6
    %v668 = vperm.slane %v578, 6
    %v701 = vunpack.c.l.b16 %v634
    %v702 = vunpack.c.h.b16 %v634
    %v703 = vunpack.c.l.b16 %v635
    %v704 = vunpack.c.l.b16 %v636
    %v705 = vunpack.c.h.b16 %v636
    %v706 = vunpack.c.l.b16 %v637
    %v707 = vunpack.c.l.b16 %v638
    %v708 = vunpack.c.h.b16 %v638
    %v709 = vunpack.c.l.b16 %v639
    %v710 = vunpack.c.l.b16 %v640
    %v711 = vunpack.c.h.b16 %v640
    %v712 = vunpack.c.l.b16 %v641
    %v713 = vunpack.c.l.b16 %v642
    %v714 = vunpack.c.h.b16 %v642
    %v715 = vunpack.c.l.b16 %v643
    %v716 = vunpack.c.l.b16 %v644
    %v717 = vunpack.c.h.b16 %v644
    %v718 = vunpack.c.l.b16 %v645
    %v719 = vunpack.c.l.b16 %v646
    %v720 = vunpack.c.h.b16 %v646
    %v721 = vunpack.c.l.b16 %v647
    %v722 = vunpack.c.l.b16 %v648
    %v723 = vunpack.c.h.b16 %v648
    %v724 = vunpack.c.l.b16 %v649
    %v725 = vunpack.c.l.b16 %v650
    %v726 = vunpack.c.h.b16 %v650
    %v727 = vunpack.c.l.b16 %v651
    %v728 = vunpack.c.l.b16 %v652
    %v729 = vunpack.c.h.b16 %v652
    %v730 = vunpack.c.l.b16 %v653
    %v731 = vunpack.c.l.b16 %v654
    %v732 = vunpack.c.h.b16 %v654
    %v733 = vunpack.c.l.b16 %v655
    %v734 = vunpack.c.l.b16 %v656
    %v735 = vunpack.c.h.b16 %v656
    %v736 = vunpack.c.l.b16 %v657
    %v737 = vunpack.c.l.b16 %v658
    %v738 = vunpack.c.h.b16 %v658
    %v739 = vunpack.c.l.b16 %v659
    %v740 = vunpack.c.l.b16 %v660
    %v741 = vunpack.c.h.b16 %v660
    %v742 = vunpack.c.l.b16 %v661
    %v743 = vunpack.c.l.b16 %v662
    %v744 = vunpack.c.h.b16 %v662
    %v745 = vunpack.c.l.b16 %v663
    %v746 = vunpack.c.l.b16 %v664
    %v747 = vunpack.c.h.b16 %v664
    %v748 = vunpack.c.l.b16 %v665
    %v749 = vpack.c.b16 %v704, %v701
    %v750 = vpack.c.b16 %v705, %v702
    %v751 = vpack.c.b16 %v706, %v703
    %v752 = vpack.c.b16 %v710, %v707
    %v753 = vpack.c.b16 %v711, %v708
    %v754 = vpack.c.b16 %v712, %v709
    %v755 = vpack.c.b16 %v716, %v713
    %v756 = vpack.c.b16 %v717, %v714
    %v757 = vpack.c.b16 %v718, %v715
    %v758 = vpack.c.b16 %v722, %v719
    %v759 = vpack.c.b16 %v723, %v720
    %v760 = vpack.c.b16 %v724, %v721
    %v761 = vpack.c.b16 %v728, %v725
    %v762 = vpack.c.b16 %v729, %v726
    %v763 = vpack.c.b16 %v730, %v727
    %v764 = vpack.c.b16 %v734, %v731
    %v765 = vpack.c.b16 %v735, %v732
    %v766 = vpack.c.b16 %v736, %v733
    %v767 = vpack.c.b16 %v740, %v737
    %v768 = vpack.c.b16 %v741, %v738
    %v769 = vpack.c.b16 %v742, %v739
    %v770 = vpack.c.b16 %v746, %v743
    %v771 = vpack.c.b16 %v747, %v744
    %v772 = vpack.c.b16 %v748, %v745
    %797 = vmatpush.bf16.msra.mxu0 %v770
    %798 = vmatpush.bf16.msra.mxu0 %v767
    %799 = vmatpush.bf16.msra.mxu0 %v764
    %800 = vmatpush.bf16.msra.mxu0 %v761
    %801 = vmatpush.bf16.msra.mxu0 %v758
    %802 = vmatpush.bf16.msra.mxu0 %v755
    %803 = vmatpush.bf16.msra.mxu0 %v752
    %804 = vmatpush.bf16.msra.mxu0 %v749
    %805 = vmatmul.bf16.gmra.mxu0 %v633
    %v806 = vpop.f32.mrf.mxu0
    %v807 = vadd.f32 %v666, %v806
    %v808 = vpop.f32.mrf.mxu0
    %v809 = vadd.f32 %v666, %v808
    %810 = vdwg.mxu0
    %811 = vmatpush.bf16.msra.mxu0 %v771
    %812 = vmatpush.bf16.msra.mxu0 %v768
    %813 = vmatpush.bf16.msra.mxu0 %v765
    %814 = vmatpush.bf16.msra.mxu0 %v762
    %815 = vmatpush.bf16.msra.mxu0 %v759
    %816 = vmatpush.bf16.msra.mxu0 %v756
    %817 = vmatpush.bf16.msra.mxu0 %v753
    %818 = vmatpush.bf16.msra.mxu0 %v750
    %819 = vmatmul.bf16.gmra.mxu0 %v633
    %v820 = vpop.f32.mrf.mxu0
    %v821 = vadd.f32 %v667, %v820
    %v822 = vpop.f32.mrf.mxu0
    %v823 = vadd.f32 %v667, %v822
    %824 = vdwg.mxu0
    %825 = vmatpush.bf16.msra.mxu0 %v772
    %826 = vmatpush.bf16.msra.mxu0 %v769
    %827 = vmatpush.bf16.msra.mxu0 %v766
    %828 = vmatpush.bf16.msra.mxu0 %v763
    %829 = vmatpush.bf16.msra.mxu0 %v760
    %830 = vmatpush.bf16.msra.mxu0 %v757
    %831 = vmatpush.bf16.msra.mxu0 %v754
    %832 = vmatpush.bf16.msra.mxu0 %v751
    %833 = vmatmul.bf16.gmra.mxu0 %v633
    %v834 = vpop.f32.mrf.mxu0
    %v835 = vadd.f32 %v668, %v834
    %v836 = vpop.f32.mrf.mxu0
    %v837 = vadd.f32 %v668, %v836
    %838 = vdwg.mxu0
    %v839 = vmul.f32 %v807, 0.17677669
    %v840 = vmul.f32 %v809, 0.17677669
    %v841 = vpack.c.bf16 %v839, %v839
    %v842 = vpack.c.bf16 %v840, %v840
    %v843 = vpack.c.bf16 %v835, %v835
    %v844 = vpack.c.bf16 %v837, %v837
    %845 = vxpose.xlu0.b32.start [1/16] %v821, 128
    %846 = vxpose.xlu0.b32.cont [2/16] %v823, 128
    %847 = vxpose.xlu0.b32.cont [3/16] 0.0, 128
    %848 = vxpose.xlu0.b32.cont [4/16] 0.0, 128
    %849 = vxpose.xlu0.b32.cont [5/16] 0.0, 128
    %850 = vxpose.xlu0.b32.cont [6/16] 0.0, 128
    %851 = vxpose.xlu0.b32.cont [7/16] 0.0, 128
    %852 = vxpose.xlu0.b32.cont [8/16] 0.0, 128
    %853 = vxpose.xlu0.b32.cont [9/16] 0.0, 128
    %854 = vxpose.xlu0.b32.cont [10/16] 0.0, 128
    %855 = vxpose.xlu0.b32.cont [11/16] 0.0, 128
    %856 = vxpose.xlu0.b32.cont [12/16] 0.0, 128
    %857 = vxpose.xlu0.b32.cont [13/16] 0.0, 128
    %858 = vxpose.xlu0.b32.cont [14/16] 0.0, 128
    %859 = vxpose.xlu0.b32.cont [15/16] 0.0, 128
    %860 = vxpose.xlu0.b32.end [16/16] 0.0, 128
    %v861 = vpop.trf.xlu0
    %v862 = vpop.trf.xlu0
    %v863 = vpop.trf.xlu0
    %v864 = vpop.trf.xlu0
    %v865 = vpop.trf.xlu0
    %v866 = vpop.trf.xlu0
    %v867 = vpop.trf.xlu0
    %v868 = vpop.trf.xlu0
    %v869 = vpop.trf.xlu0
    %v870 = vpop.trf.xlu0
    %v871 = vpop.trf.xlu0
    %v872 = vpop.trf.xlu0
    %v873 = vpop.trf.xlu0
    %v874 = vpop.trf.xlu0
    %v875 = vpop.trf.xlu0
    %v876 = vpop.trf.xlu0
    %v877 = vpack.c.bf16 %v861, %v861
    %v878 = vpack.c.bf16 %v862, %v862
    %v879 = vpack.c.bf16 %v863, %v863
    %v880 = vpack.c.bf16 %v864, %v864
    %v881 = vpack.c.bf16 %v865, %v865
    %v882 = vpack.c.bf16 %v866, %v866
    %v883 = vpack.c.bf16 %v867, %v867
    %v884 = vpack.c.bf16 %v868, %v868
    %v885 = vpack.c.bf16 %v869, %v869
    %v886 = vpack.c.bf16 %v870, %v870
    %v887 = vpack.c.bf16 %v871, %v871
    %v888 = vpack.c.bf16 %v872, %v872
    %v889 = vpack.c.bf16 %v873, %v873
    %v890 = vpack.c.bf16 %v874, %v874
    %v891 = vpack.c.bf16 %v875, %v875
    %v892 = vpack.c.bf16 %v876, %v876
    %v897 = vunpack.c.l.b16 %v877
    %v898 = vunpack.c.l.b16 %v878
    %v899 = vunpack.c.l.b16 %v879
    %v900 = vunpack.c.l.b16 %v880
    %v901 = vpack.c.b16 %v898, %v897
    %v902 = vpack.c.b16 %v900, %v899
    %vm905 = vcmask 261120
    %v907 = vsel %vm905, %v841, 0
    %909 = vmatpush.bf16.msra.mxu0 0
    %910 = vmatpush.bf16.msra.mxu0 0
    %911 = vmatpush.bf16.msra.mxu0 0
    %912 = vmatpush.bf16.msra.mxu0 0
    %913 = vmatpush.bf16.msra.mxu0 0
    %914 = vmatpush.bf16.msra.mxu0 0
    %915 = vmatpush.bf16.msra.mxu0 %v902
    %916 = vmatpush.bf16.msra.mxu0 %v901
    %917 = vmatmul.bf16.gmra.mxu0 %v907
    %v918 = vpop.f32.mrf.mxu0
    %v919 = vadd.f32 0.0, %v918
    %v920 = vpop.f32.mrf.mxu0
    %921 = vdwg.mxu0
    %v923 = vunpack.c.l.b16 %v841
    %v924 = vpack.c.b16 %v923, %v923
    %925 = vrot.lane.b32.xlu0 %v924, 96
    %v926 = vpop.permute.xlu0 %925
    %v931 = vunpack.c.l.b16 %v881
    %v932 = vunpack.c.l.b16 %v882
    %v933 = vunpack.c.l.b16 %v883
    %v934 = vunpack.c.l.b16 %v884
    %v935 = vpack.c.b16 %v932, %v931
    %v936 = vpack.c.b16 %v934, %v933
    %v940 = vsel %vm905, %v926, 0
    %942 = vmatpush.bf16.msra.mxu0 0
    %943 = vmatpush.bf16.msra.mxu0 0
    %944 = vmatpush.bf16.msra.mxu0 0
    %945 = vmatpush.bf16.msra.mxu0 0
    %946 = vmatpush.bf16.msra.mxu0 0
    %947 = vmatpush.bf16.msra.mxu0 0
    %948 = vmatpush.bf16.msra.mxu0 %v936
    %949 = vmatpush.bf16.msra.mxu0 %v935
    %950 = vmatmul.bf16.gmra.mxu0 %v940
    %v951 = vpop.f32.mrf.mxu0
    %v952 = vadd.f32 0.0, %v951
    %v953 = vpop.f32.mrf.mxu0
    %954 = vdwg.mxu0
    %955 = vrot.lane.b32.xlu0 %v924, 64
    %v956 = vpop.permute.xlu0 %955
    %v961 = vunpack.c.l.b16 %v885
    %v962 = vunpack.c.l.b16 %v886
    %v963 = vunpack.c.l.b16 %v887
    %v964 = vunpack.c.l.b16 %v888
    %v965 = vpack.c.b16 %v962, %v961
    %v966 = vpack.c.b16 %v964, %v963
    %v970 = vsel %vm905, %v956, 0
    %972 = vmatpush.bf16.msra.mxu0 0
    %973 = vmatpush.bf16.msra.mxu0 0
    %974 = vmatpush.bf16.msra.mxu0 0
    %975 = vmatpush.bf16.msra.mxu0 0
    %976 = vmatpush.bf16.msra.mxu0 0
    %977 = vmatpush.bf16.msra.mxu0 0
    %978 = vmatpush.bf16.msra.mxu0 %v966
    %979 = vmatpush.bf16.msra.mxu0 %v965
    %980 = vmatmul.bf16.gmra.mxu0 %v970
    %v981 = vpop.f32.mrf.mxu0
    %v982 = vadd.f32 0.0, %v981
    %v983 = vpop.f32.mrf.mxu0
    %984 = vdwg.mxu0
    %985 = vrot.lane.b32.xlu0 %v924, 32
    %v986 = vpop.permute.xlu0 %985
    %v991 = vunpack.c.l.b16 %v889
    %v992 = vunpack.c.l.b16 %v890
    %v993 = vunpack.c.l.b16 %v891
    %v994 = vunpack.c.l.b16 %v892
    %v995 = vpack.c.b16 %v992, %v991
    %v996 = vpack.c.b16 %v994, %v993
    %v1000 = vsel %vm905, %v986, 0
    %1002 = vmatpush.bf16.msra.mxu0 0
    %1003 = vmatpush.bf16.msra.mxu0 0
    %1004 = vmatpush.bf16.msra.mxu0 0
    %1005 = vmatpush.bf16.msra.mxu0 0
    %1006 = vmatpush.bf16.msra.mxu0 0
    %1007 = vmatpush.bf16.msra.mxu0 0
    %1008 = vmatpush.bf16.msra.mxu0 %v996
    %1009 = vmatpush.bf16.msra.mxu0 %v995
    %1010 = vmatmul.bf16.gmra.mxu0 %v1000
    %v1011 = vpop.f32.mrf.mxu0
    %v1012 = vadd.f32 0.0, %v1011
    %v1013 = vpop.f32.mrf.mxu0
    %1014 = vdwg.mxu0
    %1015 = vrot.lane.b32.xlu0 %v901, 120
    %v1016 = vpop.permute.xlu0 %1015
    %1017 = vrot.lane.b32.xlu0 %v902, 120
    %v1018 = vpop.permute.xlu0 %1017
    %v1022 = vsel %vm905, %v842, 0
    %1024 = vmatpush.bf16.msra.mxu0 0
    %1025 = vmatpush.bf16.msra.mxu0 0
    %1026 = vmatpush.bf16.msra.mxu0 0
    %1027 = vmatpush.bf16.msra.mxu0 0
    %1028 = vmatpush.bf16.msra.mxu0 0
    %1029 = vmatpush.bf16.msra.mxu0 0
    %1030 = vmatpush.bf16.msra.mxu0 %v1018
    %1031 = vmatpush.bf16.msra.mxu0 %v1016
    %1032 = vmatmul.bf16.gmra.mxu0 %v1022
    %v1033 = vpop.f32.mrf.mxu0
    %v1034 = vadd.f32 0.0, %v1033
    %v1035 = vpop.f32.mrf.mxu0
    %1036 = vdwg.mxu0
    %v1038 = vunpack.c.l.b16 %v842
    %v1039 = vpack.c.b16 %v1038, %v1038
    %1040 = vrot.lane.b32.xlu0 %v1039, 96
    %v1041 = vpop.permute.xlu0 %1040
    %1042 = vrot.lane.b32.xlu0 %v935, 120
    %v1043 = vpop.permute.xlu0 %1042
    %1044 = vrot.lane.b32.xlu0 %v936, 120
    %v1045 = vpop.permute.xlu0 %1044
    %v1049 = vsel %vm905, %v1041, 0
    %1051 = vmatpush.bf16.msra.mxu0 0
    %1052 = vmatpush.bf16.msra.mxu0 0
    %1053 = vmatpush.bf16.msra.mxu0 0
    %1054 = vmatpush.bf16.msra.mxu0 0
    %1055 = vmatpush.bf16.msra.mxu0 0
    %1056 = vmatpush.bf16.msra.mxu0 0
    %1057 = vmatpush.bf16.msra.mxu0 %v1045
    %1058 = vmatpush.bf16.msra.mxu0 %v1043
    %1059 = vmatmul.bf16.gmra.mxu0 %v1049
    %v1060 = vpop.f32.mrf.mxu0
    %v1061 = vadd.f32 0.0, %v1060
    %v1062 = vpop.f32.mrf.mxu0
    %1063 = vdwg.mxu0
    %1064 = vrot.lane.b32.xlu0 %v1039, 64
    %v1065 = vpop.permute.xlu0 %1064
    %1066 = vrot.lane.b32.xlu0 %v965, 120
    %v1067 = vpop.permute.xlu0 %1066
    %1068 = vrot.lane.b32.xlu0 %v966, 120
    %v1069 = vpop.permute.xlu0 %1068
    %v1073 = vsel %vm905, %v1065, 0
    %1075 = vmatpush.bf16.msra.mxu0 0
    %1076 = vmatpush.bf16.msra.mxu0 0
    %1077 = vmatpush.bf16.msra.mxu0 0
    %1078 = vmatpush.bf16.msra.mxu0 0
    %1079 = vmatpush.bf16.msra.mxu0 0
    %1080 = vmatpush.bf16.msra.mxu0 0
    %1081 = vmatpush.bf16.msra.mxu0 %v1069
    %1082 = vmatpush.bf16.msra.mxu0 %v1067
    %1083 = vmatmul.bf16.gmra.mxu0 %v1073
    %v1084 = vpop.f32.mrf.mxu0
    %v1085 = vadd.f32 0.0, %v1084
    %v1086 = vpop.f32.mrf.mxu0
    %1087 = vdwg.mxu0
    %1088 = vrot.lane.b32.xlu0 %v1039, 32
    %v1089 = vpop.permute.xlu0 %1088
    %1090 = vrot.lane.b32.xlu0 %v995, 120
    %v1091 = vpop.permute.xlu0 %1090
    %1092 = vrot.lane.b32.xlu0 %v996, 120
    %v1093 = vpop.permute.xlu0 %1092
    %v1097 = vsel %vm905, %v1089, 0
    %1099 = vmatpush.bf16.msra.mxu0 0
    %1100 = vmatpush.bf16.msra.mxu0 0
    %1101 = vmatpush.bf16.msra.mxu0 0
    %1102 = vmatpush.bf16.msra.mxu0 0
    %1103 = vmatpush.bf16.msra.mxu0 0
    %1104 = vmatpush.bf16.msra.mxu0 0
    %1105 = vmatpush.bf16.msra.mxu0 %v1093
    %1106 = vmatpush.bf16.msra.mxu0 %v1091
    %1107 = vmatmul.bf16.gmra.mxu0 %v1097
    %v1108 = vpop.f32.mrf.mxu0
    %v1109 = vadd.f32 0.0, %v1108
    %v1110 = vpop.f32.mrf.mxu0
    %1111 = vdwg.mxu0
    %v1112 = vadd.f32 %v919, %v575
    %v1113 = vadd.f32 %v952, %v575
    %v1114 = vadd.f32 %v982, %v575
    %v1115 = vadd.f32 %v1012, %v575
    %v1116 = vadd.f32 %v1034, %v575
    %v1117 = vadd.f32 %v1061, %v575
    %v1118 = vadd.f32 %v1085, %v575
    %v1119 = vadd.f32 %v1109, %v575
    %vm1120 = vcmask 64512
    %v1121 = vsel %vm1120, %v1112, -inf
    %1122 = vmax.xlane.f32.xlu0 %v1121
    %v1123 = vpop.xlane.xlu0 %1122
    %v1124 = vsel %vm1120, %v1113, -inf
    %1125 = vmax.xlane.f32.xlu0 %v1124
    %v1126 = vpop.xlane.xlu0 %1125
    %v1127 = vsel %vm1120, %v1114, -inf
    %1128 = vmax.xlane.f32.xlu0 %v1127
    %v1129 = vpop.xlane.xlu0 %1128
    %v1130 = vsel %vm1120, %v1115, -inf
    %1131 = vmax.xlane.f32.xlu0 %v1130
    %v1132 = vpop.xlane.xlu0 %1131
    %v1133 = vsel %vm1120, %v1116, -inf
    %1134 = vmax.xlane.f32.xlu0 %v1133
    %v1135 = vpop.xlane.xlu0 %1134
    %v1136 = vsel %vm1120, %v1117, -inf
    %1137 = vmax.xlane.f32.xlu0 %v1136
    %v1138 = vpop.xlane.xlu0 %1137
    %v1139 = vsel %vm1120, %v1118, -inf
    %1140 = vmax.xlane.f32.xlu0 %v1139
    %v1141 = vpop.xlane.xlu0 %1140
    %v1142 = vsel %vm1120, %v1119, -inf
    %1143 = vmax.xlane.f32.xlu0 %v1142
    %v1144 = vpop.xlane.xlu0 %1143
    %v1145 = vsub.f32 %v1112, %v1123
    %v1146 = vsub.f32 %v1113, %v1126
    %v1147 = vsub.f32 %v1114, %v1129
    %v1148 = vsub.f32 %v1115, %v1132
    %v1149 = vsub.f32 %v1116, %v1135
    %v1150 = vsub.f32 %v1117, %v1138
    %v1151 = vsub.f32 %v1118, %v1141
    %v1152 = vsub.f32 %v1119, %v1144
    %v1153 = vmul.f32 %v1145, 1.442695
    %v1154 = vpow.pop %v1153
    %v1155 = vmul.f32 %v1146, 1.442695
    %v1156 = vpow.pop %v1155
    %v1157 = vmul.f32 %v1147, 1.442695
    %v1158 = vpow.pop %v1157
    %v1159 = vmul.f32 %v1148, 1.442695
    %v1160 = vpow.pop %v1159
    %v1161 = vmul.f32 %v1149, 1.442695
    %v1162 = vpow.pop %v1161
    %v1163 = vmul.f32 %v1150, 1.442695
    %v1164 = vpow.pop %v1163
    %v1165 = vmul.f32 %v1151, 1.442695
    %v1166 = vpow.pop %v1165
    %v1167 = vmul.f32 %v1152, 1.442695
    %v1168 = vpow.pop %v1167
    %v1169 = vsel %vm1120, %v1154, 0.0
    %1170 = vadd.xlane.f32.xlu0 %v1169
    %v1171 = vpop.xlane.xlu0 %1170
    %v1172 = vsel %vm1120, %v1156, 0.0
    %1173 = vadd.xlane.f32.xlu0 %v1172
    %v1174 = vpop.xlane.xlu0 %1173
    %v1175 = vsel %vm1120, %v1158, 0.0
    %1176 = vadd.xlane.f32.xlu0 %v1175
    %v1177 = vpop.xlane.xlu0 %1176
    %v1178 = vsel %vm1120, %v1160, 0.0
    %1179 = vadd.xlane.f32.xlu0 %v1178
    %v1180 = vpop.xlane.xlu0 %1179
    %v1181 = vsel %vm1120, %v1162, 0.0
    %1182 = vadd.xlane.f32.xlu0 %v1181
    %v1183 = vpop.xlane.xlu0 %1182
    %v1184 = vsel %vm1120, %v1164, 0.0
    %1185 = vadd.xlane.f32.xlu0 %v1184
    %v1186 = vpop.xlane.xlu0 %1185
    %v1187 = vsel %vm1120, %v1166, 0.0
    %1188 = vadd.xlane.f32.xlu0 %v1187
    %v1189 = vpop.xlane.xlu0 %1188
    %v1190 = vsel %vm1120, %v1168, 0.0
    %1191 = vadd.xlane.f32.xlu0 %v1190
    %v1192 = vpop.xlane.xlu0 %1191
    %v1193 = vrcp.pop %v1171
    %v1194 = vrcp.pop %v1174
    %v1195 = vrcp.pop %v1177
    %v1196 = vrcp.pop %v1180
    %v1197 = vrcp.pop %v1183
    %v1198 = vrcp.pop %v1186
    %v1199 = vrcp.pop %v1189
    %v1200 = vrcp.pop %v1192
    %v1201 = vmul.f32 %v1154, %v1193
    %v1202 = vmul.f32 %v1156, %v1194
    %v1203 = vmul.f32 %v1158, %v1195
    %v1204 = vmul.f32 %v1160, %v1196
    %v1205 = vmul.f32 %v1162, %v1197
    %v1206 = vmul.f32 %v1164, %v1198
    %v1207 = vmul.f32 %v1166, %v1199
    %v1208 = vmul.f32 %v1168, %v1200
    %v1209 = vpack.c.bf16 %v1201, %v1201
    %v1210 = vpack.c.bf16 %v1202, %v1202
    %v1211 = vpack.c.bf16 %v1203, %v1203
    %v1212 = vpack.c.bf16 %v1204, %v1204
    %v1213 = vpack.c.bf16 %v1205, %v1205
    %v1214 = vpack.c.bf16 %v1206, %v1206
    %v1215 = vpack.c.bf16 %v1207, %v1207
    %v1216 = vpack.c.bf16 %v1208, %v1208
    %v1218 = vsel %vm1120, %v1209, 0
    %vm1220 = vcmask 1043456
    %v1222 = vsel %vm1220, %v843, 0
    %1224 = vmatpush.bf16.msra.mxu0 0
    %1225 = vmatpush.bf16.msra.mxu0 0
    %1226 = vmatpush.bf16.msra.mxu0 0
    %1227 = vmatpush.bf16.msra.mxu0 0
    %1228 = vmatpush.bf16.msra.mxu0 0
    %1229 = vmatpush.bf16.msra.mxu0 0
    %1230 = vmatpush.bf16.msra.mxu0 0
    %1231 = vmatpush.bf16.msra.mxu0 %v1222
    %1232 = vmatmul.bf16.gmra.mxu0 %v1218
    %v1233 = vpop.f32.mrf.mxu0
    %v1234 = vadd.f32 0.0, %v1233
    %v1235 = vpop.f32.mrf.mxu0
    %1236 = vdwg.mxu0
    %v1238 = vunpack.c.l.b16 %v843
    %v1239 = vpack.c.b16 %v1238, %v1238
    %1240 = vrot.lane.b32.xlu0 %v1239, 96
    %v1241 = vpop.permute.xlu0 %1240
    %v1243 = vsel %vm1120, %v1210, 0
    %v1246 = vsel %vm1220, %v1241, 0
    %1248 = vmatpush.bf16.msra.mxu0 0
    %1249 = vmatpush.bf16.msra.mxu0 0
    %1250 = vmatpush.bf16.msra.mxu0 0
    %1251 = vmatpush.bf16.msra.mxu0 0
    %1252 = vmatpush.bf16.msra.mxu0 0
    %1253 = vmatpush.bf16.msra.mxu0 0
    %1254 = vmatpush.bf16.msra.mxu0 0
    %1255 = vmatpush.bf16.msra.mxu0 %v1246
    %1256 = vmatmul.bf16.gmra.mxu0 %v1243
    %v1257 = vpop.f32.mrf.mxu0
    %v1258 = vadd.f32 0.0, %v1257
    %v1259 = vpop.f32.mrf.mxu0
    %1260 = vdwg.mxu0
    %1261 = vrot.lane.b32.xlu0 %v1239, 64
    %v1262 = vpop.permute.xlu0 %1261
    %v1264 = vsel %vm1120, %v1211, 0
    %v1267 = vsel %vm1220, %v1262, 0
    %1269 = vmatpush.bf16.msra.mxu0 0
    %1270 = vmatpush.bf16.msra.mxu0 0
    %1271 = vmatpush.bf16.msra.mxu0 0
    %1272 = vmatpush.bf16.msra.mxu0 0
    %1273 = vmatpush.bf16.msra.mxu0 0
    %1274 = vmatpush.bf16.msra.mxu0 0
    %1275 = vmatpush.bf16.msra.mxu0 0
    %1276 = vmatpush.bf16.msra.mxu0 %v1267
    %1277 = vmatmul.bf16.gmra.mxu0 %v1264
    %v1278 = vpop.f32.mrf.mxu0
    %v1279 = vadd.f32 0.0, %v1278
    %v1280 = vpop.f32.mrf.mxu0
    %1281 = vdwg.mxu0
    %1282 = vrot.lane.b32.xlu0 %v1239, 32
    %v1283 = vpop.permute.xlu0 %1282
    %v1285 = vsel %vm1120, %v1212, 0
    %v1288 = vsel %vm1220, %v1283, 0
    %1290 = vmatpush.bf16.msra.mxu0 0
    %1291 = vmatpush.bf16.msra.mxu0 0
    %1292 = vmatpush.bf16.msra.mxu0 0
    %1293 = vmatpush.bf16.msra.mxu0 0
    %1294 = vmatpush.bf16.msra.mxu0 0
    %1295 = vmatpush.bf16.msra.mxu0 0
    %1296 = vmatpush.bf16.msra.mxu0 0
    %1297 = vmatpush.bf16.msra.mxu0 %v1288
    %1298 = vmatmul.bf16.gmra.mxu0 %v1285
    %v1299 = vpop.f32.mrf.mxu0
    %v1300 = vadd.f32 0.0, %v1299
    %v1301 = vpop.f32.mrf.mxu0
    %1302 = vdwg.mxu0
    %1304 = vrot.lane.b32.xlu0 %v1258, 32
    %v1305 = vpop.permute.xlu0 %1304
    %1308 = vrot.lane.b32.xlu0 %v1279, 64
    %v1309 = vpop.permute.xlu0 %1308
    %1312 = vrot.lane.b32.xlu0 %v1300, 96
    %v1313 = vpop.permute.xlu0 %1312
    %v1315 = vsel %vm905, %v1234, %v1305
    %vm1316 = vcmask 523264
    %v1317 = vsel %vm1316, %v1315, %v1309
    %vm1318 = vcmask 785408
    %v1319 = vsel %vm1318, %v1317, %v1313
    %v1321 = vsel %vm1120, %v1213, 0
    %v1324 = vsel %vm1220, %v844, 0
    %1326 = vmatpush.bf16.msra.mxu0 0
    %1327 = vmatpush.bf16.msra.mxu0 0
    %1328 = vmatpush.bf16.msra.mxu0 0
    %1329 = vmatpush.bf16.msra.mxu0 0
    %1330 = vmatpush.bf16.msra.mxu0 0
    %1331 = vmatpush.bf16.msra.mxu0 0
    %1332 = vmatpush.bf16.msra.mxu0 0
    %1333 = vmatpush.bf16.msra.mxu0 %v1324
    %1334 = vmatmul.bf16.gmra.mxu0 %v1321
    %v1335 = vpop.f32.mrf.mxu0
    %v1336 = vadd.f32 0.0, %v1335
    %v1337 = vpop.f32.mrf.mxu0
    %1338 = vdwg.mxu0
    %v1340 = vunpack.c.l.b16 %v844
    %v1341 = vpack.c.b16 %v1340, %v1340
    %1342 = vrot.lane.b32.xlu0 %v1341, 96
    %v1343 = vpop.permute.xlu0 %1342
    %v1345 = vsel %vm1120, %v1214, 0
    %v1348 = vsel %vm1220, %v1343, 0
    %1350 = vmatpush.bf16.msra.mxu0 0
    %1351 = vmatpush.bf16.msra.mxu0 0
    %1352 = vmatpush.bf16.msra.mxu0 0
    %1353 = vmatpush.bf16.msra.mxu0 0
    %1354 = vmatpush.bf16.msra.mxu0 0
    %1355 = vmatpush.bf16.msra.mxu0 0
    %1356 = vmatpush.bf16.msra.mxu0 0
    %1357 = vmatpush.bf16.msra.mxu0 %v1348
    %1358 = vmatmul.bf16.gmra.mxu0 %v1345
    %v1359 = vpop.f32.mrf.mxu0
    %v1360 = vadd.f32 0.0, %v1359
    %v1361 = vpop.f32.mrf.mxu0
    %1362 = vdwg.mxu0
    %1363 = vrot.lane.b32.xlu0 %v1341, 64
    %v1364 = vpop.permute.xlu0 %1363
    %v1366 = vsel %vm1120, %v1215, 0
    %v1369 = vsel %vm1220, %v1364, 0
    %1371 = vmatpush.bf16.msra.mxu0 0
    %1372 = vmatpush.bf16.msra.mxu0 0
    %1373 = vmatpush.bf16.msra.mxu0 0
    %1374 = vmatpush.bf16.msra.mxu0 0
    %1375 = vmatpush.bf16.msra.mxu0 0
    %1376 = vmatpush.bf16.msra.mxu0 0
    %1377 = vmatpush.bf16.msra.mxu0 0
    %1378 = vmatpush.bf16.msra.mxu0 %v1369
    %1379 = vmatmul.bf16.gmra.mxu0 %v1366
    %v1380 = vpop.f32.mrf.mxu0
    %v1381 = vadd.f32 0.0, %v1380
    %v1382 = vpop.f32.mrf.mxu0
    %1383 = vdwg.mxu0
    %1384 = vrot.lane.b32.xlu0 %v1341, 32
    %v1385 = vpop.permute.xlu0 %1384
    %v1387 = vsel %vm1120, %v1216, 0
    %v1390 = vsel %vm1220, %v1385, 0
    %1392 = vmatpush.bf16.msra.mxu0 0
    %1393 = vmatpush.bf16.msra.mxu0 0
    %1394 = vmatpush.bf16.msra.mxu0 0
    %1395 = vmatpush.bf16.msra.mxu0 0
    %1396 = vmatpush.bf16.msra.mxu0 0
    %1397 = vmatpush.bf16.msra.mxu0 0
    %1398 = vmatpush.bf16.msra.mxu0 0
    %1399 = vmatpush.bf16.msra.mxu0 %v1390
    %1400 = vmatmul.bf16.gmra.mxu0 %v1387
    %v1401 = vpop.f32.mrf.mxu0
    %v1402 = vadd.f32 0.0, %v1401
    %v1403 = vpop.f32.mrf.mxu0
    %1404 = vdwg.mxu0
    %1406 = vrot.lane.b32.xlu0 %v1360, 32
    %v1407 = vpop.permute.xlu0 %1406
    %1410 = vrot.lane.b32.xlu0 %v1381, 64
    %v1411 = vpop.permute.xlu0 %1410
    %1414 = vrot.lane.b32.xlu0 %v1402, 96
    %v1415 = vpop.permute.xlu0 %1414
    %v1417 = vsel %vm905, %v1336, %v1407
    %v1418 = vsel %vm1316, %v1417, %v1411
    %v1419 = vsel %vm1318, %v1418, %v1415
    %v1420 = vpack.c.bf16 %v1419, %v1319
    %v1421 = vld [vmem:[%s4] sm:$0xf]
    %v1422 = vld [vmem:[%s4 + $0x4] sm:$0xf]
    %v1423 = vld [vmem:[%s4 + $0x8] sm:$0xf]
    %v1424 = vld [vmem:[%s4 + $0xc] sm:$0xf]
    %v1425 = vld [vmem:[%s4 + $0x10] sm:$0xf]
    %v1426 = vld [vmem:[%s4 + $0x14] sm:$0xf]
    %v1427 = vld [vmem:[%s4 + $0x18] sm:$0xf]
    %v1428 = vld [vmem:[%s4 + $0x1c] sm:$0xf]
    %v1429 = vld [vmem:[%s4 + $0x20] sm:$0xf]
    %v1430 = vld [vmem:[%s4 + $0x24] sm:$0xf]
    %v1431 = vld [vmem:[%s4 + $0x28] sm:$0xf]
    %v1432 = vld [vmem:[%s4 + $0x2c] sm:$0xf]
    %v1433 = vld [vmem:[%s4 + $0x30] sm:$0xf]
    %v1434 = vld [vmem:[%s4 + $0x34] sm:$0xf]
    %v1435 = vld [vmem:[%s4 + $0x38] sm:$0xf]
    %v1436 = vld [vmem:[%s4 + $0x3c] sm:$0xf]
    %v1453 = vunpack.c.l.b16 %v1421
    %v1454 = vunpack.c.l.b16 %v1422
    %v1455 = vunpack.c.l.b16 %v1423
    %v1456 = vunpack.c.l.b16 %v1424
    %v1457 = vunpack.c.l.b16 %v1425
    %v1458 = vunpack.c.l.b16 %v1426
    %v1459 = vunpack.c.l.b16 %v1427
    %v1460 = vunpack.c.l.b16 %v1428
    %v1461 = vunpack.c.l.b16 %v1429
    %v1462 = vunpack.c.l.b16 %v1430
    %v1463 = vunpack.c.l.b16 %v1431
    %v1464 = vunpack.c.l.b16 %v1432
    %v1465 = vunpack.c.l.b16 %v1433
    %v1466 = vunpack.c.l.b16 %v1434
    %v1467 = vunpack.c.l.b16 %v1435
    %v1468 = vunpack.c.l.b16 %v1436
    %v1469 = vpack.c.b16 %v1454, %v1453
    %v1470 = vpack.c.b16 %v1456, %v1455
    %v1471 = vpack.c.b16 %v1458, %v1457
    %v1472 = vpack.c.b16 %v1460, %v1459
    %v1473 = vpack.c.b16 %v1462, %v1461
    %v1474 = vpack.c.b16 %v1464, %v1463
    %v1475 = vpack.c.b16 %v1466, %v1465
    %v1476 = vpack.c.b16 %v1468, %v1467
    %1485 = vmatpush.bf16.msra.mxu0 %v1476
    %1486 = vmatpush.bf16.msra.mxu0 %v1475
    %1487 = vmatpush.bf16.msra.mxu0 %v1474
    %1488 = vmatpush.bf16.msra.mxu0 %v1473
    %1489 = vmatpush.bf16.msra.mxu0 %v1472
    %1490 = vmatpush.bf16.msra.mxu0 %v1471
    %1491 = vmatpush.bf16.msra.mxu0 %v1470
    %1492 = vmatpush.bf16.msra.mxu0 %v1469
    %1493 = vmatmul.bf16.gmra.mxu0 %v1420
    %v1494 = vpop.f32.mrf.mxu0
    %v1495 = vadd.f32 0.0, %v1494
    %v1496 = vpop.f32.mrf.mxu0
    %v1497 = vadd.f32 0.0, %v1496
    %1498 = vdwg.mxu0
    %v1499 = vadd.f32 %v568, %v1495
    %v1500 = vadd.f32 %v570, %v1497
    %v1501 = vperm.slane %v576, 4
    %v1502 = vadd.f32 %v1499, %v1501
    %v1503 = vadd.f32 %v1500, %v1501
    %1504 = vadd.xlane.f32.xlu0 %v1502
    %v1505 = vpop.xlane.xlu0 %1504
    %1506 = vadd.xlane.f32.xlu0 %v1503
    %v1507 = vpop.xlane.xlu0 %1506
    %v1508 = vmul.f32 %v1505, %v590
    %v1509 = vmul.f32 %v1507, %v590
    %v1510 = vsub.f32 %v1502, %v1508
    %v1511 = vsub.f32 %v1503, %v1509
    %v1512 = vmul.f32 %v1510, %v1510
    %v1513 = vmul.f32 %v1511, %v1511
    %1514 = vadd.xlane.f32.xlu0 %v1512
    %v1515 = vpop.xlane.xlu0 %1514
    %1516 = vadd.xlane.f32.xlu0 %v1513
    %v1517 = vpop.xlane.xlu0 %1516
    %v1518 = vmul.f32 %v1515, %v590
    %v1519 = vmul.f32 %v1517, %v590
    %v1520 = vadd.f32 %v1518, 1e-06
    %v1521 = vadd.f32 %v1519, 1e-06
    %v1522 = vrsqrt.pop %v1520
    %v1523 = vmul.f32 %v1522, %v1520
    %v1524 = vmul.f32 %v1523, %v1522
    %v1525 = vmul.f32 0.5, %v1524
    %v1526 = vsub.f32 1.5, %v1525
    %v1527 = vmul.f32 %v1522, %v1526
    %vm1528 = vweird.f32 %v1520
    %vm1529 = vweird.f32 %v1522
    %vm1530 = vmor %vm1528, %vm1529
    %v1531 = vsel %vm1530, %v1522, %v1527
    %v1532 = vrsqrt.pop %v1521
    %v1533 = vmul.f32 %v1532, %v1521
    %v1534 = vmul.f32 %v1533, %v1532
    %v1535 = vmul.f32 0.5, %v1534
    %v1536 = vsub.f32 1.5, %v1535
    %v1537 = vmul.f32 %v1532, %v1536
    %vm1538 = vweird.f32 %v1521
    %vm1539 = vweird.f32 %v1532
    %vm1540 = vmor %vm1538, %vm1539
    %v1541 = vsel %vm1540, %v1532, %v1537
    %v1542 = vmul.f32 %v1510, %v1531
    %v1543 = vmul.f32 %v1511, %v1541
    %v1544 = vperm.slane %v576, 2
    %v1545 = vmul.f32 %v1542, %v1544
    %v1546 = vmul.f32 %v1543, %v1544
    %v1547 = vperm.slane %v576, 3
    %v1548 = vadd.f32 %v1545, %v1547
    %v1549 = vadd.f32 %v1546, %v1547
    %v1550 = vpack.c.bf16 %v1549, %v1548
    %v1551 = vld [vmem:[%s5] sm:$0xff]
    %v1552 = vld [vmem:[%s5 + $0x8] sm:$0xff]
    %v1553 = vld [vmem:[%s5 + $0x10] sm:$0xff]
    %v1554 = vld [vmem:[%s5 + $0x18] sm:$0xff]
    %v1555 = vld [vmem:[%s5 + $0x20] sm:$0xff]
    %v1556 = vld [vmem:[%s5 + $0x28] sm:$0xff]
    %v1557 = vld [vmem:[%s5 + $0x30] sm:$0xff]
    %v1558 = vld [vmem:[%s5 + $0x38] sm:$0xff]
    %v1559 = vld [vmem:[%s5 + $0x40] sm:$0xff]
    %v1560 = vld [vmem:[%s5 + $0x48] sm:$0xff]
    %v1561 = vld [vmem:[%s5 + $0x50] sm:$0xff]
    %v1562 = vld [vmem:[%s5 + $0x58] sm:$0xff]
    %v1563 = vld [vmem:[%s5 + $0x60] sm:$0xff]
    %v1564 = vld [vmem:[%s5 + $0x68] sm:$0xff]
    %v1565 = vld [vmem:[%s5 + $0x70] sm:$0xff]
    %v1566 = vld [vmem:[%s5 + $0x78] sm:$0xff]
    %v1567 = vld [vmem:[%s5 + $0x80] sm:$0xff]
    %v1568 = vld [vmem:[%s5 + $0x88] sm:$0xff]
    %v1569 = vld [vmem:[%s5 + $0x90] sm:$0xff]
    %v1570 = vld [vmem:[%s5 + $0x98] sm:$0xff]
    %v1571 = vld [vmem:[%s5 + $0xa0] sm:$0xff]
    %v1572 = vld [vmem:[%s5 + $0xa8] sm:$0xff]
    %v1573 = vld [vmem:[%s5 + $0xb0] sm:$0xff]
    %v1574 = vld [vmem:[%s5 + $0xb8] sm:$0xff]
    %v1575 = vld [vmem:[%s5 + $0xc0] sm:$0xff]
    %v1576 = vld [vmem:[%s5 + $0xc8] sm:$0xff]
    %v1577 = vld [vmem:[%s5 + $0xd0] sm:$0xff]
    %v1578 = vld [vmem:[%s5 + $0xd8] sm:$0xff]
    %v1579 = vld [vmem:[%s5 + $0xe0] sm:$0xff]
    %v1580 = vld [vmem:[%s5 + $0xe8] sm:$0xff]
    %v1581 = vld [vmem:[%s5 + $0xf0] sm:$0xff]
    %v1582 = vld [vmem:[%s5 + $0xf8] sm:$0xff]
    %v1583 = vperm.slane %v576, 7
    %v1584 = vperm.slane %v577, 7
    %v1585 = vperm.slane %v578, 7
    %v1586 = vperm.slane %v579, 7
    %v1619 = vunpack.c.l.b16 %v1551
    %v1620 = vunpack.c.h.b16 %v1551
    %v1621 = vunpack.c.l.b16 %v1552
    %v1622 = vunpack.c.h.b16 %v1552
    %v1623 = vunpack.c.l.b16 %v1553
    %v1624 = vunpack.c.h.b16 %v1553
    %v1625 = vunpack.c.l.b16 %v1554
    %v1626 = vunpack.c.h.b16 %v1554
    %v1627 = vunpack.c.l.b16 %v1555
    %v1628 = vunpack.c.h.b16 %v1555
    %v1629 = vunpack.c.l.b16 %v1556
    %v1630 = vunpack.c.h.b16 %v1556
    %v1631 = vunpack.c.l.b16 %v1557
    %v1632 = vunpack.c.h.b16 %v1557
    %v1633 = vunpack.c.l.b16 %v1558
    %v1634 = vunpack.c.h.b16 %v1558
    %v1635 = vunpack.c.l.b16 %v1559
    %v1636 = vunpack.c.h.b16 %v1559
    %v1637 = vunpack.c.l.b16 %v1560
    %v1638 = vunpack.c.h.b16 %v1560
    %v1639 = vunpack.c.l.b16 %v1561
    %v1640 = vunpack.c.h.b16 %v1561
    %v1641 = vunpack.c.l.b16 %v1562
    %v1642 = vunpack.c.h.b16 %v1562
    %v1643 = vunpack.c.l.b16 %v1563
    %v1644 = vunpack.c.h.b16 %v1563
    %v1645 = vunpack.c.l.b16 %v1564
    %v1646 = vunpack.c.h.b16 %v1564
    %v1647 = vunpack.c.l.b16 %v1565
    %v1648 = vunpack.c.h.b16 %v1565
    %v1649 = vunpack.c.l.b16 %v1566
    %v1650 = vunpack.c.h.b16 %v1566
    %v1651 = vunpack.c.l.b16 %v1567
    %v1652 = vunpack.c.h.b16 %v1567
    %v1653 = vunpack.c.l.b16 %v1568
    %v1654 = vunpack.c.h.b16 %v1568
    %v1655 = vunpack.c.l.b16 %v1569
    %v1656 = vunpack.c.h.b16 %v1569
    %v1657 = vunpack.c.l.b16 %v1570
    %v1658 = vunpack.c.h.b16 %v1570
    %v1659 = vunpack.c.l.b16 %v1571
    %v1660 = vunpack.c.h.b16 %v1571
    %v1661 = vunpack.c.l.b16 %v1572
    %v1662 = vunpack.c.h.b16 %v1572
    %v1663 = vunpack.c.l.b16 %v1573
    %v1664 = vunpack.c.h.b16 %v1573
    %v1665 = vunpack.c.l.b16 %v1574
    %v1666 = vunpack.c.h.b16 %v1574
    %v1667 = vunpack.c.l.b16 %v1575
    %v1668 = vunpack.c.h.b16 %v1575
    %v1669 = vunpack.c.l.b16 %v1576
    %v1670 = vunpack.c.h.b16 %v1576
    %v1671 = vunpack.c.l.b16 %v1577
    %v1672 = vunpack.c.h.b16 %v1577
    %v1673 = vunpack.c.l.b16 %v1578
    %v1674 = vunpack.c.h.b16 %v1578
    %v1675 = vunpack.c.l.b16 %v1579
    %v1676 = vunpack.c.h.b16 %v1579
    %v1677 = vunpack.c.l.b16 %v1580
    %v1678 = vunpack.c.h.b16 %v1580
    %v1679 = vunpack.c.l.b16 %v1581
    %v1680 = vunpack.c.h.b16 %v1581
    %v1681 = vunpack.c.l.b16 %v1582
    %v1682 = vunpack.c.h.b16 %v1582
    %v1683 = vpack.c.b16 %v1623, %v1619
    %v1684 = vpack.c.b16 %v1624, %v1620
    %v1685 = vpack.c.b16 %v1625, %v1621
    %v1686 = vpack.c.b16 %v1626, %v1622
    %v1687 = vpack.c.b16 %v1631, %v1627
    %v1688 = vpack.c.b16 %v1632, %v1628
    %v1689 = vpack.c.b16 %v1633, %v1629
    %v1690 = vpack.c.b16 %v1634, %v1630
    %v1691 = vpack.c.b16 %v1639, %v1635
    %v1692 = vpack.c.b16 %v1640, %v1636
    %v1693 = vpack.c.b16 %v1641, %v1637
    %v1694 = vpack.c.b16 %v1642, %v1638
    %v1695 = vpack.c.b16 %v1647, %v1643
    %v1696 = vpack.c.b16 %v1648, %v1644
    %v1697 = vpack.c.b16 %v1649, %v1645
    %v1698 = vpack.c.b16 %v1650, %v1646
    %v1699 = vpack.c.b16 %v1655, %v1651
    %v1700 = vpack.c.b16 %v1656, %v1652
    %v1701 = vpack.c.b16 %v1657, %v1653
    %v1702 = vpack.c.b16 %v1658, %v1654
    %v1703 = vpack.c.b16 %v1663, %v1659
    %v1704 = vpack.c.b16 %v1664, %v1660
    %v1705 = vpack.c.b16 %v1665, %v1661
    %v1706 = vpack.c.b16 %v1666, %v1662
    %v1707 = vpack.c.b16 %v1671, %v1667
    %v1708 = vpack.c.b16 %v1672, %v1668
    %v1709 = vpack.c.b16 %v1673, %v1669
    %v1710 = vpack.c.b16 %v1674, %v1670
    %v1711 = vpack.c.b16 %v1679, %v1675
    %v1712 = vpack.c.b16 %v1680, %v1676
    %v1713 = vpack.c.b16 %v1681, %v1677
    %v1714 = vpack.c.b16 %v1682, %v1678
    %1747 = vmatpush.bf16.msra.mxu0 %v1711
    %1748 = vmatpush.bf16.msra.mxu0 %v1707
    %1749 = vmatpush.bf16.msra.mxu0 %v1703
    %1750 = vmatpush.bf16.msra.mxu0 %v1699
    %1751 = vmatpush.bf16.msra.mxu0 %v1695
    %1752 = vmatpush.bf16.msra.mxu0 %v1691
    %1753 = vmatpush.bf16.msra.mxu0 %v1687
    %1754 = vmatpush.bf16.msra.mxu0 %v1683
    %1755 = vmatmul.bf16.gmra.mxu0 %v1550
    %v1756 = vpop.f32.mrf.mxu0
    %v1757 = vadd.f32 %v1583, %v1756
    %v1758 = vpop.f32.mrf.mxu0
    %v1759 = vadd.f32 %v1583, %v1758
    %1760 = vdwg.mxu0
    %1761 = vmatpush.bf16.msra.mxu0 %v1712
    %1762 = vmatpush.bf16.msra.mxu0 %v1708
    %1763 = vmatpush.bf16.msra.mxu0 %v1704
    %1764 = vmatpush.bf16.msra.mxu0 %v1700
    %1765 = vmatpush.bf16.msra.mxu0 %v1696
    %1766 = vmatpush.bf16.msra.mxu0 %v1692
    %1767 = vmatpush.bf16.msra.mxu0 %v1688
    %1768 = vmatpush.bf16.msra.mxu0 %v1684
    %1769 = vmatmul.bf16.gmra.mxu0 %v1550
    %v1770 = vpop.f32.mrf.mxu0
    %v1771 = vadd.f32 %v1584, %v1770
    %v1772 = vpop.f32.mrf.mxu0
    %v1773 = vadd.f32 %v1584, %v1772
    %1774 = vdwg.mxu0
    %1775 = vmatpush.bf16.msra.mxu0 %v1713
    %1776 = vmatpush.bf16.msra.mxu0 %v1709
    %1777 = vmatpush.bf16.msra.mxu0 %v1705
    %1778 = vmatpush.bf16.msra.mxu0 %v1701
    %1779 = vmatpush.bf16.msra.mxu0 %v1697
    %1780 = vmatpush.bf16.msra.mxu0 %v1693
    %1781 = vmatpush.bf16.msra.mxu0 %v1689
    %1782 = vmatpush.bf16.msra.mxu0 %v1685
    %1783 = vmatmul.bf16.gmra.mxu0 %v1550
    %v1784 = vpop.f32.mrf.mxu0
    %v1785 = vadd.f32 %v1585, %v1784
    %v1786 = vpop.f32.mrf.mxu0
    %v1787 = vadd.f32 %v1585, %v1786
    %1788 = vdwg.mxu0
    %1789 = vmatpush.bf16.msra.mxu0 %v1714
    %1790 = vmatpush.bf16.msra.mxu0 %v1710
    %1791 = vmatpush.bf16.msra.mxu0 %v1706
    %1792 = vmatpush.bf16.msra.mxu0 %v1702
    %1793 = vmatpush.bf16.msra.mxu0 %v1698
    %1794 = vmatpush.bf16.msra.mxu0 %v1694
    %1795 = vmatpush.bf16.msra.mxu0 %v1690
    %1796 = vmatpush.bf16.msra.mxu0 %v1686
    %1797 = vmatmul.bf16.gmra.mxu0 %v1550
    %v1798 = vpop.f32.mrf.mxu0
    %v1799 = vadd.f32 %v1586, %v1798
    %v1800 = vpop.f32.mrf.mxu0
    %v1801 = vadd.f32 %v1586, %v1800
    %1802 = vdwg.mxu0
    %v1803 = vmul.f32 %v1757, %v1757
    %v1804 = vmul.f32 %v1771, %v1771
    %v1805 = vmul.f32 %v1785, %v1785
    %v1806 = vmul.f32 %v1799, %v1799
    %v1807 = vmul.f32 %v1759, %v1759
    %v1808 = vmul.f32 %v1773, %v1773
    %v1809 = vmul.f32 %v1787, %v1787
    %v1810 = vmul.f32 %v1801, %v1801
    %v1811 = vmul.f32 %v1757, %v1803
    %v1812 = vmul.f32 %v1771, %v1804
    %v1813 = vmul.f32 %v1785, %v1805
    %v1814 = vmul.f32 %v1799, %v1806
    %v1815 = vmul.f32 %v1759, %v1807
    %v1816 = vmul.f32 %v1773, %v1808
    %v1817 = vmul.f32 %v1787, %v1809
    %v1818 = vmul.f32 %v1801, %v1810
    %v1819 = vmul.f32 %v1811, 0.044715
    %v1820 = vmul.f32 %v1812, 0.044715
    %v1821 = vmul.f32 %v1813, 0.044715
    %v1822 = vmul.f32 %v1814, 0.044715
    %v1823 = vmul.f32 %v1815, 0.044715
    %v1824 = vmul.f32 %v1816, 0.044715
    %v1825 = vmul.f32 %v1817, 0.044715
    %v1826 = vmul.f32 %v1818, 0.044715
    %v1827 = vadd.f32 %v1757, %v1819
    %v1828 = vadd.f32 %v1771, %v1820
    %v1829 = vadd.f32 %v1785, %v1821
    %v1830 = vadd.f32 %v1799, %v1822
    %v1831 = vadd.f32 %v1759, %v1823
    %v1832 = vadd.f32 %v1773, %v1824
    %v1833 = vadd.f32 %v1787, %v1825
    %v1834 = vadd.f32 %v1801, %v1826
    %v1835 = vmul.f32 %v1827, 0.7978846
    %v1836 = vmul.f32 %v1828, 0.7978846
    %v1837 = vmul.f32 %v1829, 0.7978846
    %v1838 = vmul.f32 %v1830, 0.7978846
    %v1839 = vmul.f32 %v1831, 0.7978846
    %v1840 = vmul.f32 %v1832, 0.7978846
    %v1841 = vmul.f32 %v1833, 0.7978846
    %v1842 = vmul.f32 %v1834, 0.7978846
    %v1843 = vtanh.pop %v1835
    %v1844 = vtanh.pop %v1836
    %v1845 = vtanh.pop %v1837
    %v1846 = vtanh.pop %v1838
    %v1847 = vtanh.pop %v1839
    %v1848 = vtanh.pop %v1840
    %v1849 = vtanh.pop %v1841
    %v1850 = vtanh.pop %v1842
    %v1851 = vadd.f32 %v1843, 1.0
    %v1852 = vadd.f32 %v1844, 1.0
    %v1853 = vadd.f32 %v1845, 1.0
    %v1854 = vadd.f32 %v1846, 1.0
    %v1855 = vadd.f32 %v1847, 1.0
    %v1856 = vadd.f32 %v1848, 1.0
    %v1857 = vadd.f32 %v1849, 1.0
    %v1858 = vadd.f32 %v1850, 1.0
    %v1859 = vmul.f32 %v1851, 0.5
    %v1860 = vmul.f32 %v1852, 0.5
    %v1861 = vmul.f32 %v1853, 0.5
    %v1862 = vmul.f32 %v1854, 0.5
    %v1863 = vmul.f32 %v1855, 0.5
    %v1864 = vmul.f32 %v1856, 0.5
    %v1865 = vmul.f32 %v1857, 0.5
    %v1866 = vmul.f32 %v1858, 0.5
    %v1867 = vmul.f32 %v1757, %v1859
    %v1868 = vmul.f32 %v1771, %v1860
    %v1869 = vmul.f32 %v1785, %v1861
    %v1870 = vmul.f32 %v1799, %v1862
    %v1871 = vmul.f32 %v1759, %v1863
    %v1872 = vmul.f32 %v1773, %v1864
    %v1873 = vmul.f32 %v1787, %v1865
    %v1874 = vmul.f32 %v1801, %v1866
    %v1875 = vpack.c.bf16 %v1871, %v1867
    %v1876 = vpack.c.bf16 %v1872, %v1868
    %v1877 = vpack.c.bf16 %v1873, %v1869
    %v1878 = vpack.c.bf16 %v1874, %v1870
    %v1879 = vld [vmem:[%s6] sm:$0xf]
    %v1880 = vld [vmem:[%s6 + $0x4] sm:$0xf]
    %v1881 = vld [vmem:[%s6 + $0x8] sm:$0xf]
    %v1882 = vld [vmem:[%s6 + $0xc] sm:$0xf]
    %v1883 = vld [vmem:[%s6 + $0x10] sm:$0xf]
    %v1884 = vld [vmem:[%s6 + $0x14] sm:$0xf]
    %v1885 = vld [vmem:[%s6 + $0x18] sm:$0xf]
    %v1886 = vld [vmem:[%s6 + $0x1c] sm:$0xf]
    %v1887 = vld [vmem:[%s6 + $0x20] sm:$0xf]
    %v1888 = vld [vmem:[%s6 + $0x24] sm:$0xf]
    %v1889 = vld [vmem:[%s6 + $0x28] sm:$0xf]
    %v1890 = vld [vmem:[%s6 + $0x2c] sm:$0xf]
    %v1891 = vld [vmem:[%s6 + $0x30] sm:$0xf]
    %v1892 = vld [vmem:[%s6 + $0x34] sm:$0xf]
    %v1893 = vld [vmem:[%s6 + $0x38] sm:$0xf]
    %v1894 = vld [vmem:[%s6 + $0x3c] sm:$0xf]
    %v1895 = vld [vmem:[%s6 + $0x40] sm:$0xf]
    %v1896 = vld [vmem:[%s6 + $0x44] sm:$0xf]
    %v1897 = vld [vmem:[%s6 + $0x48] sm:$0xf]
    %v1898 = vld [vmem:[%s6 + $0x4c] sm:$0xf]
    %v1899 = vld [vmem:[%s6 + $0x50] sm:$0xf]
    %v1900 = vld [vmem:[%s6 + $0x54] sm:$0xf]
    %v1901 = vld [vmem:[%s6 + $0x58] sm:$0xf]
    %v1902 = vld [vmem:[%s6 + $0x5c] sm:$0xf]
    %v1903 = vld [vmem:[%s6 + $0x60] sm:$0xf]
    %v1904 = vld [vmem:[%s6 + $0x64] sm:$0xf]
    %v1905 = vld [vmem:[%s6 + $0x68] sm:$0xf]
    %v1906 = vld [vmem:[%s6 + $0x6c] sm:$0xf]
    %v1907 = vld [vmem:[%s6 + $0x70] sm:$0xf]
    %v1908 = vld [vmem:[%s6 + $0x74] sm:$0xf]
    %v1909 = vld [vmem:[%s6 + $0x78] sm:$0xf]
    %v1910 = vld [vmem:[%s6 + $0x7c] sm:$0xf]
    %v1911 = vld [vmem:[%s6 + $0x80] sm:$0xf]
    %v1912 = vld [vmem:[%s6 + $0x84] sm:$0xf]
    %v1913 = vld [vmem:[%s6 + $0x88] sm:$0xf]
    %v1914 = vld [vmem:[%s6 + $0x8c] sm:$0xf]
    %v1915 = vld [vmem:[%s6 + $0x90] sm:$0xf]
    %v1916 = vld [vmem:[%s6 + $0x94] sm:$0xf]
    %v1917 = vld [vmem:[%s6 + $0x98] sm:$0xf]
    %v1918 = vld [vmem:[%s6 + $0x9c] sm:$0xf]
    %v1919 = vld [vmem:[%s6 + $0xa0] sm:$0xf]
    %v1920 = vld [vmem:[%s6 + $0xa4] sm:$0xf]
    %v1921 = vld [vmem:[%s6 + $0xa8] sm:$0xf]
    %v1922 = vld [vmem:[%s6 + $0xac] sm:$0xf]
    %v1923 = vld [vmem:[%s6 + $0xb0] sm:$0xf]
    %v1924 = vld [vmem:[%s6 + $0xb4] sm:$0xf]
    %v1925 = vld [vmem:[%s6 + $0xb8] sm:$0xf]
    %v1926 = vld [vmem:[%s6 + $0xbc] sm:$0xf]
    %v1927 = vld [vmem:[%s6 + $0xc0] sm:$0xf]
    %v1928 = vld [vmem:[%s6 + $0xc4] sm:$0xf]
    %v1929 = vld [vmem:[%s6 + $0xc8] sm:$0xf]
    %v1930 = vld [vmem:[%s6 + $0xcc] sm:$0xf]
    %v1931 = vld [vmem:[%s6 + $0xd0] sm:$0xf]
    %v1932 = vld [vmem:[%s6 + $0xd4] sm:$0xf]
    %v1933 = vld [vmem:[%s6 + $0xd8] sm:$0xf]
    %v1934 = vld [vmem:[%s6 + $0xdc] sm:$0xf]
    %v1935 = vld [vmem:[%s6 + $0xe0] sm:$0xf]
    %v1936 = vld [vmem:[%s6 + $0xe4] sm:$0xf]
    %v1937 = vld [vmem:[%s6 + $0xe8] sm:$0xf]
    %v1938 = vld [vmem:[%s6 + $0xec] sm:$0xf]
    %v1939 = vld [vmem:[%s6 + $0xf0] sm:$0xf]
    %v1940 = vld [vmem:[%s6 + $0xf4] sm:$0xf]
    %v1941 = vld [vmem:[%s6 + $0xf8] sm:$0xf]
    %v1942 = vld [vmem:[%s6 + $0xfc] sm:$0xf]
    %v1943 = vperm.slane %v576, 5
    %v2008 = vunpack.c.l.b16 %v1879
    %v2009 = vunpack.c.l.b16 %v1880
    %v2010 = vunpack.c.l.b16 %v1881
    %v2011 = vunpack.c.l.b16 %v1882
    %v2012 = vunpack.c.l.b16 %v1883
    %v2013 = vunpack.c.l.b16 %v1884
    %v2014 = vunpack.c.l.b16 %v1885
    %v2015 = vunpack.c.l.b16 %v1886
    %v2016 = vunpack.c.l.b16 %v1887
    %v2017 = vunpack.c.l.b16 %v1888
    %v2018 = vunpack.c.l.b16 %v1889
    %v2019 = vunpack.c.l.b16 %v1890
    %v2020 = vunpack.c.l.b16 %v1891
    %v2021 = vunpack.c.l.b16 %v1892
    %v2022 = vunpack.c.l.b16 %v1893
    %v2023 = vunpack.c.l.b16 %v1894
    %v2024 = vunpack.c.l.b16 %v1895
    %v2025 = vunpack.c.l.b16 %v1896
    %v2026 = vunpack.c.l.b16 %v1897
    %v2027 = vunpack.c.l.b16 %v1898
    %v2028 = vunpack.c.l.b16 %v1899
    %v2029 = vunpack.c.l.b16 %v1900
    %v2030 = vunpack.c.l.b16 %v1901
    %v2031 = vunpack.c.l.b16 %v1902
    %v2032 = vunpack.c.l.b16 %v1903
    %v2033 = vunpack.c.l.b16 %v1904
    %v2034 = vunpack.c.l.b16 %v1905
    %v2035 = vunpack.c.l.b16 %v1906
    %v2036 = vunpack.c.l.b16 %v1907
    %v2037 = vunpack.c.l.b16 %v1908
    %v2038 = vunpack.c.l.b16 %v1909
    %v2039 = vunpack.c.l.b16 %v1910
    %v2040 = vunpack.c.l.b16 %v1911
    %v2041 = vunpack.c.l.b16 %v1912
    %v2042 = vunpack.c.l.b16 %v1913
    %v2043 = vunpack.c.l.b16 %v1914
    %v2044 = vunpack.c.l.b16 %v1915
    %v2045 = vunpack.c.l.b16 %v1916
    %v2046 = vunpack.c.l.b16 %v1917
    %v2047 = vunpack.c.l.b16 %v1918
    %v2048 = vunpack.c.l.b16 %v1919
    %v2049 = vunpack.c.l.b16 %v1920
    %v2050 = vunpack.c.l.b16 %v1921
    %v2051 = vunpack.c.l.b16 %v1922
    %v2052 = vunpack.c.l.b16 %v1923
    %v2053 = vunpack.c.l.b16 %v1924
    %v2054 = vunpack.c.l.b16 %v1925
    %v2055 = vunpack.c.l.b16 %v1926
    %v2056 = vunpack.c.l.b16 %v1927
    %v2057 = vunpack.c.l.b16 %v1928
    %v2058 = vunpack.c.l.b16 %v1929
    %v2059 = vunpack.c.l.b16 %v1930
    %v2060 = vunpack.c.l.b16 %v1931
    %v2061 = vunpack.c.l.b16 %v1932
    %v2062 = vunpack.c.l.b16 %v1933
    %v2063 = vunpack.c.l.b16 %v1934
    %v2064 = vunpack.c.l.b16 %v1935
    %v2065 = vunpack.c.l.b16 %v1936
    %v2066 = vunpack.c.l.b16 %v1937
    %v2067 = vunpack.c.l.b16 %v1938
    %v2068 = vunpack.c.l.b16 %v1939
    %v2069 = vunpack.c.l.b16 %v1940
    %v2070 = vunpack.c.l.b16 %v1941
    %v2071 = vunpack.c.l.b16 %v1942
    %v2072 = vpack.c.b16 %v2009, %v2008
    %v2073 = vpack.c.b16 %v2011, %v2010
    %v2074 = vpack.c.b16 %v2013, %v2012
    %v2075 = vpack.c.b16 %v2015, %v2014
    %v2076 = vpack.c.b16 %v2017, %v2016
    %v2077 = vpack.c.b16 %v2019, %v2018
    %v2078 = vpack.c.b16 %v2021, %v2020
    %v2079 = vpack.c.b16 %v2023, %v2022
    %v2080 = vpack.c.b16 %v2025, %v2024
    %v2081 = vpack.c.b16 %v2027, %v2026
    %v2082 = vpack.c.b16 %v2029, %v2028
    %v2083 = vpack.c.b16 %v2031, %v2030
    %v2084 = vpack.c.b16 %v2033, %v2032
    %v2085 = vpack.c.b16 %v2035, %v2034
    %v2086 = vpack.c.b16 %v2037, %v2036
    %v2087 = vpack.c.b16 %v2039, %v2038
    %v2088 = vpack.c.b16 %v2041, %v2040
    %v2089 = vpack.c.b16 %v2043, %v2042
    %v2090 = vpack.c.b16 %v2045, %v2044
    %v2091 = vpack.c.b16 %v2047, %v2046
    %v2092 = vpack.c.b16 %v2049, %v2048
    %v2093 = vpack.c.b16 %v2051, %v2050
    %v2094 = vpack.c.b16 %v2053, %v2052
    %v2095 = vpack.c.b16 %v2055, %v2054
    %v2096 = vpack.c.b16 %v2057, %v2056
    %v2097 = vpack.c.b16 %v2059, %v2058
    %v2098 = vpack.c.b16 %v2061, %v2060
    %v2099 = vpack.c.b16 %v2063, %v2062
    %v2100 = vpack.c.b16 %v2065, %v2064
    %v2101 = vpack.c.b16 %v2067, %v2066
    %v2102 = vpack.c.b16 %v2069, %v2068
    %v2103 = vpack.c.b16 %v2071, %v2070
    %2136 = vmatpush.bf16.msra.mxu0 %v2079
    %2137 = vmatpush.bf16.msra.mxu0 %v2078
    %2138 = vmatpush.bf16.msra.mxu0 %v2077
    %2139 = vmatpush.bf16.msra.mxu0 %v2076
    %2140 = vmatpush.bf16.msra.mxu0 %v2075
    %2141 = vmatpush.bf16.msra.mxu0 %v2074
    %2142 = vmatpush.bf16.msra.mxu0 %v2073
    %2143 = vmatpush.bf16.msra.mxu0 %v2072
    %2144 = vmatmul.bf16.gmra.mxu0 %v1875
    %v2145 = vpop.f32.mrf.mxu0
    %v2146 = vadd.f32 %v1943, %v2145
    %v2147 = vpop.f32.mrf.mxu0
    %v2148 = vadd.f32 %v1943, %v2147
    %2149 = vdwg.mxu0
    %2150 = vmatpush.bf16.msra.mxu0 %v2087
    %2151 = vmatpush.bf16.msra.mxu0 %v2086
    %2152 = vmatpush.bf16.msra.mxu0 %v2085
    %2153 = vmatpush.bf16.msra.mxu0 %v2084
    %2154 = vmatpush.bf16.msra.mxu0 %v2083
    %2155 = vmatpush.bf16.msra.mxu0 %v2082
    %2156 = vmatpush.bf16.msra.mxu0 %v2081
    %2157 = vmatpush.bf16.msra.mxu0 %v2080
    %2158 = vmatmul.bf16.gmra.mxu0 %v1876
    %v2159 = vpop.f32.mrf.mxu0
    %v2160 = vadd.f32 %v2146, %v2159
    %v2161 = vpop.f32.mrf.mxu0
    %v2162 = vadd.f32 %v2148, %v2161
    %2163 = vdwg.mxu0
    %2164 = vmatpush.bf16.msra.mxu0 %v2095
    %2165 = vmatpush.bf16.msra.mxu0 %v2094
    %2166 = vmatpush.bf16.msra.mxu0 %v2093
    %2167 = vmatpush.bf16.msra.mxu0 %v2092
    %2168 = vmatpush.bf16.msra.mxu0 %v2091
    %2169 = vmatpush.bf16.msra.mxu0 %v2090
    %2170 = vmatpush.bf16.msra.mxu0 %v2089
    %2171 = vmatpush.bf16.msra.mxu0 %v2088
    %2172 = vmatmul.bf16.gmra.mxu0 %v1877
    %v2173 = vpop.f32.mrf.mxu0
    %v2174 = vadd.f32 %v2160, %v2173
    %v2175 = vpop.f32.mrf.mxu0
    %v2176 = vadd.f32 %v2162, %v2175
    %2177 = vdwg.mxu0
    %2178 = vmatpush.bf16.msra.mxu0 %v2103
    %2179 = vmatpush.bf16.msra.mxu0 %v2102
    %2180 = vmatpush.bf16.msra.mxu0 %v2101
    %2181 = vmatpush.bf16.msra.mxu0 %v2100
    %2182 = vmatpush.bf16.msra.mxu0 %v2099
    %2183 = vmatpush.bf16.msra.mxu0 %v2098
    %2184 = vmatpush.bf16.msra.mxu0 %v2097
    %2185 = vmatpush.bf16.msra.mxu0 %v2096
    %2186 = vmatmul.bf16.gmra.mxu0 %v1878
    %v2187 = vpop.f32.mrf.mxu0
    %v2188 = vadd.f32 %v2174, %v2187
    %v2189 = vpop.f32.mrf.mxu0
    %v2190 = vadd.f32 %v2176, %v2189
    %2191 = vdwg.mxu0
    %v2192 = vadd.f32 %v1502, %v2188
    %v2193 = vadd.f32 %v1503, %v2190
    %s2194 = scalar_lea.vmem %s7, 32
    %v2195 = vld [vmem:[%s2194] sm:$0xff]
    %v2196 = vld [vmem:[%s2194 + $0x8] sm:$0xff]
    %v2197 = vld [vmem:[%s2194 + $0x10] sm:$0xff]
    %v2198 = vld [vmem:[%s2194 + $0x18] sm:$0xff]
    %2199 = vadd.xlane.f32.xlu0 %v2192
    %v2200 = vpop.xlane.xlu0 %2199
    %2201 = vadd.xlane.f32.xlu0 %v2193
    %v2202 = vpop.xlane.xlu0 %2201
    %v2203 = vmul.f32 %v2200, %v590
    %v2204 = vmul.f32 %v2202, %v590
    %v2205 = vsub.f32 %v2192, %v2203
    %v2206 = vsub.f32 %v2193, %v2204
    %v2207 = vmul.f32 %v2205, %v2205
    %v2208 = vmul.f32 %v2206, %v2206
    %2209 = vadd.xlane.f32.xlu0 %v2207
    %v2210 = vpop.xlane.xlu0 %2209
    %2211 = vadd.xlane.f32.xlu0 %v2208
    %v2212 = vpop.xlane.xlu0 %2211
    %v2213 = vmul.f32 %v2210, %v590
    %v2214 = vmul.f32 %v2212, %v590
    %v2215 = vadd.f32 %v2213, 1e-06
    %v2216 = vadd.f32 %v2214, 1e-06
    %v2217 = vrsqrt.pop %v2215
    %v2218 = vmul.f32 %v2217, %v2215
    %v2219 = vmul.f32 %v2218, %v2217
    %v2220 = vmul.f32 0.5, %v2219
    %v2221 = vsub.f32 1.5, %v2220
    %v2222 = vmul.f32 %v2217, %v2221
    %vm2223 = vweird.f32 %v2215
    %vm2224 = vweird.f32 %v2217
    %vm2225 = vmor %vm2223, %vm2224
    %v2226 = vsel %vm2225, %v2217, %v2222
    %v2227 = vrsqrt.pop %v2216
    %v2228 = vmul.f32 %v2227, %v2216
    %v2229 = vmul.f32 %v2228, %v2227
    %v2230 = vmul.f32 0.5, %v2229
    %v2231 = vsub.f32 1.5, %v2230
    %v2232 = vmul.f32 %v2227, %v2231
    %vm2233 = vweird.f32 %v2216
    %vm2234 = vweird.f32 %v2227
    %vm2235 = vmor %vm2233, %vm2234
    %v2236 = vsel %vm2235, %v2227, %v2232
    %v2237 = vmul.f32 %v2205, %v2226
    %v2238 = vmul.f32 %v2206, %v2236
    %v2239 = vperm.slane %v2195, 0
    %v2240 = vmul.f32 %v2237, %v2239
    %v2241 = vmul.f32 %v2238, %v2239
    %v2242 = vperm.slane %v2195, 1
    %v2243 = vadd.f32 %v2240, %v2242
    %v2244 = vadd.f32 %v2241, %v2242
    %v2245 = vpack.c.bf16 %v2244, %v2243
    %s2246 = scalar_lea.vmem [#allocation5], 192
    %v2247 = vld [vmem:[%s2246] sm:$0xff]
    %v2248 = vld [vmem:[%s2246 + $0x8] sm:$0xf]
    %v2249 = vld [vmem:[%s2246 + $0xc] sm:$0xff]
    %v2250 = vld [vmem:[%s2246 + $0x14] sm:$0xf]
    %v2251 = vld [vmem:[%s2246 + $0x18] sm:$0xff]
    %v2252 = vld [vmem:[%s2246 + $0x20] sm:$0xf]
    %v2253 = vld [vmem:[%s2246 + $0x24] sm:$0xff]
    %v2254 = vld [vmem:[%s2246 + $0x2c] sm:$0xf]
    %v2255 = vld [vmem:[%s2246 + $0x30] sm:$0xff]
    %v2256 = vld [vmem:[%s2246 + $0x38] sm:$0xf]
    %v2257 = vld [vmem:[%s2246 + $0x3c] sm:$0xff]
    %v2258 = vld [vmem:[%s2246 + $0x44] sm:$0xf]
    %v2259 = vld [vmem:[%s2246 + $0x48] sm:$0xff]
    %v2260 = vld [vmem:[%s2246 + $0x50] sm:$0xf]
    %v2261 = vld [vmem:[%s2246 + $0x54] sm:$0xff]
    %v2262 = vld [vmem:[%s2246 + $0x5c] sm:$0xf]
    %v2263 = vld [vmem:[%s2246 + $0x60] sm:$0xff]
    %v2264 = vld [vmem:[%s2246 + $0x68] sm:$0xf]
    %v2265 = vld [vmem:[%s2246 + $0x6c] sm:$0xff]
    %v2266 = vld [vmem:[%s2246 + $0x74] sm:$0xf]
    %v2267 = vld [vmem:[%s2246 + $0x78] sm:$0xff]
    %v2268 = vld [vmem:[%s2246 + $0x80] sm:$0xf]
    %v2269 = vld [vmem:[%s2246 + $0x84] sm:$0xff]
    %v2270 = vld [vmem:[%s2246 + $0x8c] sm:$0xf]
    %v2271 = vld [vmem:[%s2246 + $0x90] sm:$0xff]
    %v2272 = vld [vmem:[%s2246 + $0x98] sm:$0xf]
    %v2273 = vld [vmem:[%s2246 + $0x9c] sm:$0xff]
    %v2274 = vld [vmem:[%s2246 + $0xa4] sm:$0xf]
    %v2275 = vld [vmem:[%s2246 + $0xa8] sm:$0xff]
    %v2276 = vld [vmem:[%s2246 + $0xb0] sm:$0xf]
    %v2277 = vld [vmem:[%s2246 + $0xb4] sm:$0xff]
    %v2278 = vld [vmem:[%s2246 + $0xbc] sm:$0xf]
    %v2279 = vperm.slane %v2195, 6
    %v2280 = vperm.slane %v2196, 6
    %v2281 = vperm.slane %v2197, 6
    %v2314 = vunpack.c.l.b16 %v2247
    %v2315 = vunpack.c.h.b16 %v2247
    %v2316 = vunpack.c.l.b16 %v2248
    %v2317 = vunpack.c.l.b16 %v2249
    %v2318 = vunpack.c.h.b16 %v2249
    %v2319 = vunpack.c.l.b16 %v2250
    %v2320 = vunpack.c.l.b16 %v2251
    %v2321 = vunpack.c.h.b16 %v2251
    %v2322 = vunpack.c.l.b16 %v2252
    %v2323 = vunpack.c.l.b16 %v2253
    %v2324 = vunpack.c.h.b16 %v2253
    %v2325 = vunpack.c.l.b16 %v2254
    %v2326 = vunpack.c.l.b16 %v2255
    %v2327 = vunpack.c.h.b16 %v2255
    %v2328 = vunpack.c.l.b16 %v2256
    %v2329 = vunpack.c.l.b16 %v2257
    %v2330 = vunpack.c.h.b16 %v2257
    %v2331 = vunpack.c.l.b16 %v2258
    %v2332 = vunpack.c.l.b16 %v2259
    %v2333 = vunpack.c.h.b16 %v2259
    %v2334 = vunpack.c.l.b16 %v2260
    %v2335 = vunpack.c.l.b16 %v2261
    %v2336 = vunpack.c.h.b16 %v2261
    %v2337 = vunpack.c.l.b16 %v2262
    %v2338 = vunpack.c.l.b16 %v2263
    %v2339 = vunpack.c.h.b16 %v2263
    %v2340 = vunpack.c.l.b16 %v2264
    %v2341 = vunpack.c.l.b16 %v2265
    %v2342 = vunpack.c.h.b16 %v2265
    %v2343 = vunpack.c.l.b16 %v2266
    %v2344 = vunpack.c.l.b16 %v2267
    %v2345 = vunpack.c.h.b16 %v2267
    %v2346 = vunpack.c.l.b16 %v2268
    %v2347 = vunpack.c.l.b16 %v2269
    %v2348 = vunpack.c.h.b16 %v2269
    %v2349 = vunpack.c.l.b16 %v2270
    %v2350 = vunpack.c.l.b16 %v2271
    %v2351 = vunpack.c.h.b16 %v2271
    %v2352 = vunpack.c.l.b16 %v2272
    %v2353 = vunpack.c.l.b16 %v2273
    %v2354 = vunpack.c.h.b16 %v2273
    %v2355 = vunpack.c.l.b16 %v2274
    %v2356 = vunpack.c.l.b16 %v2275
    %v2357 = vunpack.c.h.b16 %v2275
    %v2358 = vunpack.c.l.b16 %v2276
    %v2359 = vunpack.c.l.b16 %v2277
    %v2360 = vunpack.c.h.b16 %v2277
    %v2361 = vunpack.c.l.b16 %v2278
    %v2362 = vpack.c.b16 %v2317, %v2314
    %v2363 = vpack.c.b16 %v2318, %v2315
    %v2364 = vpack.c.b16 %v2319, %v2316
    %v2365 = vpack.c.b16 %v2323, %v2320
    %v2366 = vpack.c.b16 %v2324, %v2321
    %v2367 = vpack.c.b16 %v2325, %v2322
    %v2368 = vpack.c.b16 %v2329, %v2326
    %v2369 = vpack.c.b16 %v2330, %v2327
    %v2370 = vpack.c.b16 %v2331, %v2328
    %v2371 = vpack.c.b16 %v2335, %v2332
    %v2372 = vpack.c.b16 %v2336, %v2333
    %v2373 = vpack.c.b16 %v2337, %v2334
    %v2374 = vpack.c.b16 %v2341, %v2338
    %v2375 = vpack.c.b16 %v2342, %v2339
    %v2376 = vpack.c.b16 %v2343, %v2340
    %v2377 = vpack.c.b16 %v2347, %v2344
    %v2378 = vpack.c.b16 %v2348, %v2345
    %v2379 = vpack.c.b16 %v2349, %v2346
    %v2380 = vpack.c.b16 %v2353, %v2350
    %v2381 = vpack.c.b16 %v2354, %v2351
    %v2382 = vpack.c.b16 %v2355, %v2352
    %v2383 = vpack.c.b16 %v2359, %v2356
    %v2384 = vpack.c.b16 %v2360, %v2357
    %v2385 = vpack.c.b16 %v2361, %v2358
    %2410 = vmatpush.bf16.msra.mxu0 %v2383
    %2411 = vmatpush.bf16.msra.mxu0 %v2380
    %2412 = vmatpush.bf16.msra.mxu0 %v2377
    %2413 = vmatpush.bf16.msra.mxu0 %v2374
    %2414 = vmatpush.bf16.msra.mxu0 %v2371
    %2415 = vmatpush.bf16.msra.mxu0 %v2368
    %2416 = vmatpush.bf16.msra.mxu0 %v2365
    %2417 = vmatpush.bf16.msra.mxu0 %v2362
    %2418 = vmatmul.bf16.gmra.mxu0 %v2245
    %v2419 = vpop.f32.mrf.mxu0
    %v2420 = vadd.f32 %v2279, %v2419
    %v2421 = vpop.f32.mrf.mxu0
    %v2422 = vadd.f32 %v2279, %v2421
    %2423 = vdwg.mxu0
    %2424 = vmatpush.bf16.msra.mxu0 %v2384
    %2425 = vmatpush.bf16.msra.mxu0 %v2381
    %2426 = vmatpush.bf16.msra.mxu0 %v2378
    %2427 = vmatpush.bf16.msra.mxu0 %v2375
    %2428 = vmatpush.bf16.msra.mxu0 %v2372
    %2429 = vmatpush.bf16.msra.mxu0 %v2369
    %2430 = vmatpush.bf16.msra.mxu0 %v2366
    %2431 = vmatpush.bf16.msra.mxu0 %v2363
    %2432 = vmatmul.bf16.gmra.mxu0 %v2245
    %v2433 = vpop.f32.mrf.mxu0
    %v2434 = vadd.f32 %v2280, %v2433
    %v2435 = vpop.f32.mrf.mxu0
    %v2436 = vadd.f32 %v2280, %v2435
    %2437 = vdwg.mxu0
    %2438 = vmatpush.bf16.msra.mxu0 %v2385
    %2439 = vmatpush.bf16.msra.mxu0 %v2382
    %2440 = vmatpush.bf16.msra.mxu0 %v2379
    %2441 = vmatpush.bf16.msra.mxu0 %v2376
    %2442 = vmatpush.bf16.msra.mxu0 %v2373
    %2443 = vmatpush.bf16.msra.mxu0 %v2370
    %2444 = vmatpush.bf16.msra.mxu0 %v2367
    %2445 = vmatpush.bf16.msra.mxu0 %v2364
    %2446 = vmatmul.bf16.gmra.mxu0 %v2245
    %v2447 = vpop.f32.mrf.mxu0
    %v2448 = vadd.f32 %v2281, %v2447
    %v2449 = vpop.f32.mrf.mxu0
    %v2450 = vadd.f32 %v2281, %v2449
    %2451 = vdwg.mxu0
    %v2452 = vmul.f32 %v2420, 0.17677669
    %v2453 = vmul.f32 %v2422, 0.17677669
    %v2454 = vpack.c.bf16 %v2452, %v2452
    %v2455 = vpack.c.bf16 %v2453, %v2453
    %v2456 = vpack.c.bf16 %v2448, %v2448
    %v2457 = vpack.c.bf16 %v2450, %v2450
    %2458 = vxpose.xlu0.b32.start [1/16] %v2434, 128
    %2459 = vxpose.xlu0.b32.cont [2/16] %v2436, 128
    %2460 = vxpose.xlu0.b32.cont [3/16] 0.0, 128
    %2461 = vxpose.xlu0.b32.cont [4/16] 0.0, 128
    %2462 = vxpose.xlu0.b32.cont [5/16] 0.0, 128
    %2463 = vxpose.xlu0.b32.cont [6/16] 0.0, 128
    %2464 = vxpose.xlu0.b32.cont [7/16] 0.0, 128
    %2465 = vxpose.xlu0.b32.cont [8/16] 0.0, 128
    %2466 = vxpose.xlu0.b32.cont [9/16] 0.0, 128
    %2467 = vxpose.xlu0.b32.cont [10/16] 0.0, 128
    %2468 = vxpose.xlu0.b32.cont [11/16] 0.0, 128
    %2469 = vxpose.xlu0.b32.cont [12/16] 0.0, 128
    %2470 = vxpose.xlu0.b32.cont [13/16] 0.0, 128
    %2471 = vxpose.xlu0.b32.cont [14/16] 0.0, 128
    %2472 = vxpose.xlu0.b32.cont [15/16] 0.0, 128
    %2473 = vxpose.xlu0.b32.end [16/16] 0.0, 128
    %v2474 = vpop.trf.xlu0
    %v2475 = vpop.trf.xlu0
    %v2476 = vpop.trf.xlu0
    %v2477 = vpop.trf.xlu0
    %v2478 = vpop.trf.xlu0
    %v2479 = vpop.trf.xlu0
    %v2480 = vpop.trf.xlu0
    %v2481 = vpop.trf.xlu0
    %v2482 = vpop.trf.xlu0
    %v2483 = vpop.trf.xlu0
    %v2484 = vpop.trf.xlu0
    %v2485 = vpop.trf.xlu0
    %v2486 = vpop.trf.xlu0
    %v2487 = vpop.trf.xlu0
    %v2488 = vpop.trf.xlu0
    %v2489 = vpop.trf.xlu0
    %v2490 = vpack.c.bf16 %v2474, %v2474
    %v2491 = vpack.c.bf16 %v2475, %v2475
    %v2492 = vpack.c.bf16 %v2476, %v2476
    %v2493 = vpack.c.bf16 %v2477, %v2477
    %v2494 = vpack.c.bf16 %v2478, %v2478
    %v2495 = vpack.c.bf16 %v2479, %v2479
    %v2496 = vpack.c.bf16 %v2480, %v2480
    %v2497 = vpack.c.bf16 %v2481, %v2481
    %v2498 = vpack.c.bf16 %v2482, %v2482
    %v2499 = vpack.c.bf16 %v2483, %v2483
    %v2500 = vpack.c.bf16 %v2484, %v2484
    %v2501 = vpack.c.bf16 %v2485, %v2485
    %v2502 = vpack.c.bf16 %v2486, %v2486
    %v2503 = vpack.c.bf16 %v2487, %v2487
    %v2504 = vpack.c.bf16 %v2488, %v2488
    %v2505 = vpack.c.bf16 %v2489, %v2489
    %v2510 = vunpack.c.l.b16 %v2490
    %v2511 = vunpack.c.l.b16 %v2491
    %v2512 = vunpack.c.l.b16 %v2492
    %v2513 = vunpack.c.l.b16 %v2493
    %v2514 = vpack.c.b16 %v2511, %v2510
    %v2515 = vpack.c.b16 %v2513, %v2512
    %v2519 = vsel %vm905, %v2454, 0
    %2521 = vmatpush.bf16.msra.mxu0 0
    %2522 = vmatpush.bf16.msra.mxu0 0
    %2523 = vmatpush.bf16.msra.mxu0 0
    %2524 = vmatpush.bf16.msra.mxu0 0
    %2525 = vmatpush.bf16.msra.mxu0 0
    %2526 = vmatpush.bf16.msra.mxu0 0
    %2527 = vmatpush.bf16.msra.mxu0 %v2515
    %2528 = vmatpush.bf16.msra.mxu0 %v2514
    %2529 = vmatmul.bf16.gmra.mxu0 %v2519
    %v2530 = vpop.f32.mrf.mxu0
    %v2531 = vadd.f32 0.0, %v2530
    %v2532 = vpop.f32.mrf.mxu0
    %2533 = vdwg.mxu0
    %v2535 = vunpack.c.l.b16 %v2454
    %v2536 = vpack.c.b16 %v2535, %v2535
    %2537 = vrot.lane.b32.xlu0 %v2536, 96
    %v2538 = vpop.permute.xlu0 %2537
    %v2543 = vunpack.c.l.b16 %v2494
    %v2544 = vunpack.c.l.b16 %v2495
    %v2545 = vunpack.c.l.b16 %v2496
    %v2546 = vunpack.c.l.b16 %v2497
    %v2547 = vpack.c.b16 %v2544, %v2543
    %v2548 = vpack.c.b16 %v2546, %v2545
    %v2552 = vsel %vm905, %v2538, 0
    %2554 = vmatpush.bf16.msra.mxu0 0
    %2555 = vmatpush.bf16.msra.mxu0 0
    %2556 = vmatpush.bf16.msra.mxu0 0
    %2557 = vmatpush.bf16.msra.mxu0 0
    %2558 = vmatpush.bf16.msra.mxu0 0
    %2559 = vmatpush.bf16.msra.mxu0 0
    %2560 = vmatpush.bf16.msra.mxu0 %v2548
    %2561 = vmatpush.bf16.msra.mxu0 %v2547
    %2562 = vmatmul.bf16.gmra.mxu0 %v2552
    %v2563 = vpop.f32.mrf.mxu0
    %v2564 = vadd.f32 0.0, %v2563
    %v2565 = vpop.f32.mrf.mxu0
    %2566 = vdwg.mxu0
    %2567 = vrot.lane.b32.xlu0 %v2536, 64
    %v2568 = vpop.permute.xlu0 %2567
    %v2573 = vunpack.c.l.b16 %v2498
    %v2574 = vunpack.c.l.b16 %v2499
    %v2575 = vunpack.c.l.b16 %v2500
    %v2576 = vunpack.c.l.b16 %v2501
    %v2577 = vpack.c.b16 %v2574, %v2573
    %v2578 = vpack.c.b16 %v2576, %v2575
    %v2582 = vsel %vm905, %v2568, 0
    %2584 = vmatpush.bf16.msra.mxu0 0
    %2585 = vmatpush.bf16.msra.mxu0 0
    %2586 = vmatpush.bf16.msra.mxu0 0
    %2587 = vmatpush.bf16.msra.mxu0 0
    %2588 = vmatpush.bf16.msra.mxu0 0
    %2589 = vmatpush.bf16.msra.mxu0 0
    %2590 = vmatpush.bf16.msra.mxu0 %v2578
    %2591 = vmatpush.bf16.msra.mxu0 %v2577
    %2592 = vmatmul.bf16.gmra.mxu0 %v2582
    %v2593 = vpop.f32.mrf.mxu0
    %v2594 = vadd.f32 0.0, %v2593
    %v2595 = vpop.f32.mrf.mxu0
    %2596 = vdwg.mxu0
    %2597 = vrot.lane.b32.xlu0 %v2536, 32
    %v2598 = vpop.permute.xlu0 %2597
    %v2603 = vunpack.c.l.b16 %v2502
    %v2604 = vunpack.c.l.b16 %v2503
    %v2605 = vunpack.c.l.b16 %v2504
    %v2606 = vunpack.c.l.b16 %v2505
    %v2607 = vpack.c.b16 %v2604, %v2603
    %v2608 = vpack.c.b16 %v2606, %v2605
    %v2612 = vsel %vm905, %v2598, 0
    %2614 = vmatpush.bf16.msra.mxu0 0
    %2615 = vmatpush.bf16.msra.mxu0 0
    %2616 = vmatpush.bf16.msra.mxu0 0
    %2617 = vmatpush.bf16.msra.mxu0 0
    %2618 = vmatpush.bf16.msra.mxu0 0
    %2619 = vmatpush.bf16.msra.mxu0 0
    %2620 = vmatpush.bf16.msra.mxu0 %v2608
    %2621 = vmatpush.bf16.msra.mxu0 %v2607
    %2622 = vmatmul.bf16.gmra.mxu0 %v2612
    %v2623 = vpop.f32.mrf.mxu0
    %v2624 = vadd.f32 0.0, %v2623
    %v2625 = vpop.f32.mrf.mxu0
    %2626 = vdwg.mxu0
    %2627 = vrot.lane.b32.xlu0 %v2514, 120
    %v2628 = vpop.permute.xlu0 %2627
    %2629 = vrot.lane.b32.xlu0 %v2515, 120
    %v2630 = vpop.permute.xlu0 %2629
    %v2634 = vsel %vm905, %v2455, 0
    %2636 = vmatpush.bf16.msra.mxu0 0
    %2637 = vmatpush.bf16.msra.mxu0 0
    %2638 = vmatpush.bf16.msra.mxu0 0
    %2639 = vmatpush.bf16.msra.mxu0 0
    %2640 = vmatpush.bf16.msra.mxu0 0
    %2641 = vmatpush.bf16.msra.mxu0 0
    %2642 = vmatpush.bf16.msra.mxu0 %v2630
    %2643 = vmatpush.bf16.msra.mxu0 %v2628
    %2644 = vmatmul.bf16.gmra.mxu0 %v2634
    %v2645 = vpop.f32.mrf.mxu0
    %v2646 = vadd.f32 0.0, %v2645
    %v2647 = vpop.f32.mrf.mxu0
    %2648 = vdwg.mxu0
    %v2650 = vunpack.c.l.b16 %v2455
    %v2651 = vpack.c.b16 %v2650, %v2650
    %2652 = vrot.lane.b32.xlu0 %v2651, 96
    %v2653 = vpop.permute.xlu0 %2652
    %2654 = vrot.lane.b32.xlu0 %v2547, 120
    %v2655 = vpop.permute.xlu0 %2654
    %2656 = vrot.lane.b32.xlu0 %v2548, 120
    %v2657 = vpop.permute.xlu0 %2656
    %v2661 = vsel %vm905, %v2653, 0
    %2663 = vmatpush.bf16.msra.mxu0 0
    %2664 = vmatpush.bf16.msra.mxu0 0
    %2665 = vmatpush.bf16.msra.mxu0 0
    %2666 = vmatpush.bf16.msra.mxu0 0
    %2667 = vmatpush.bf16.msra.mxu0 0
    %2668 = vmatpush.bf16.msra.mxu0 0
    %2669 = vmatpush.bf16.msra.mxu0 %v2657
    %2670 = vmatpush.bf16.msra.mxu0 %v2655
    %2671 = vmatmul.bf16.gmra.mxu0 %v2661
    %v2672 = vpop.f32.mrf.mxu0
    %v2673 = vadd.f32 0.0, %v2672
    %v2674 = vpop.f32.mrf.mxu0
    %2675 = vdwg.mxu0
    %2676 = vrot.lane.b32.xlu0 %v2651, 64
    %v2677 = vpop.permute.xlu0 %2676
    %2678 = vrot.lane.b32.xlu0 %v2577, 120
    %v2679 = vpop.permute.xlu0 %2678
    %2680 = vrot.lane.b32.xlu0 %v2578, 120
    %v2681 = vpop.permute.xlu0 %2680
    %v2685 = vsel %vm905, %v2677, 0
    %2687 = vmatpush.bf16.msra.mxu0 0
    %2688 = vmatpush.bf16.msra.mxu0 0
    %2689 = vmatpush.bf16.msra.mxu0 0
    %2690 = vmatpush.bf16.msra.mxu0 0
    %2691 = vmatpush.bf16.msra.mxu0 0
    %2692 = vmatpush.bf16.msra.mxu0 0
    %2693 = vmatpush.bf16.msra.mxu0 %v2681
    %2694 = vmatpush.bf16.msra.mxu0 %v2679
    %2695 = vmatmul.bf16.gmra.mxu0 %v2685
    %v2696 = vpop.f32.mrf.mxu0
    %v2697 = vadd.f32 0.0, %v2696
    %v2698 = vpop.f32.mrf.mxu0
    %2699 = vdwg.mxu0
    %2700 = vrot.lane.b32.xlu0 %v2651, 32
    %v2701 = vpop.permute.xlu0 %2700
    %2702 = vrot.lane.b32.xlu0 %v2607, 120
    %v2703 = vpop.permute.xlu0 %2702
    %2704 = vrot.lane.b32.xlu0 %v2608, 120
    %v2705 = vpop.permute.xlu0 %2704
    %v2709 = vsel %vm905, %v2701, 0
    %2711 = vmatpush.bf16.msra.mxu0 0
    %2712 = vmatpush.bf16.msra.mxu0 0
    %2713 = vmatpush.bf16.msra.mxu0 0
    %2714 = vmatpush.bf16.msra.mxu0 0
    %2715 = vmatpush.bf16.msra.mxu0 0
    %2716 = vmatpush.bf16.msra.mxu0 0
    %2717 = vmatpush.bf16.msra.mxu0 %v2705
    %2718 = vmatpush.bf16.msra.mxu0 %v2703
    %2719 = vmatmul.bf16.gmra.mxu0 %v2709
    %v2720 = vpop.f32.mrf.mxu0
    %v2721 = vadd.f32 0.0, %v2720
    %v2722 = vpop.f32.mrf.mxu0
    %2723 = vdwg.mxu0
    %v2724 = vadd.f32 %v2531, %v575
    %v2725 = vadd.f32 %v2564, %v575
    %v2726 = vadd.f32 %v2594, %v575
    %v2727 = vadd.f32 %v2624, %v575
    %v2728 = vadd.f32 %v2646, %v575
    %v2729 = vadd.f32 %v2673, %v575
    %v2730 = vadd.f32 %v2697, %v575
    %v2731 = vadd.f32 %v2721, %v575
    %v2732 = vsel %vm1120, %v2724, -inf
    %2733 = vmax.xlane.f32.xlu0 %v2732
    %v2734 = vpop.xlane.xlu0 %2733
    %v2735 = vsel %vm1120, %v2725, -inf
    %2736 = vmax.xlane.f32.xlu0 %v2735
    %v2737 = vpop.xlane.xlu0 %2736
    %v2738 = vsel %vm1120, %v2726, -inf
    %2739 = vmax.xlane.f32.xlu0 %v2738
    %v2740 = vpop.xlane.xlu0 %2739
    %v2741 = vsel %vm1120, %v2727, -inf
    %2742 = vmax.xlane.f32.xlu0 %v2741
    %v2743 = vpop.xlane.xlu0 %2742
    %v2744 = vsel %vm1120, %v2728, -inf
    %2745 = vmax.xlane.f32.xlu0 %v2744
    %v2746 = vpop.xlane.xlu0 %2745
    %v2747 = vsel %vm1120, %v2729, -inf
    %2748 = vmax.xlane.f32.xlu0 %v2747
    %v2749 = vpop.xlane.xlu0 %2748
    %v2750 = vsel %vm1120, %v2730, -inf
    %2751 = vmax.xlane.f32.xlu0 %v2750
    %v2752 = vpop.xlane.xlu0 %2751
    %v2753 = vsel %vm1120, %v2731, -inf
    %2754 = vmax.xlane.f32.xlu0 %v2753
    %v2755 = vpop.xlane.xlu0 %2754
    %v2756 = vsub.f32 %v2724, %v2734
    %v2757 = vsub.f32 %v2725, %v2737
    %v2758 = vsub.f32 %v2726, %v2740
    %v2759 = vsub.f32 %v2727, %v2743
    %v2760 = vsub.f32 %v2728, %v2746
    %v2761 = vsub.f32 %v2729, %v2749
    %v2762 = vsub.f32 %v2730, %v2752
    %v2763 = vsub.f32 %v2731, %v2755
    %v2764 = vmul.f32 %v2756, 1.442695
    %v2765 = vpow.pop %v2764
    %v2766 = vmul.f32 %v2757, 1.442695
    %v2767 = vpow.pop %v2766
    %v2768 = vmul.f32 %v2758, 1.442695
    %v2769 = vpow.pop %v2768
    %v2770 = vmul.f32 %v2759, 1.442695
    %v2771 = vpow.pop %v2770
    %v2772 = vmul.f32 %v2760, 1.442695
    %v2773 = vpow.pop %v2772
    %v2774 = vmul.f32 %v2761, 1.442695
    %v2775 = vpow.pop %v2774
    %v2776 = vmul.f32 %v2762, 1.442695
    %v2777 = vpow.pop %v2776
    %v2778 = vmul.f32 %v2763, 1.442695
    %v2779 = vpow.pop %v2778
    %v2780 = vsel %vm1120, %v2765, 0.0
    %2781 = vadd.xlane.f32.xlu0 %v2780
    %v2782 = vpop.xlane.xlu0 %2781
    %v2783 = vsel %vm1120, %v2767, 0.0
    %2784 = vadd.xlane.f32.xlu0 %v2783
    %v2785 = vpop.xlane.xlu0 %2784
    %v2786 = vsel %vm1120, %v2769, 0.0
    %2787 = vadd.xlane.f32.xlu0 %v2786
    %v2788 = vpop.xlane.xlu0 %2787
    %v2789 = vsel %vm1120, %v2771, 0.0
    %2790 = vadd.xlane.f32.xlu0 %v2789
    %v2791 = vpop.xlane.xlu0 %2790
    %v2792 = vsel %vm1120, %v2773, 0.0
    %2793 = vadd.xlane.f32.xlu0 %v2792
    %v2794 = vpop.xlane.xlu0 %2793
    %v2795 = vsel %vm1120, %v2775, 0.0
    %2796 = vadd.xlane.f32.xlu0 %v2795
    %v2797 = vpop.xlane.xlu0 %2796
    %v2798 = vsel %vm1120, %v2777, 0.0
    %2799 = vadd.xlane.f32.xlu0 %v2798
    %v2800 = vpop.xlane.xlu0 %2799
    %v2801 = vsel %vm1120, %v2779, 0.0
    %2802 = vadd.xlane.f32.xlu0 %v2801
    %v2803 = vpop.xlane.xlu0 %2802
    %v2804 = vrcp.pop %v2782
    %v2805 = vrcp.pop %v2785
    %v2806 = vrcp.pop %v2788
    %v2807 = vrcp.pop %v2791
    %v2808 = vrcp.pop %v2794
    %v2809 = vrcp.pop %v2797
    %v2810 = vrcp.pop %v2800
    %v2811 = vrcp.pop %v2803
    %v2812 = vmul.f32 %v2765, %v2804
    %v2813 = vmul.f32 %v2767, %v2805
    %v2814 = vmul.f32 %v2769, %v2806
    %v2815 = vmul.f32 %v2771, %v2807
    %v2816 = vmul.f32 %v2773, %v2808
    %v2817 = vmul.f32 %v2775, %v2809
    %v2818 = vmul.f32 %v2777, %v2810
    %v2819 = vmul.f32 %v2779, %v2811
    %v2820 = vpack.c.bf16 %v2812, %v2812
    %v2821 = vpack.c.bf16 %v2813, %v2813
    %v2822 = vpack.c.bf16 %v2814, %v2814
    %v2823 = vpack.c.bf16 %v2815, %v2815
    %v2824 = vpack.c.bf16 %v2816, %v2816
    %v2825 = vpack.c.bf16 %v2817, %v2817
    %v2826 = vpack.c.bf16 %v2818, %v2818
    %v2827 = vpack.c.bf16 %v2819, %v2819
    %v2829 = vsel %vm1120, %v2820, 0
    %v2832 = vsel %vm1220, %v2456, 0
    %2834 = vmatpush.bf16.msra.mxu0 0
    %2835 = vmatpush.bf16.msra.mxu0 0
    %2836 = vmatpush.bf16.msra.mxu0 0
    %2837 = vmatpush.bf16.msra.mxu0 0
    %2838 = vmatpush.bf16.msra.mxu0 0
    %2839 = vmatpush.bf16.msra.mxu0 0
    %2840 = vmatpush.bf16.msra.mxu0 0
    %2841 = vmatpush.bf16.msra.mxu0 %v2832
    %2842 = vmatmul.bf16.gmra.mxu0 %v2829
    %v2843 = vpop.f32.mrf.mxu0
    %v2844 = vadd.f32 0.0, %v2843
    %v2845 = vpop.f32.mrf.mxu0
    %2846 = vdwg.mxu0
    %v2848 = vunpack.c.l.b16 %v2456
    %v2849 = vpack.c.b16 %v2848, %v2848
    %2850 = vrot.lane.b32.xlu0 %v2849, 96
    %v2851 = vpop.permute.xlu0 %2850
    %v2853 = vsel %vm1120, %v2821, 0
    %v2856 = vsel %vm1220, %v2851, 0
    %2858 = vmatpush.bf16.msra.mxu0 0
    %2859 = vmatpush.bf16.msra.mxu0 0
    %2860 = vmatpush.bf16.msra.mxu0 0
    %2861 = vmatpush.bf16.msra.mxu0 0
    %2862 = vmatpush.bf16.msra.mxu0 0
    %2863 = vmatpush.bf16.msra.mxu0 0
    %2864 = vmatpush.bf16.msra.mxu0 0
    %2865 = vmatpush.bf16.msra.mxu0 %v2856
    %2866 = vmatmul.bf16.gmra.mxu0 %v2853
    %v2867 = vpop.f32.mrf.mxu0
    %v2868 = vadd.f32 0.0, %v2867
    %v2869 = vpop.f32.mrf.mxu0
    %2870 = vdwg.mxu0
    %2871 = vrot.lane.b32.xlu0 %v2849, 64
    %v2872 = vpop.permute.xlu0 %2871
    %v2874 = vsel %vm1120, %v2822, 0
    %v2877 = vsel %vm1220, %v2872, 0
    %2879 = vmatpush.bf16.msra.mxu0 0
    %2880 = vmatpush.bf16.msra.mxu0 0
    %2881 = vmatpush.bf16.msra.mxu0 0
    %2882 = vmatpush.bf16.msra.mxu0 0
    %2883 = vmatpush.bf16.msra.mxu0 0
    %2884 = vmatpush.bf16.msra.mxu0 0
    %2885 = vmatpush.bf16.msra.mxu0 0
    %2886 = vmatpush.bf16.msra.mxu0 %v2877
    %2887 = vmatmul.bf16.gmra.mxu0 %v2874
    %v2888 = vpop.f32.mrf.mxu0
    %v2889 = vadd.f32 0.0, %v2888
    %v2890 = vpop.f32.mrf.mxu0
    %2891 = vdwg.mxu0
    %2892 = vrot.lane.b32.xlu0 %v2849, 32
    %v2893 = vpop.permute.xlu0 %2892
    %v2895 = vsel %vm1120, %v2823, 0
    %v2898 = vsel %vm1220, %v2893, 0
    %2900 = vmatpush.bf16.msra.mxu0 0
    %2901 = vmatpush.bf16.msra.mxu0 0
    %2902 = vmatpush.bf16.msra.mxu0 0
    %2903 = vmatpush.bf16.msra.mxu0 0
    %2904 = vmatpush.bf16.msra.mxu0 0
    %2905 = vmatpush.bf16.msra.mxu0 0
    %2906 = vmatpush.bf16.msra.mxu0 0
    %2907 = vmatpush.bf16.msra.mxu0 %v2898
    %2908 = vmatmul.bf16.gmra.mxu0 %v2895
    %v2909 = vpop.f32.mrf.mxu0
    %v2910 = vadd.f32 0.0, %v2909
    %v2911 = vpop.f32.mrf.mxu0
    %2912 = vdwg.mxu0
    %2914 = vrot.lane.b32.xlu0 %v2868, 32
    %v2915 = vpop.permute.xlu0 %2914
    %2918 = vrot.lane.b32.xlu0 %v2889, 64
    %v2919 = vpop.permute.xlu0 %2918
    %2922 = vrot.lane.b32.xlu0 %v2910, 96
    %v2923 = vpop.permute.xlu0 %2922
    %v2925 = vsel %vm905, %v2844, %v2915
    %v2926 = vsel %vm1316, %v2925, %v2919
    %v2927 = vsel %vm1318, %v2926, %v2923
    %v2929 = vsel %vm1120, %v2824, 0
    %v2932 = vsel %vm1220, %v2457, 0
    %2934 = vmatpush.bf16.msra.mxu0 0
    %2935 = vmatpush.bf16.msra.mxu0 0
    %2936 = vmatpush.bf16.msra.mxu0 0
    %2937 = vmatpush.bf16.msra.mxu0 0
    %2938 = vmatpush.bf16.msra.mxu0 0
    %2939 = vmatpush.bf16.msra.mxu0 0
    %2940 = vmatpush.bf16.msra.mxu0 0
    %2941 = vmatpush.bf16.msra.mxu0 %v2932
    %2942 = vmatmul.bf16.gmra.mxu0 %v2929
    %v2943 = vpop.f32.mrf.mxu0
    %v2944 = vadd.f32 0.0, %v2943
    %v2945 = vpop.f32.mrf.mxu0
    %2946 = vdwg.mxu0
    %v2948 = vunpack.c.l.b16 %v2457
    %v2949 = vpack.c.b16 %v2948, %v2948
    %2950 = vrot.lane.b32.xlu0 %v2949, 96
    %v2951 = vpop.permute.xlu0 %2950
    %v2953 = vsel %vm1120, %v2825, 0
    %v2956 = vsel %vm1220, %v2951, 0
    %2958 = vmatpush.bf16.msra.mxu0 0
    %2959 = vmatpush.bf16.msra.mxu0 0
    %2960 = vmatpush.bf16.msra.mxu0 0
    %2961 = vmatpush.bf16.msra.mxu0 0
    %2962 = vmatpush.bf16.msra.mxu0 0
    %2963 = vmatpush.bf16.msra.mxu0 0
    %2964 = vmatpush.bf16.msra.mxu0 0
    %2965 = vmatpush.bf16.msra.mxu0 %v2956
    %2966 = vmatmul.bf16.gmra.mxu0 %v2953
    %v2967 = vpop.f32.mrf.mxu0
    %v2968 = vadd.f32 0.0, %v2967
    %v2969 = vpop.f32.mrf.mxu0
    %2970 = vdwg.mxu0
    %2971 = vrot.lane.b32.xlu0 %v2949, 64
    %v2972 = vpop.permute.xlu0 %2971
    %v2974 = vsel %vm1120, %v2826, 0
    %v2977 = vsel %vm1220, %v2972, 0
    %2979 = vmatpush.bf16.msra.mxu0 0
    %2980 = vmatpush.bf16.msra.mxu0 0
    %2981 = vmatpush.bf16.msra.mxu0 0
    %2982 = vmatpush.bf16.msra.mxu0 0
    %2983 = vmatpush.bf16.msra.mxu0 0
    %2984 = vmatpush.bf16.msra.mxu0 0
    %2985 = vmatpush.bf16.msra.mxu0 0
    %2986 = vmatpush.bf16.msra.mxu0 %v2977
    %2987 = vmatmul.bf16.gmra.mxu0 %v2974
    %v2988 = vpop.f32.mrf.mxu0
    %v2989 = vadd.f32 0.0, %v2988
    %v2990 = vpop.f32.mrf.mxu0
    %2991 = vdwg.mxu0
    %2992 = vrot.lane.b32.xlu0 %v2949, 32
    %v2993 = vpop.permute.xlu0 %2992
    %v2995 = vsel %vm1120, %v2827, 0
    %v2998 = vsel %vm1220, %v2993, 0
    %3000 = vmatpush.bf16.msra.mxu0 0
    %3001 = vmatpush.bf16.msra.mxu0 0
    %3002 = vmatpush.bf16.msra.mxu0 0
    %3003 = vmatpush.bf16.msra.mxu0 0
    %3004 = vmatpush.bf16.msra.mxu0 0
    %3005 = vmatpush.bf16.msra.mxu0 0
    %3006 = vmatpush.bf16.msra.mxu0 0
    %3007 = vmatpush.bf16.msra.mxu0 %v2998
    %3008 = vmatmul.bf16.gmra.mxu0 %v2995
    %v3009 = vpop.f32.mrf.mxu0
    %v3010 = vadd.f32 0.0, %v3009
    %v3011 = vpop.f32.mrf.mxu0
    %3012 = vdwg.mxu0
    %3014 = vrot.lane.b32.xlu0 %v2968, 32
    %v3015 = vpop.permute.xlu0 %3014
    %3018 = vrot.lane.b32.xlu0 %v2989, 64
    %v3019 = vpop.permute.xlu0 %3018
    %3022 = vrot.lane.b32.xlu0 %v3010, 96
    %v3023 = vpop.permute.xlu0 %3022
    %v3025 = vsel %vm905, %v2944, %v3015
    %v3026 = vsel %vm1316, %v3025, %v3019
    %v3027 = vsel %vm1318, %v3026, %v3023
    %v3028 = vpack.c.bf16 %v3027, %v2927
    %s3029 = scalar_lea.vmem %s4, 64
    %v3030 = vld [vmem:[%s3029] sm:$0xf]
    %v3031 = vld [vmem:[%s3029 + $0x4] sm:$0xf]
    %v3032 = vld [vmem:[%s3029 + $0x8] sm:$0xf]
    %v3033 = vld [vmem:[%s3029 + $0xc] sm:$0xf]
    %v3034 = vld [vmem:[%s3029 + $0x10] sm:$0xf]
    %v3035 = vld [vmem:[%s3029 + $0x14] sm:$0xf]
    %v3036 = vld [vmem:[%s3029 + $0x18] sm:$0xf]
    %v3037 = vld [vmem:[%s3029 + $0x1c] sm:$0xf]
    %v3038 = vld [vmem:[%s3029 + $0x20] sm:$0xf]
    %v3039 = vld [vmem:[%s3029 + $0x24] sm:$0xf]
    %v3040 = vld [vmem:[%s3029 + $0x28] sm:$0xf]
    %v3041 = vld [vmem:[%s3029 + $0x2c] sm:$0xf]
    %v3042 = vld [vmem:[%s3029 + $0x30] sm:$0xf]
    %v3043 = vld [vmem:[%s3029 + $0x34] sm:$0xf]
    %v3044 = vld [vmem:[%s3029 + $0x38] sm:$0xf]
    %v3045 = vld [vmem:[%s3029 + $0x3c] sm:$0xf]
    %v3062 = vunpack.c.l.b16 %v3030
    %v3063 = vunpack.c.l.b16 %v3031
    %v3064 = vunpack.c.l.b16 %v3032
    %v3065 = vunpack.c.l.b16 %v3033
    %v3066 = vunpack.c.l.b16 %v3034
    %v3067 = vunpack.c.l.b16 %v3035
    %v3068 = vunpack.c.l.b16 %v3036
    %v3069 = vunpack.c.l.b16 %v3037
    %v3070 = vunpack.c.l.b16 %v3038
    %v3071 = vunpack.c.l.b16 %v3039
    %v3072 = vunpack.c.l.b16 %v3040
    %v3073 = vunpack.c.l.b16 %v3041
    %v3074 = vunpack.c.l.b16 %v3042
    %v3075 = vunpack.c.l.b16 %v3043
    %v3076 = vunpack.c.l.b16 %v3044
    %v3077 = vunpack.c.l.b16 %v3045
    %v3078 = vpack.c.b16 %v3063, %v3062
    %v3079 = vpack.c.b16 %v3065, %v3064
    %v3080 = vpack.c.b16 %v3067, %v3066
    %v3081 = vpack.c.b16 %v3069, %v3068
    %v3082 = vpack.c.b16 %v3071, %v3070
    %v3083 = vpack.c.b16 %v3073, %v3072
    %v3084 = vpack.c.b16 %v3075, %v3074
    %v3085 = vpack.c.b16 %v3077, %v3076
    %3094 = vmatpush.bf16.msra.mxu0 %v3085
    %3095 = vmatpush.bf16.msra.mxu0 %v3084
    %3096 = vmatpush.bf16.msra.mxu0 %v3083
    %3097 = vmatpush.bf16.msra.mxu0 %v3082
    %3098 = vmatpush.bf16.msra.mxu0 %v3081
    %3099 = vmatpush.bf16.msra.mxu0 %v3080
    %3100 = vmatpush.bf16.msra.mxu0 %v3079
    %3101 = vmatpush.bf16.msra.mxu0 %v3078
    %3102 = vmatmul.bf16.gmra.mxu0 %v3028
    %v3103 = vpop.f32.mrf.mxu0
    %v3104 = vadd.f32 0.0, %v3103
    %v3105 = vpop.f32.mrf.mxu0
    %v3106 = vadd.f32 0.0, %v3105
    %3107 = vdwg.mxu0
    %v3108 = vadd.f32 %v2192, %v3104
    %v3109 = vadd.f32 %v2193, %v3106
    %v3110 = vperm.slane %v2195, 4
    %v3111 = vadd.f32 %v3108, %v3110
    %v3112 = vadd.f32 %v3109, %v3110
    %3113 = vadd.xlane.f32.xlu0 %v3111
    %v3114 = vpop.xlane.xlu0 %3113
    %3115 = vadd.xlane.f32.xlu0 %v3112
    %v3116 = vpop.xlane.xlu0 %3115
    %v3117 = vmul.f32 %v3114, %v590
    %v3118 = vmul.f32 %v3116, %v590
    %v3119 = vsub.f32 %v3111, %v3117
    %v3120 = vsub.f32 %v3112, %v3118
    %v3121 = vmul.f32 %v3119, %v3119
    %v3122 = vmul.f32 %v3120, %v3120
    %3123 = vadd.xlane.f32.xlu0 %v3121
    %v3124 = vpop.xlane.xlu0 %3123
    %3125 = vadd.xlane.f32.xlu0 %v3122
    %v3126 = vpop.xlane.xlu0 %3125
    %v3127 = vmul.f32 %v3124, %v590
    %v3128 = vmul.f32 %v3126, %v590
    %v3129 = vadd.f32 %v3127, 1e-06
    %v3130 = vadd.f32 %v3128, 1e-06
    %v3131 = vrsqrt.pop %v3129
    %v3132 = vmul.f32 %v3131, %v3129
    %v3133 = vmul.f32 %v3132, %v3131
    %v3134 = vmul.f32 0.5, %v3133
    %v3135 = vsub.f32 1.5, %v3134
    %v3136 = vmul.f32 %v3131, %v3135
    %vm3137 = vweird.f32 %v3129
    %vm3138 = vweird.f32 %v3131
    %vm3139 = vmor %vm3137, %vm3138
    %v3140 = vsel %vm3139, %v3131, %v3136
    %v3141 = vrsqrt.pop %v3130
    %v3142 = vmul.f32 %v3141, %v3130
    %v3143 = vmul.f32 %v3142, %v3141
    %v3144 = vmul.f32 0.5, %v3143
    %v3145 = vsub.f32 1.5, %v3144
    %v3146 = vmul.f32 %v3141, %v3145
    %vm3147 = vweird.f32 %v3130
    %vm3148 = vweird.f32 %v3141
    %vm3149 = vmor %vm3147, %vm3148
    %v3150 = vsel %vm3149, %v3141, %v3146
    %v3151 = vmul.f32 %v3119, %v3140
    %v3152 = vmul.f32 %v3120, %v3150
    %v3153 = vperm.slane %v2195, 2
    %v3154 = vmul.f32 %v3151, %v3153
    %v3155 = vmul.f32 %v3152, %v3153
    %v3156 = vperm.slane %v2195, 3
    %v3157 = vadd.f32 %v3154, %v3156
    %v3158 = vadd.f32 %v3155, %v3156
    %v3159 = vpack.c.bf16 %v3158, %v3157
    %s3160 = scalar_lea.vmem %s5, 256
    %v3161 = vld [vmem:[%s3160] sm:$0xff]
    %v3162 = vld [vmem:[%s3160 + $0x8] sm:$0xff]
    %v3163 = vld [vmem:[%s3160 + $0x10] sm:$0xff]
    %v3164 = vld [vmem:[%s3160 + $0x18] sm:$0xff]
    %v3165 = vld [vmem:[%s3160 + $0x20] sm:$0xff]
    %v3166 = vld [vmem:[%s3160 + $0x28] sm:$0xff]
    %v3167 = vld [vmem:[%s3160 + $0x30] sm:$0xff]
    %v3168 = vld [vmem:[%s3160 + $0x38] sm:$0xff]
    %v3169 = vld [vmem:[%s3160 + $0x40] sm:$0xff]
    %v3170 = vld [vmem:[%s3160 + $0x48] sm:$0xff]
    %v3171 = vld [vmem:[%s3160 + $0x50] sm:$0xff]
    %v3172 = vld [vmem:[%s3160 + $0x58] sm:$0xff]
    %v3173 = vld [vmem:[%s3160 + $0x60] sm:$0xff]
    %v3174 = vld [vmem:[%s3160 + $0x68] sm:$0xff]
    %v3175 = vld [vmem:[%s3160 + $0x70] sm:$0xff]
    %v3176 = vld [vmem:[%s3160 + $0x78] sm:$0xff]
    %v3177 = vld [vmem:[%s3160 + $0x80] sm:$0xff]
    %v3178 = vld [vmem:[%s3160 + $0x88] sm:$0xff]
    %v3179 = vld [vmem:[%s3160 + $0x90] sm:$0xff]
    %v3180 = vld [vmem:[%s3160 + $0x98] sm:$0xff]
    %v3181 = vld [vmem:[%s3160 + $0xa0] sm:$0xff]
    %v3182 = vld [vmem:[%s3160 + $0xa8] sm:$0xff]
    %v3183 = vld [vmem:[%s3160 + $0xb0] sm:$0xff]
    %v3184 = vld [vmem:[%s3160 + $0xb8] sm:$0xff]
    %v3185 = vld [vmem:[%s3160 + $0xc0] sm:$0xff]
    %v3186 = vld [vmem:[%s3160 + $0xc8] sm:$0xff]
    %v3187 = vld [vmem:[%s3160 + $0xd0] sm:$0xff]
    %v3188 = vld [vmem:[%s3160 + $0xd8] sm:$0xff]
    %v3189 = vld [vmem:[%s3160 + $0xe0] sm:$0xff]
    %v3190 = vld [vmem:[%s3160 + $0xe8] sm:$0xff]
    %v3191 = vld [vmem:[%s3160 + $0xf0] sm:$0xff]
    %v3192 = vld [vmem:[%s3160 + $0xf8] sm:$0xff]
    %v3193 = vperm.slane %v2195, 7
    %v3194 = vperm.slane %v2196, 7
    %v3195 = vperm.slane %v2197, 7
    %v3196 = vperm.slane %v2198, 7
    %v3229 = vunpack.c.l.b16 %v3161
    %v3230 = vunpack.c.h.b16 %v3161
    %v3231 = vunpack.c.l.b16 %v3162
    %v3232 = vunpack.c.h.b16 %v3162
    %v3233 = vunpack.c.l.b16 %v3163
    %v3234 = vunpack.c.h.b16 %v3163
    %v3235 = vunpack.c.l.b16 %v3164
    %v3236 = vunpack.c.h.b16 %v3164
    %v3237 = vunpack.c.l.b16 %v3165
    %v3238 = vunpack.c.h.b16 %v3165
    %v3239 = vunpack.c.l.b16 %v3166
    %v3240 = vunpack.c.h.b16 %v3166
    %v3241 = vunpack.c.l.b16 %v3167
    %v3242 = vunpack.c.h.b16 %v3167
    %v3243 = vunpack.c.l.b16 %v3168
    %v3244 = vunpack.c.h.b16 %v3168
    %v3245 = vunpack.c.l.b16 %v3169
    %v3246 = vunpack.c.h.b16 %v3169
    %v3247 = vunpack.c.l.b16 %v3170
    %v3248 = vunpack.c.h.b16 %v3170
    %v3249 = vunpack.c.l.b16 %v3171
    %v3250 = vunpack.c.h.b16 %v3171
    %v3251 = vunpack.c.l.b16 %v3172
    %v3252 = vunpack.c.h.b16 %v3172
    %v3253 = vunpack.c.l.b16 %v3173
    %v3254 = vunpack.c.h.b16 %v3173
    %v3255 = vunpack.c.l.b16 %v3174
    %v3256 = vunpack.c.h.b16 %v3174
    %v3257 = vunpack.c.l.b16 %v3175
    %v3258 = vunpack.c.h.b16 %v3175
    %v3259 = vunpack.c.l.b16 %v3176
    %v3260 = vunpack.c.h.b16 %v3176
    %v3261 = vunpack.c.l.b16 %v3177
    %v3262 = vunpack.c.h.b16 %v3177
    %v3263 = vunpack.c.l.b16 %v3178
    %v3264 = vunpack.c.h.b16 %v3178
    %v3265 = vunpack.c.l.b16 %v3179
    %v3266 = vunpack.c.h.b16 %v3179
    %v3267 = vunpack.c.l.b16 %v3180
    %v3268 = vunpack.c.h.b16 %v3180
    %v3269 = vunpack.c.l.b16 %v3181
    %v3270 = vunpack.c.h.b16 %v3181
    %v3271 = vunpack.c.l.b16 %v3182
    %v3272 = vunpack.c.h.b16 %v3182
    %v3273 = vunpack.c.l.b16 %v3183
    %v3274 = vunpack.c.h.b16 %v3183
    %v3275 = vunpack.c.l.b16 %v3184
    %v3276 = vunpack.c.h.b16 %v3184
    %v3277 = vunpack.c.l.b16 %v3185
    %v3278 = vunpack.c.h.b16 %v3185
    %v3279 = vunpack.c.l.b16 %v3186
    %v3280 = vunpack.c.h.b16 %v3186
    %v3281 = vunpack.c.l.b16 %v3187
    %v3282 = vunpack.c.h.b16 %v3187
    %v3283 = vunpack.c.l.b16 %v3188
    %v3284 = vunpack.c.h.b16 %v3188
    %v3285 = vunpack.c.l.b16 %v3189
    %v3286 = vunpack.c.h.b16 %v3189
    %v3287 = vunpack.c.l.b16 %v3190
    %v3288 = vunpack.c.h.b16 %v3190
    %v3289 = vunpack.c.l.b16 %v3191
    %v3290 = vunpack.c.h.b16 %v3191
    %v3291 = vunpack.c.l.b16 %v3192
    %v3292 = vunpack.c.h.b16 %v3192
    %v3293 = vpack.c.b16 %v3233, %v3229
    %v3294 = vpack.c.b16 %v3234, %v3230
    %v3295 = vpack.c.b16 %v3235, %v3231
    %v3296 = vpack.c.b16 %v3236, %v3232
    %v3297 = vpack.c.b16 %v3241, %v3237
    %v3298 = vpack.c.b16 %v3242, %v3238
    %v3299 = vpack.c.b16 %v3243, %v3239
    %v3300 = vpack.c.b16 %v3244, %v3240
    %v3301 = vpack.c.b16 %v3249, %v3245
    %v3302 = vpack.c.b16 %v3250, %v3246
    %v3303 = vpack.c.b16 %v3251, %v3247
    %v3304 = vpack.c.b16 %v3252, %v3248
    %v3305 = vpack.c.b16 %v3257, %v3253
    %v3306 = vpack.c.b16 %v3258, %v3254
    %v3307 = vpack.c.b16 %v3259, %v3255
    %v3308 = vpack.c.b16 %v3260, %v3256
    %v3309 = vpack.c.b16 %v3265, %v3261
    %v3310 = vpack.c.b16 %v3266, %v3262
    %v3311 = vpack.c.b16 %v3267, %v3263
    %v3312 = vpack.c.b16 %v3268, %v3264
    %v3313 = vpack.c.b16 %v3273, %v3269
    %v3314 = vpack.c.b16 %v3274, %v3270
    %v3315 = vpack.c.b16 %v3275, %v3271
    %v3316 = vpack.c.b16 %v3276, %v3272
    %v3317 = vpack.c.b16 %v3281, %v3277
    %v3318 = vpack.c.b16 %v3282, %v3278
    %v3319 = vpack.c.b16 %v3283, %v3279
    %v3320 = vpack.c.b16 %v3284, %v3280
    %v3321 = vpack.c.b16 %v3289, %v3285
    %v3322 = vpack.c.b16 %v3290, %v3286
    %v3323 = vpack.c.b16 %v3291, %v3287
    %v3324 = vpack.c.b16 %v3292, %v3288
    %3357 = vmatpush.bf16.msra.mxu0 %v3321
    %3358 = vmatpush.bf16.msra.mxu0 %v3317
    %3359 = vmatpush.bf16.msra.mxu0 %v3313
    %3360 = vmatpush.bf16.msra.mxu0 %v3309
    %3361 = vmatpush.bf16.msra.mxu0 %v3305
    %3362 = vmatpush.bf16.msra.mxu0 %v3301
    %3363 = vmatpush.bf16.msra.mxu0 %v3297
    %3364 = vmatpush.bf16.msra.mxu0 %v3293
    %3365 = vmatmul.bf16.gmra.mxu0 %v3159
    %v3366 = vpop.f32.mrf.mxu0
    %v3367 = vadd.f32 %v3193, %v3366
    %v3368 = vpop.f32.mrf.mxu0
    %v3369 = vadd.f32 %v3193, %v3368
    %3370 = vdwg.mxu0
    %3371 = vmatpush.bf16.msra.mxu0 %v3322
    %3372 = vmatpush.bf16.msra.mxu0 %v3318
    %3373 = vmatpush.bf16.msra.mxu0 %v3314
    %3374 = vmatpush.bf16.msra.mxu0 %v3310
    %3375 = vmatpush.bf16.msra.mxu0 %v3306
    %3376 = vmatpush.bf16.msra.mxu0 %v3302
    %3377 = vmatpush.bf16.msra.mxu0 %v3298
    %3378 = vmatpush.bf16.msra.mxu0 %v3294
    %3379 = vmatmul.bf16.gmra.mxu0 %v3159
    %v3380 = vpop.f32.mrf.mxu0
    %v3381 = vadd.f32 %v3194, %v3380
    %v3382 = vpop.f32.mrf.mxu0
    %v3383 = vadd.f32 %v3194, %v3382
    %3384 = vdwg.mxu0
    %3385 = vmatpush.bf16.msra.mxu0 %v3323
    %3386 = vmatpush.bf16.msra.mxu0 %v3319
    %3387 = vmatpush.bf16.msra.mxu0 %v3315
    %3388 = vmatpush.bf16.msra.mxu0 %v3311
    %3389 = vmatpush.bf16.msra.mxu0 %v3307
    %3390 = vmatpush.bf16.msra.mxu0 %v3303
    %3391 = vmatpush.bf16.msra.mxu0 %v3299
    %3392 = vmatpush.bf16.msra.mxu0 %v3295
    %3393 = vmatmul.bf16.gmra.mxu0 %v3159
    %v3394 = vpop.f32.mrf.mxu0
    %v3395 = vadd.f32 %v3195, %v3394
    %v3396 = vpop.f32.mrf.mxu0
    %v3397 = vadd.f32 %v3195, %v3396
    %3398 = vdwg.mxu0
    %3399 = vmatpush.bf16.msra.mxu0 %v3324
    %3400 = vmatpush.bf16.msra.mxu0 %v3320
    %3401 = vmatpush.bf16.msra.mxu0 %v3316
    %3402 = vmatpush.bf16.msra.mxu0 %v3312
    %3403 = vmatpush.bf16.msra.mxu0 %v3308
    %3404 = vmatpush.bf16.msra.mxu0 %v3304
    %3405 = vmatpush.bf16.msra.mxu0 %v3300
    %3406 = vmatpush.bf16.msra.mxu0 %v3296
    %3407 = vmatmul.bf16.gmra.mxu0 %v3159
    %v3408 = vpop.f32.mrf.mxu0
    %v3409 = vadd.f32 %v3196, %v3408
    %v3410 = vpop.f32.mrf.mxu0
    %v3411 = vadd.f32 %v3196, %v3410
    %3412 = vdwg.mxu0
    %v3413 = vmul.f32 %v3367, %v3367
    %v3414 = vmul.f32 %v3381, %v3381
    %v3415 = vmul.f32 %v3395, %v3395
    %v3416 = vmul.f32 %v3409, %v3409
    %v3417 = vmul.f32 %v3369, %v3369
    %v3418 = vmul.f32 %v3383, %v3383
    %v3419 = vmul.f32 %v3397, %v3397
    %v3420 = vmul.f32 %v3411, %v3411
    %v3421 = vmul.f32 %v3367, %v3413
    %v3422 = vmul.f32 %v3381, %v3414
    %v3423 = vmul.f32 %v3395, %v3415
    %v3424 = vmul.f32 %v3409, %v3416
    %v3425 = vmul.f32 %v3369, %v3417
    %v3426 = vmul.f32 %v3383, %v3418
    %v3427 = vmul.f32 %v3397, %v3419
    %v3428 = vmul.f32 %v3411, %v3420
    %v3429 = vmul.f32 %v3421, 0.044715
    %v3430 = vmul.f32 %v3422, 0.044715
    %v3431 = vmul.f32 %v3423, 0.044715
    %v3432 = vmul.f32 %v3424, 0.044715
    %v3433 = vmul.f32 %v3425, 0.044715
    %v3434 = vmul.f32 %v3426, 0.044715
    %v3435 = vmul.f32 %v3427, 0.044715
    %v3436 = vmul.f32 %v3428, 0.044715
    %v3437 = vadd.f32 %v3367, %v3429
    %v3438 = vadd.f32 %v3381, %v3430
    %v3439 = vadd.f32 %v3395, %v3431
    %v3440 = vadd.f32 %v3409, %v3432
    %v3441 = vadd.f32 %v3369, %v3433
    %v3442 = vadd.f32 %v3383, %v3434
    %v3443 = vadd.f32 %v3397, %v3435
    %v3444 = vadd.f32 %v3411, %v3436
    %v3445 = vmul.f32 %v3437, 0.7978846
    %v3446 = vmul.f32 %v3438, 0.7978846
    %v3447 = vmul.f32 %v3439, 0.7978846
    %v3448 = vmul.f32 %v3440, 0.7978846
    %v3449 = vmul.f32 %v3441, 0.7978846
    %v3450 = vmul.f32 %v3442, 0.7978846
    %v3451 = vmul.f32 %v3443, 0.7978846
    %v3452 = vmul.f32 %v3444, 0.7978846
    %v3453 = vtanh.pop %v3445
    %v3454 = vtanh.pop %v3446
    %v3455 = vtanh.pop %v3447
    %v3456 = vtanh.pop %v3448
    %v3457 = vtanh.pop %v3449
    %v3458 = vtanh.pop %v3450
    %v3459 = vtanh.pop %v3451
    %v3460 = vtanh.pop %v3452
    %v3461 = vadd.f32 %v3453, 1.0
    %v3462 = vadd.f32 %v3454, 1.0
    %v3463 = vadd.f32 %v3455, 1.0
    %v3464 = vadd.f32 %v3456, 1.0
    %v3465 = vadd.f32 %v3457, 1.0
    %v3466 = vadd.f32 %v3458, 1.0
    %v3467 = vadd.f32 %v3459, 1.0
    %v3468 = vadd.f32 %v3460, 1.0
    %v3469 = vmul.f32 %v3461, 0.5
    %v3470 = vmul.f32 %v3462, 0.5
    %v3471 = vmul.f32 %v3463, 0.5
    %v3472 = vmul.f32 %v3464, 0.5
    %v3473 = vmul.f32 %v3465, 0.5
    %v3474 = vmul.f32 %v3466, 0.5
    %v3475 = vmul.f32 %v3467, 0.5
    %v3476 = vmul.f32 %v3468, 0.5
    %v3477 = vmul.f32 %v3367, %v3469
    %v3478 = vmul.f32 %v3381, %v3470
    %v3479 = vmul.f32 %v3395, %v3471
    %v3480 = vmul.f32 %v3409, %v3472
    %v3481 = vmul.f32 %v3369, %v3473
    %v3482 = vmul.f32 %v3383, %v3474
    %v3483 = vmul.f32 %v3397, %v3475
    %v3484 = vmul.f32 %v3411, %v3476
    %v3485 = vpack.c.bf16 %v3481, %v3477
    %v3486 = vpack.c.bf16 %v3482, %v3478
    %v3487 = vpack.c.bf16 %v3483, %v3479
    %v3488 = vpack.c.bf16 %v3484, %v3480
    %s3489 = scalar_lea.vmem %s6, 256
    %v3490 = vld [vmem:[%s3489] sm:$0xf]
    %v3491 = vld [vmem:[%s3489 + $0x4] sm:$0xf]
    %v3492 = vld [vmem:[%s3489 + $0x8] sm:$0xf]
    %v3493 = vld [vmem:[%s3489 + $0xc] sm:$0xf]
    %v3494 = vld [vmem:[%s3489 + $0x10] sm:$0xf]
    %v3495 = vld [vmem:[%s3489 + $0x14] sm:$0xf]
    %v3496 = vld [vmem:[%s3489 + $0x18] sm:$0xf]
    %v3497 = vld [vmem:[%s3489 + $0x1c] sm:$0xf]
    %v3498 = vld [vmem:[%s3489 + $0x20] sm:$0xf]
    %v3499 = vld [vmem:[%s3489 + $0x24] sm:$0xf]
    %v3500 = vld [vmem:[%s3489 + $0x28] sm:$0xf]
    %v3501 = vld [vmem:[%s3489 + $0x2c] sm:$0xf]
    %v3502 = vld [vmem:[%s3489 + $0x30] sm:$0xf]
    %v3503 = vld [vmem:[%s3489 + $0x34] sm:$0xf]
    %v3504 = vld [vmem:[%s3489 + $0x38] sm:$0xf]
    %v3505 = vld [vmem:[%s3489 + $0x3c] sm:$0xf]
    %v3506 = vld [vmem:[%s3489 + $0x40] sm:$0xf]
    %v3507 = vld [vmem:[%s3489 + $0x44] sm:$0xf]
    %v3508 = vld [vmem:[%s3489 + $0x48] sm:$0xf]
    %v3509 = vld [vmem:[%s3489 + $0x4c] sm:$0xf]
    %v3510 = vld [vmem:[%s3489 + $0x50] sm:$0xf]
    %v3511 = vld [vmem:[%s3489 + $0x54] sm:$0xf]
    %v3512 = vld [vmem:[%s3489 + $0x58] sm:$0xf]
    %v3513 = vld [vmem:[%s3489 + $0x5c] sm:$0xf]
    %v3514 = vld [vmem:[%s3489 + $0x60] sm:$0xf]
    %v3515 = vld [vmem:[%s3489 + $0x64] sm:$0xf]
    %v3516 = vld [vmem:[%s3489 + $0x68] sm:$0xf]
    %v3517 = vld [vmem:[%s3489 + $0x6c] sm:$0xf]
    %v3518 = vld [vmem:[%s3489 + $0x70] sm:$0xf]
    %v3519 = vld [vmem:[%s3489 + $0x74] sm:$0xf]
    %v3520 = vld [vmem:[%s3489 + $0x78] sm:$0xf]
    %v3521 = vld [vmem:[%s3489 + $0x7c] sm:$0xf]
    %v3522 = vld [vmem:[%s3489 + $0x80] sm:$0xf]
    %v3523 = vld [vmem:[%s3489 + $0x84] sm:$0xf]
    %v3524 = vld [vmem:[%s3489 + $0x88] sm:$0xf]
    %v3525 = vld [vmem:[%s3489 + $0x8c] sm:$0xf]
    %v3526 = vld [vmem:[%s3489 + $0x90] sm:$0xf]
    %v3527 = vld [vmem:[%s3489 + $0x94] sm:$0xf]
    %v3528 = vld [vmem:[%s3489 + $0x98] sm:$0xf]
    %v3529 = vld [vmem:[%s3489 + $0x9c] sm:$0xf]
    %v3530 = vld [vmem:[%s3489 + $0xa0] sm:$0xf]
    %v3531 = vld [vmem:[%s3489 + $0xa4] sm:$0xf]
    %v3532 = vld [vmem:[%s3489 + $0xa8] sm:$0xf]
    %v3533 = vld [vmem:[%s3489 + $0xac] sm:$0xf]
    %v3534 = vld [vmem:[%s3489 + $0xb0] sm:$0xf]
    %v3535 = vld [vmem:[%s3489 + $0xb4] sm:$0xf]
    %v3536 = vld [vmem:[%s3489 + $0xb8] sm:$0xf]
    %v3537 = vld [vmem:[%s3489 + $0xbc] sm:$0xf]
    %v3538 = vld [vmem:[%s3489 + $0xc0] sm:$0xf]
    %v3539 = vld [vmem:[%s3489 + $0xc4] sm:$0xf]
    %v3540 = vld [vmem:[%s3489 + $0xc8] sm:$0xf]
    %v3541 = vld [vmem:[%s3489 + $0xcc] sm:$0xf]
    %v3542 = vld [vmem:[%s3489 + $0xd0] sm:$0xf]
    %v3543 = vld [vmem:[%s3489 + $0xd4] sm:$0xf]
    %v3544 = vld [vmem:[%s3489 + $0xd8] sm:$0xf]
    %v3545 = vld [vmem:[%s3489 + $0xdc] sm:$0xf]
    %v3546 = vld [vmem:[%s3489 + $0xe0] sm:$0xf]
    %v3547 = vld [vmem:[%s3489 + $0xe4] sm:$0xf]
    %v3548 = vld [vmem:[%s3489 + $0xe8] sm:$0xf]
    %v3549 = vld [vmem:[%s3489 + $0xec] sm:$0xf]
    %v3550 = vld [vmem:[%s3489 + $0xf0] sm:$0xf]
    %v3551 = vld [vmem:[%s3489 + $0xf4] sm:$0xf]
    %v3552 = vld [vmem:[%s3489 + $0xf8] sm:$0xf]
    %v3553 = vld [vmem:[%s3489 + $0xfc] sm:$0xf]
    %v3554 = vperm.slane %v2195, 5
    %v3619 = vunpack.c.l.b16 %v3490
    %v3620 = vunpack.c.l.b16 %v3491
    %v3621 = vunpack.c.l.b16 %v3492
    %v3622 = vunpack.c.l.b16 %v3493
    %v3623 = vunpack.c.l.b16 %v3494
    %v3624 = vunpack.c.l.b16 %v3495
    %v3625 = vunpack.c.l.b16 %v3496
    %v3626 = vunpack.c.l.b16 %v3497
    %v3627 = vunpack.c.l.b16 %v3498
    %v3628 = vunpack.c.l.b16 %v3499
    %v3629 = vunpack.c.l.b16 %v3500
    %v3630 = vunpack.c.l.b16 %v3501
    %v3631 = vunpack.c.l.b16 %v3502
    %v3632 = vunpack.c.l.b16 %v3503
    %v3633 = vunpack.c.l.b16 %v3504
    %v3634 = vunpack.c.l.b16 %v3505
    %v3635 = vunpack.c.l.b16 %v3506
    %v3636 = vunpack.c.l.b16 %v3507
    %v3637 = vunpack.c.l.b16 %v3508
    %v3638 = vunpack.c.l.b16 %v3509
    %v3639 = vunpack.c.l.b16 %v3510
    %v3640 = vunpack.c.l.b16 %v3511
    %v3641 = vunpack.c.l.b16 %v3512
    %v3642 = vunpack.c.l.b16 %v3513
    %v3643 = vunpack.c.l.b16 %v3514
    %v3644 = vunpack.c.l.b16 %v3515
    %v3645 = vunpack.c.l.b16 %v3516
    %v3646 = vunpack.c.l.b16 %v3517
    %v3647 = vunpack.c.l.b16 %v3518
    %v3648 = vunpack.c.l.b16 %v3519
    %v3649 = vunpack.c.l.b16 %v3520
    %v3650 = vunpack.c.l.b16 %v3521
    %v3651 = vunpack.c.l.b16 %v3522
    %v3652 = vunpack.c.l.b16 %v3523
    %v3653 = vunpack.c.l.b16 %v3524
    %v3654 = vunpack.c.l.b16 %v3525
    %v3655 = vunpack.c.l.b16 %v3526
    %v3656 = vunpack.c.l.b16 %v3527
    %v3657 = vunpack.c.l.b16 %v3528
    %v3658 = vunpack.c.l.b16 %v3529
    %v3659 = vunpack.c.l.b16 %v3530
    %v3660 = vunpack.c.l.b16 %v3531
    %v3661 = vunpack.c.l.b16 %v3532
    %v3662 = vunpack.c.l.b16 %v3533
    %v3663 = vunpack.c.l.b16 %v3534
    %v3664 = vunpack.c.l.b16 %v3535
    %v3665 = vunpack.c.l.b16 %v3536
    %v3666 = vunpack.c.l.b16 %v3537
    %v3667 = vunpack.c.l.b16 %v3538
    %v3668 = vunpack.c.l.b16 %v3539
    %v3669 = vunpack.c.l.b16 %v3540
    %v3670 = vunpack.c.l.b16 %v3541
    %v3671 = vunpack.c.l.b16 %v3542
    %v3672 = vunpack.c.l.b16 %v3543
    %v3673 = vunpack.c.l.b16 %v3544
    %v3674 = vunpack.c.l.b16 %v3545
    %v3675 = vunpack.c.l.b16 %v3546
    %v3676 = vunpack.c.l.b16 %v3547
    %v3677 = vunpack.c.l.b16 %v3548
    %v3678 = vunpack.c.l.b16 %v3549
    %v3679 = vunpack.c.l.b16 %v3550
    %v3680 = vunpack.c.l.b16 %v3551
    %v3681 = vunpack.c.l.b16 %v3552
    %v3682 = vunpack.c.l.b16 %v3553
    %v3683 = vpack.c.b16 %v3620, %v3619
    %v3684 = vpack.c.b16 %v3622, %v3621
    %v3685 = vpack.c.b16 %v3624, %v3623
    %v3686 = vpack.c.b16 %v3626, %v3625
    %v3687 = vpack.c.b16 %v3628, %v3627
    %v3688 = vpack.c.b16 %v3630, %v3629
    %v3689 = vpack.c.b16 %v3632, %v3631
    %v3690 = vpack.c.b16 %v3634, %v3633
    %v3691 = vpack.c.b16 %v3636, %v3635
    %v3692 = vpack.c.b16 %v3638, %v3637
    %v3693 = vpack.c.b16 %v3640, %v3639
    %v3694 = vpack.c.b16 %v3642, %v3641
    %v3695 = vpack.c.b16 %v3644, %v3643
    %v3696 = vpack.c.b16 %v3646, %v3645
    %v3697 = vpack.c.b16 %v3648, %v3647
    %v3698 = vpack.c.b16 %v3650, %v3649
    %v3699 = vpack.c.b16 %v3652, %v3651
    %v3700 = vpack.c.b16 %v3654, %v3653
    %v3701 = vpack.c.b16 %v3656, %v3655
    %v3702 = vpack.c.b16 %v3658, %v3657
    %v3703 = vpack.c.b16 %v3660, %v3659
    %v3704 = vpack.c.b16 %v3662, %v3661
    %v3705 = vpack.c.b16 %v3664, %v3663
    %v3706 = vpack.c.b16 %v3666, %v3665
    %v3707 = vpack.c.b16 %v3668, %v3667
    %v3708 = vpack.c.b16 %v3670, %v3669
    %v3709 = vpack.c.b16 %v3672, %v3671
    %v3710 = vpack.c.b16 %v3674, %v3673
    %v3711 = vpack.c.b16 %v3676, %v3675
    %v3712 = vpack.c.b16 %v3678, %v3677
    %v3713 = vpack.c.b16 %v3680, %v3679
    %v3714 = vpack.c.b16 %v3682, %v3681
    %3747 = vmatpush.bf16.msra.mxu0 %v3690
    %3748 = vmatpush.bf16.msra.mxu0 %v3689
    %3749 = vmatpush.bf16.msra.mxu0 %v3688
    %3750 = vmatpush.bf16.msra.mxu0 %v3687
    %3751 = vmatpush.bf16.msra.mxu0 %v3686
    %3752 = vmatpush.bf16.msra.mxu0 %v3685
    %3753 = vmatpush.bf16.msra.mxu0 %v3684
    %3754 = vmatpush.bf16.msra.mxu0 %v3683
    %3755 = vmatmul.bf16.gmra.mxu0 %v3485
    %v3756 = vpop.f32.mrf.mxu0
    %v3757 = vadd.f32 %v3554, %v3756
    %v3758 = vpop.f32.mrf.mxu0
    %v3759 = vadd.f32 %v3554, %v3758
    %3760 = vdwg.mxu0
    %3761 = vmatpush.bf16.msra.mxu0 %v3698
    %3762 = vmatpush.bf16.msra.mxu0 %v3697
    %3763 = vmatpush.bf16.msra.mxu0 %v3696
    %3764 = vmatpush.bf16.msra.mxu0 %v3695
    %3765 = vmatpush.bf16.msra.mxu0 %v3694
    %3766 = vmatpush.bf16.msra.mxu0 %v3693
    %3767 = vmatpush.bf16.msra.mxu0 %v3692
    %3768 = vmatpush.bf16.msra.mxu0 %v3691
    %3769 = vmatmul.bf16.gmra.mxu0 %v3486
    %v3770 = vpop.f32.mrf.mxu0
    %v3771 = vadd.f32 %v3757, %v3770
    %v3772 = vpop.f32.mrf.mxu0
    %v3773 = vadd.f32 %v3759, %v3772
    %3774 = vdwg.mxu0
    %3775 = vmatpush.bf16.msra.mxu0 %v3706
    %3776 = vmatpush.bf16.msra.mxu0 %v3705
    %3777 = vmatpush.bf16.msra.mxu0 %v3704
    %3778 = vmatpush.bf16.msra.mxu0 %v3703
    %3779 = vmatpush.bf16.msra.mxu0 %v3702
    %3780 = vmatpush.bf16.msra.mxu0 %v3701
    %3781 = vmatpush.bf16.msra.mxu0 %v3700
    %3782 = vmatpush.bf16.msra.mxu0 %v3699
    %3783 = vmatmul.bf16.gmra.mxu0 %v3487
    %v3784 = vpop.f32.mrf.mxu0
    %v3785 = vadd.f32 %v3771, %v3784
    %v3786 = vpop.f32.mrf.mxu0
    %v3787 = vadd.f32 %v3773, %v3786
    %3788 = vdwg.mxu0
    %3789 = vmatpush.bf16.msra.mxu0 %v3714
    %3790 = vmatpush.bf16.msra.mxu0 %v3713
    %3791 = vmatpush.bf16.msra.mxu0 %v3712
    %3792 = vmatpush.bf16.msra.mxu0 %v3711
    %3793 = vmatpush.bf16.msra.mxu0 %v3710
    %3794 = vmatpush.bf16.msra.mxu0 %v3709
    %3795 = vmatpush.bf16.msra.mxu0 %v3708
    %3796 = vmatpush.bf16.msra.mxu0 %v3707
    %3797 = vmatmul.bf16.gmra.mxu0 %v3488
    %v3798 = vpop.f32.mrf.mxu0
    %v3799 = vadd.f32 %v3785, %v3798
    %v3800 = vpop.f32.mrf.mxu0
    %v3801 = vadd.f32 %v3787, %v3800
    %3802 = vdwg.mxu0
    %v3803 = vadd.f32 %v3111, %v3799
    %v3804 = vadd.f32 %v3112, %v3801
    %v3806 = vrot.slane %v3804, 7
    %vm3808 = vcmask 1040384
    %v3809 = vsel %vm3808, %v3803, %v3806
    %v3810 = vld [vmem:[%s8] sm:$0x1]
    %v3811 = vld [vmem:[%s8 + $0x1] sm:$0x1]
    %vm3812 = vcmask 1041408
    %v3813 = vsel %vm3812, %v3809, 0.0
    %3814 = vadd.xlane.f32.xlu0 %v3813
    %v3815 = vpop.xlane.xlu0 %3814
    %v3816 = vmul.f32 %v3815, %v590
    %v3817 = vsub.f32 %v3809, %v3816
    %v3818 = vmul.f32 %v3817, %v3817
    %v3819 = vsel %vm3812, %v3818, 0.0
    %3820 = vadd.xlane.f32.xlu0 %v3819
    %v3821 = vpop.xlane.xlu0 %3820
    %v3822 = vmul.f32 %v3821, %v590
    %v3823 = vadd.f32 %v3822, 1e-06
    %v3824 = vrsqrt.pop %v3823
    %v3825 = vmul.f32 %v3824, %v3823
    %v3826 = vmul.f32 %v3825, %v3824
    %v3827 = vmul.f32 0.5, %v3826
    %v3828 = vsub.f32 1.5, %v3827
    %v3829 = vmul.f32 %v3824, %v3828
    %vm3830 = vweird.f32 %v3823
    %vm3831 = vweird.f32 %v3824
    %vm3832 = vmor %vm3830, %vm3831
    %v3833 = vsel %vm3832, %v3824, %v3829
    %v3834 = vmul.f32 %v3817, %v3833
    %v3835 = vperm.slane %v3810, 0
    %v3836 = vmul.f32 %v3834, %v3835
    %v3837 = vperm.slane %v3811, 0
    %v3838 = vadd.f32 %v3836, %v3837
    %3839 = vst [vmem:[#allocation7] sm:$0x3] %v3838
    // Predicated region
    $region46: #{vit_features.1} parent=1 // pred_check
      _
    $region47: #{vit_features.1} parent=1 // pred_check_branch
      %3841 = sbr.rel (0) target = $region49
    $region48: #{vit_features.1} parent=1 // pred_region
      %3843 = vsyncadd [#allocation4], 0
      %s3845 = sshll.u32 [#allocation7], 4
      %s3846 = int_to_ptr.vmem [resolvable:$true] %s3845
      %s3847 = sshll.u32 %s9, 4
      %s3848 = int_to_ptr.hbm [resolvable:$true] %s3847
      %3850 = dma.vmem_to_hbm [thread:$0]  %s3846, 32, %s3848, [#allocation4]
    $region49: #{vit_features.1} parent=1 // pred_fallthru
      _
    // Predicated region
    $region50: #{vit_features.1} parent=1 // pred_check
      _
    $region51: #{vit_features.1} parent=1 // pred_check_branch
      %3852 = sbr.rel (0) target = $region53
    $region52: #{vit_features.1} parent=1 // pred_region
      %3854 = dma.done [#allocation4], 32
    $region53: #{vit_features.1} parent=1 // pred_fallthru
      _
    %3855 = vsyncpa [#allocation3], 1
    %3856 = vsyncpa [#allocation6], 1
    %3857 = vsyncpa [#allocation4], 1

</llo_original>
